<compile_context>
chip_gen: v7x
topology: tpu7x:2x2x1
jax: 0.10.0
libtpu: 0.0.40
codegen_flags: <defaults>
</compile_context>

<pallas_src>
import math

import jax
import jax.numpy as jnp
from jax.experimental import pallas as pl
from jax.experimental.pallas import tpu as pltpu


# ----------------------------------------------------------------------------
# Small synthetic Roberta config (stands in for the PubChem10M config shapes).
# ----------------------------------------------------------------------------
VOCAB_SIZE = 50
HIDDEN = 32
NUM_LAYERS = 2
NUM_HEADS = 4
HEAD_DIM = HIDDEN // NUM_HEADS
INTERMEDIATE = 64
MAX_POS = 64
PAD_ID = 1            # Roberta padding_idx
LN_EPS = 1e-5
NUM_LABELS = 1
ATTN_SCALE = 1.0 / math.sqrt(HEAD_DIM)


# ----------------------------------------------------------------------------
# In-kernel helpers (operate on values already resident in vregs)
# ----------------------------------------------------------------------------
def _layer_norm(x, g, b, eps=LN_EPS):
    # E[x^2] - E[x]^2 form: the two reductions are independent (XLU overlap).
    mean = jnp.mean(x, axis=-1, keepdims=True)
    mean_sq = jnp.mean(x * x, axis=-1, keepdims=True)
    var = mean_sq - mean * mean
    return (x - mean) * jax.lax.rsqrt(var + eps) * g + b


def _gelu(x):
    # HF Roberta uses exact (erf) gelu.
    return 0.5 * x * (1.0 + jax.lax.erf(x * (1.0 / math.sqrt(2.0))))


# ----------------------------------------------------------------------------
# Fused whole-model kernel: one grid step per batch element.
# ----------------------------------------------------------------------------
def _fused_roberta_kernel(
    ids_ref, mask_ref,
    word_emb_ref, pos_emb_ref, type_emb_ref,
    emb_ln_g_ref, emb_ln_b_ref,
    qkv_w_ref, qkv_b_ref,
    o_w_ref, o_b_ref,
    ln1_g_ref, ln1_b_ref,
    ffn1_w_ref, ffn1_b_ref,
    ffn2_w_ref, ffn2_b_ref,
    ln2_g_ref, ln2_b_ref,
    cls_dw_ref, cls_db_ref,
    cls_ow_ref, cls_ob_ref,
    out_ref,
    ctx_scratch,
):
    S = ids_ref.shape[1]
    V = word_emb_ref.shape[0]
    P = pos_emb_ref.shape[0]

    ids = ids_ref[0]                                             # (S, 1) int32

    # --- embeddings: gathers expressed as one-hot matmuls on the MXU ---------
    ne = (ids != PAD_ID).astype(jnp.float32)                     # (S, 1)
    # Roberta position ids: cumsum(mask)*mask + pad_id; inclusive cumsum over
    # the sequence done as a lower-triangular matmul (tri[i,j] = j<=i).
    tri = (jax.lax.broadcasted_iota(jnp.int32, (S, S), 1)
           <= jax.lax.broadcasted_iota(jnp.int32, (S, S), 0)).astype(jnp.float32)
    csum = jnp.dot(tri, ne, preferred_element_type=jnp.float32)  # (S, 1)
    pos_f = csum * ne + float(PAD_ID)                            # (S, 1), exact ints

    onehot_tok = (ids == jax.lax.broadcasted_iota(jnp.int32, (S, V), 1)
                  ).astype(jnp.float32)                          # (S, V)
    pos_iota = jax.lax.broadcasted_iota(jnp.int32, (S, P), 1).astype(jnp.float32)
    onehot_pos = (pos_f == pos_iota).astype(jnp.float32)         # (S, P)

    h = (jnp.dot(onehot_tok, word_emb_ref[...], preferred_element_type=jnp.float32)
         + jnp.dot(onehot_pos, pos_emb_ref[...], preferred_element_type=jnp.float32)
         + type_emb_ref[...])                                    # (S, H)
    h = _layer_norm(h, emb_ln_g_ref[...], emb_ln_b_ref[...])

    # --- additive attention mask, built in-kernel from the raw (1, S) mask ----
    add_mask = (1.0 - mask_ref[0].astype(jnp.float32)) * -10000.0   # (1, S)

    # --- encoder layers (static unroll; weights resident in VMEM) -------------
    for l in range(NUM_LAYERS):
        # Fused QKV projection: one MXU pass, lane width 3H.
        qkv = jnp.dot(h, qkv_w_ref[l], preferred_element_type=jnp.float32)
        qkv = qkv + qkv_b_ref[l]                                 # (S, 3H)
        q = qkv[:, 0 * HIDDEN:1 * HIDDEN]
        k = qkv[:, 1 * HIDDEN:2 * HIDDEN]
        v = qkv[:, 2 * HIDDEN:3 * HIDDEN]

        # Multi-head attention: heads unrolled, no HBM traffic, no transposes.
        for hd in range(NUM_HEADS):
            lo, hi = hd * HEAD_DIM, (hd + 1) * HEAD_DIM
            qh, kh, vh = q[:, lo:hi], k[:, lo:hi], v[:, lo:hi]   # (S, D)
            s = jax.lax.dot_general(
                qh, kh, (((1,), (1,)), ((), ())),
                preferred_element_type=jnp.float32) * ATTN_SCALE  # (S, S)
            s = s + add_mask
            s = s - jnp.max(s, axis=-1, keepdims=True)
            p = jnp.exp(s)
            p = p * pl.reciprocal(jnp.sum(p, axis=-1, keepdims=True), approx=True)
            ctx_scratch[:, lo:hi] = jnp.dot(
                p, vh, preferred_element_type=jnp.float32)

        ctx = ctx_scratch[...]                                   # (S, H)
        attn_out = jnp.dot(ctx, o_w_ref[l],
                           preferred_element_type=jnp.float32) + o_b_ref[l]
        h = _layer_norm(attn_out + h, ln1_g_ref[l], ln1_b_ref[l])   # residual fused

        ffn = jnp.dot(h, ffn1_w_ref[l],
                      preferred_element_type=jnp.float32) + ffn1_b_ref[l]
        ffn = _gelu(ffn)
        ffn = jnp.dot(ffn, ffn2_w_ref[l],
                      preferred_element_type=jnp.float32) + ffn2_b_ref[l]
        h = _layer_norm(ffn + h, ln2_g_ref[l], ln2_b_ref[l])        # residual fused

    # --- classification head on the <s> (first) token only --------------------
    cls = h[0:1, :]                                              # (1, H)
    x = jnp.tanh(jnp.dot(cls, cls_dw_ref[...],
                         preferred_element_type=jnp.float32) + cls_db_ref[...])
    logits = jnp.dot(x, cls_ow_ref[...],
                     preferred_element_type=jnp.float32) + cls_ob_ref[...]
    out_ref[0] = logits                                          # (1, NUM_LABELS)


# ----------------------------------------------------------------------------
# Parameter construction (deterministic, already in fused/stacked layout)
# ----------------------------------------------------------------------------
def _init(key, shape, scale=0.02):
    return (scale * jax.random.normal(key, shape)).astype(jnp.float32)


def make_params(key):
    keys = iter(jax.random.split(key, 32))
    L = NUM_LAYERS
    p = {}
    p["word_emb"] = _init(next(keys), (VOCAB_SIZE, HIDDEN))
    p["pos_emb"] = _init(next(keys), (MAX_POS, HIDDEN))
    p["type_emb"] = _init(next(keys), (1, HIDDEN))
    p["emb_ln_g"] = jnp.ones((1, HIDDEN), jnp.float32)
    p["emb_ln_b"] = jnp.zeros((1, HIDDEN), jnp.float32)

    # Per-layer weights stacked along a leading layer dim; QKV fused to (H, 3H).
    p["qkv_w"] = _init(next(keys), (L, HIDDEN, 3 * HIDDEN))
    p["qkv_b"] = jnp.zeros((L, 1, 3 * HIDDEN), jnp.float32)
    p["o_w"] = _init(next(keys), (L, HIDDEN, HIDDEN))
    p["o_b"] = jnp.zeros((L, 1, HIDDEN), jnp.float32)
    p["ln1_g"] = jnp.ones((L, 1, HIDDEN), jnp.float32)
    p["ln1_b"] = jnp.zeros((L, 1, HIDDEN), jnp.float32)
    p["ffn1_w"] = _init(next(keys), (L, HIDDEN, INTERMEDIATE))
    p["ffn1_b"] = jnp.zeros((L, 1, INTERMEDIATE), jnp.float32)
    p["ffn2_w"] = _init(next(keys), (L, INTERMEDIATE, HIDDEN))
    p["ffn2_b"] = jnp.zeros((L, 1, HIDDEN), jnp.float32)
    p["ln2_g"] = jnp.ones((L, 1, HIDDEN), jnp.float32)
    p["ln2_b"] = jnp.zeros((L, 1, HIDDEN), jnp.float32)

    # RobertaClassificationHead: dense(H,H) -> tanh -> out_proj(H, num_labels)
    p["cls_dense_w"] = _init(next(keys), (HIDDEN, HIDDEN))
    p["cls_dense_b"] = jnp.zeros((1, HIDDEN), jnp.float32)
    p["cls_out_w"] = _init(next(keys), (HIDDEN, NUM_LABELS))
    p["cls_out_b"] = jnp.zeros((1, NUM_LABELS), jnp.float32)
    return p


# ----------------------------------------------------------------------------
# Forward pass: the entire model (embeddings included) is one pallas_call.
# ----------------------------------------------------------------------------
def regression_model_forward(params, input_ids, attention_mask):
    B, S = input_ids.shape
    L = NUM_LAYERS

    ids3 = input_ids.astype(jnp.int32).reshape(B, S, 1)          # (B, S, 1)
    mask3 = attention_mask.astype(jnp.float32).reshape(B, 1, S)  # (B, 1, S)

    def rep(shape):  # weight spec: full block, resident across the batch grid
        n = len(shape)
        return pl.BlockSpec(shape, lambda *_, n=n: (0,) * n)

    in_specs = [
        pl.BlockSpec((1, S, 1), lambda b: (b, 0, 0)),            # input ids
        pl.BlockSpec((1, 1, S), lambda b: (b, 0, 0)),            # raw mask
        rep((VOCAB_SIZE, HIDDEN)),                               # word emb table
        rep((MAX_POS, HIDDEN)),                                  # pos emb table
        rep((1, HIDDEN)),                                        # type emb row
        rep((1, HIDDEN)), rep((1, HIDDEN)),                      # emb LN
        rep((L, HIDDEN, 3 * HIDDEN)), rep((L, 1, 3 * HIDDEN)),   # fused QKV
        rep((L, HIDDEN, HIDDEN)), rep((L, 1, HIDDEN)),           # O proj
        rep((L, 1, HIDDEN)), rep((L, 1, HIDDEN)),                # LN1
        rep((L, HIDDEN, INTERMEDIATE)), rep((L, 1, INTERMEDIATE)),  # FFN1
        rep((L, INTERMEDIATE, HIDDEN)), rep((L, 1, HIDDEN)),     # FFN2
        rep((L, 1, HIDDEN)), rep((L, 1, HIDDEN)),                # LN2
        rep((HIDDEN, HIDDEN)), rep((1, HIDDEN)),                 # cls dense
        rep((HIDDEN, NUM_LABELS)), rep((1, NUM_LABELS)),         # cls out
    ]

    out = pl.pallas_call(
        _fused_roberta_kernel,
        out_shape=jax.ShapeDtypeStruct((B, 1, NUM_LABELS), jnp.float32),
        grid=(B,),
        in_specs=in_specs,
        out_specs=pl.BlockSpec((1, 1, NUM_LABELS), lambda b: (b, 0, 0)),
        scratch_shapes=[pltpu.VMEM((S, HIDDEN), jnp.float32)],
        compiler_params=pltpu.CompilerParams(
            dimension_semantics=("parallel",)),   # v7x: split batch over 2 TCs
    )(
        ids3, mask3,
        params["word_emb"], params["pos_emb"], params["type_emb"],
        params["emb_ln_g"], params["emb_ln_b"],
        params["qkv_w"], params["qkv_b"],
        params["o_w"], params["o_b"],
        params["ln1_g"], params["ln1_b"],
        params["ffn1_w"], params["ffn1_b"],
        params["ffn2_w"], params["ffn2_b"],
        params["ln2_g"], params["ln2_b"],
        params["cls_dense_w"], params["cls_dense_b"],
        params["cls_out_w"], params["cls_out_b"],
    )
    return out.reshape(B, NUM_LABELS)


# ----------------------------------------------------------------------------
if __name__ == "__main__":
    key = jax.random.PRNGKey(0)
    pkey, ikey = jax.random.split(key)

    params = make_params(pkey)

    B, S = 2, 8
    input_ids = jax.random.randint(ikey, (B, S), 2, VOCAB_SIZE, dtype=jnp.int32)
    # mark the last two tokens of batch element 1 as padding
    input_ids = input_ids.at[1, -2:].set(PAD_ID)
    attention_mask = (input_ids != PAD_ID).astype(jnp.int32)

    fwd = jax.jit(regression_model_forward)
    logits = fwd(params, input_ids, attention_mask)
    logits = jax.block_until_ready(logits)
    assert logits.shape == (B, NUM_LABELS) and logits.dtype == jnp.float32
    print("KERNEL_OK")
</pallas_src>

<mosaic_0001>
module attributes {stable_mosaic.version = 11 : i64} {
  func.func @_fused_roberta_kernel(%arg0: i32, %arg1: memref<1x8x1xi32, #tpu.memory_space<vmem>>, %arg2: memref<1x1x8xf32, #tpu.memory_space<vmem>>, %arg3: memref<50x32xf32, #tpu.memory_space<vmem>>, %arg4: memref<64x32xf32, #tpu.memory_space<vmem>>, %arg5: memref<1x32xf32, #tpu.memory_space<vmem>>, %arg6: memref<1x32xf32, #tpu.memory_space<vmem>>, %arg7: memref<1x32xf32, #tpu.memory_space<vmem>>, %arg8: memref<2x32x96xf32, #tpu.memory_space<vmem>>, %arg9: memref<2x1x96xf32, #tpu.memory_space<vmem>>, %arg10: memref<2x32x32xf32, #tpu.memory_space<vmem>>, %arg11: memref<2x1x32xf32, #tpu.memory_space<vmem>>, %arg12: memref<2x1x32xf32, #tpu.memory_space<vmem>>, %arg13: memref<2x1x32xf32, #tpu.memory_space<vmem>>, %arg14: memref<2x32x64xf32, #tpu.memory_space<vmem>>, %arg15: memref<2x1x64xf32, #tpu.memory_space<vmem>>, %arg16: memref<2x64x32xf32, #tpu.memory_space<vmem>>, %arg17: memref<2x1x32xf32, #tpu.memory_space<vmem>>, %arg18: memref<2x1x32xf32, #tpu.memory_space<vmem>>, %arg19: memref<2x1x32xf32, #tpu.memory_space<vmem>>, %arg20: memref<32x32xf32, #tpu.memory_space<vmem>>, %arg21: memref<1x32xf32, #tpu.memory_space<vmem>>, %arg22: memref<32x1xf32, #tpu.memory_space<vmem>>, %arg23: memref<1x1xf32, #tpu.memory_space<vmem>>, %arg24: memref<1x1x1xf32, #tpu.memory_space<vmem>>, %arg25: memref<8x32xf32, #tpu.memory_space<vmem>>) attributes {dimension_semantics = [#tpu.dimension_semantics<parallel>], iteration_bounds = array<i64: 2>, scalar_prefetch = 0 : i64, scratch_operands = 1 : i64, tpu.core_type = #tpu.core_type<tc>, window_params = [{transform_indices = @transform_0, window_bounds = array<i64: 1, 8, 1>}, {transform_indices = @transform_1, window_bounds = array<i64: 1, 1, 8>}, {pipeline_mode = #tpu.pipeline_mode<synchronous>, transform_indices = @transform_2, window_bounds = array<i64: 50, 32>}, {pipeline_mode = #tpu.pipeline_mode<synchronous>, transform_indices = @transform_3, window_bounds = array<i64: 64, 32>}, {pipeline_mode = #tpu.pipeline_mode<synchronous>, transform_indices = @transform_4, window_bounds = array<i64: 1, 32>}, {pipeline_mode = #tpu.pipeline_mode<synchronous>, transform_indices = @transform_5, window_bounds = array<i64: 1, 32>}, {pipeline_mode = #tpu.pipeline_mode<synchronous>, transform_indices = @transform_6, window_bounds = array<i64: 1, 32>}, {pipeline_mode = #tpu.pipeline_mode<synchronous>, transform_indices = @transform_7, window_bounds = array<i64: 2, 32, 96>}, {pipeline_mode = #tpu.pipeline_mode<synchronous>, transform_indices = @transform_8, window_bounds = array<i64: 2, 1, 96>}, {pipeline_mode = #tpu.pipeline_mode<synchronous>, transform_indices = @transform_9, window_bounds = array<i64: 2, 32, 32>}, {pipeline_mode = #tpu.pipeline_mode<synchronous>, transform_indices = @transform_10, window_bounds = array<i64: 2, 1, 32>}, {pipeline_mode = #tpu.pipeline_mode<synchronous>, transform_indices = @transform_11, window_bounds = array<i64: 2, 1, 32>}, {pipeline_mode = #tpu.pipeline_mode<synchronous>, transform_indices = @transform_12, window_bounds = array<i64: 2, 1, 32>}, {pipeline_mode = #tpu.pipeline_mode<synchronous>, transform_indices = @transform_13, window_bounds = array<i64: 2, 32, 64>}, {pipeline_mode = #tpu.pipeline_mode<synchronous>, transform_indices = @transform_14, window_bounds = array<i64: 2, 1, 64>}, {pipeline_mode = #tpu.pipeline_mode<synchronous>, transform_indices = @transform_15, window_bounds = array<i64: 2, 64, 32>}, {pipeline_mode = #tpu.pipeline_mode<synchronous>, transform_indices = @transform_16, window_bounds = array<i64: 2, 1, 32>}, {pipeline_mode = #tpu.pipeline_mode<synchronous>, transform_indices = @transform_17, window_bounds = array<i64: 2, 1, 32>}, {pipeline_mode = #tpu.pipeline_mode<synchronous>, transform_indices = @transform_18, window_bounds = array<i64: 2, 1, 32>}, {pipeline_mode = #tpu.pipeline_mode<synchronous>, transform_indices = @transform_19, window_bounds = array<i64: 32, 32>}, {pipeline_mode = #tpu.pipeline_mode<synchronous>, transform_indices = @transform_20, window_bounds = array<i64: 1, 32>}, {pipeline_mode = #tpu.pipeline_mode<synchronous>, transform_indices = @transform_21, window_bounds = array<i64: 32, 1>}, {pipeline_mode = #tpu.pipeline_mode<synchronous>, transform_indices = @transform_22, window_bounds = array<i64: 1, 1>}, {transform_indices = @transform_23, window_bounds = array<i64: 1, 1, 1>}]} {
    %c0 = arith.constant 0 : index
    %c0_0 = arith.constant 0 : index
    %c0_1 = arith.constant 0 : index
    %0 = vector.load %arg1[%c0, %c0_0, %c0_1] : memref<1x8x1xi32, #tpu.memory_space<vmem>>, vector<1x8x1xi32>
    %1 = vector.shape_cast %0 : vector<1x8x1xi32> to vector<8x1xi32>
    %c1_i32 = arith.constant 1 : i32
    %2 = vector.broadcast %c1_i32 : i32 to vector<8x1xi32>
    %3 = arith.cmpi ne, %1, %2 : vector<8x1xi32>
    %4 = arith.extui %3 : vector<8x1xi1> to vector<8x1xi32>
    %5 = arith.sitofp %4 : vector<8x1xi32> to vector<8x1xf32>
    %6 = tpu.iota {dimensions = array<i32: 1>} : vector<8x8xi32>
    %7 = tpu.iota {dimensions = array<i32: 0>} : vector<8x8xi32>
    %8 = arith.cmpi sle, %6, %7 : vector<8x8xi32>
    %9 = arith.extui %8 : vector<8x8xi1> to vector<8x8xi32>
    %10 = arith.sitofp %9 : vector<8x8xi32> to vector<8x8xf32>
    %cst = arith.constant dense<0.000000e+00> : vector<8x1xf32>
    %11 = tpu.matmul %10, %5, %cst {dimension_numbers = #tpu.dot_dimension_numbers<[1], [0], [0], [1], [0, 0, 1, 1], [], []>} : vector<8x8xf32>, vector<8x1xf32>, vector<8x1xf32> -> vector<8x1xf32>
    %12 = arith.mulf %11, %5 : vector<8x1xf32>
    %cst_2 = arith.constant 1.000000e+00 : f32
    %13 = vector.broadcast %cst_2 : f32 to vector<8x1xf32>
    %14 = arith.addf %12, %13 : vector<8x1xf32>
    %15 = tpu.iota {dimensions = array<i32: 1>} : vector<8x50xi32>
    %16 = vector.broadcast %1 : vector<8x1xi32> to vector<8x50xi32>
    %17 = arith.cmpi eq, %16, %15 : vector<8x50xi32>
    %18 = arith.extui %17 : vector<8x50xi1> to vector<8x50xi32>
    %19 = arith.sitofp %18 : vector<8x50xi32> to vector<8x50xf32>
    %20 = tpu.iota {dimensions = array<i32: 1>} : vector<8x64xi32>
    %21 = arith.sitofp %20 : vector<8x64xi32> to vector<8x64xf32>
    %22 = vector.broadcast %14 : vector<8x1xf32> to vector<8x64xf32>
    %23 = arith.cmpf oeq, %22, %21 : vector<8x64xf32>
    %24 = arith.extui %23 : vector<8x64xi1> to vector<8x64xi32>
    %25 = arith.sitofp %24 : vector<8x64xi32> to vector<8x64xf32>
    %c0_3 = arith.constant 0 : index
    %c0_4 = arith.constant 0 : index
    %26 = vector.load %arg3[%c0_3, %c0_4] : memref<50x32xf32, #tpu.memory_space<vmem>>, vector<50x32xf32>
    %cst_5 = arith.constant dense<0.000000e+00> : vector<8x32xf32>
    %27 = tpu.matmul %19, %26, %cst_5 {dimension_numbers = #tpu.dot_dimension_numbers<[1], [0], [0], [1], [0, 0, 1, 1], [], []>} : vector<8x50xf32>, vector<50x32xf32>, vector<8x32xf32> -> vector<8x32xf32>
    %c0_6 = arith.constant 0 : index
    %c0_7 = arith.constant 0 : index
    %28 = vector.load %arg4[%c0_6, %c0_7] : memref<64x32xf32, #tpu.memory_space<vmem>>, vector<64x32xf32>
    %cst_8 = arith.constant dense<0.000000e+00> : vector<8x32xf32>
    %29 = tpu.matmul %25, %28, %cst_8 {dimension_numbers = #tpu.dot_dimension_numbers<[1], [0], [0], [1], [0, 0, 1, 1], [], []>} : vector<8x64xf32>, vector<64x32xf32>, vector<8x32xf32> -> vector<8x32xf32>
    %30 = arith.addf %27, %29 : vector<8x32xf32>
    %c0_9 = arith.constant 0 : index
    %c0_10 = arith.constant 0 : index
    %31 = vector.load %arg5[%c0_9, %c0_10] : memref<1x32xf32, #tpu.memory_space<vmem>>, vector<1x32xf32>
    %32 = vector.broadcast %31 : vector<1x32xf32> to vector<8x32xf32>
    %33 = arith.addf %30, %32 : vector<8x32xf32>
    %c0_11 = arith.constant 0 : index
    %c0_12 = arith.constant 0 : index
    %34 = vector.load %arg6[%c0_11, %c0_12] : memref<1x32xf32, #tpu.memory_space<vmem>>, vector<1x32xf32>
    %c0_13 = arith.constant 0 : index
    %c0_14 = arith.constant 0 : index
    %35 = vector.load %arg7[%c0_13, %c0_14] : memref<1x32xf32, #tpu.memory_space<vmem>>, vector<1x32xf32>
    %cst_15 = arith.constant dense<0.000000e+00> : vector<8xf32>
    %36 = vector.multi_reduction <add>, %33, %cst_15 [1] : vector<8x32xf32> to vector<8xf32>
    %37 = vector.shape_cast %36 : vector<8xf32> to vector<8x1xf32>
    %cst_16 = arith.constant 3.200000e+01 : f32
    %38 = vector.broadcast %cst_16 : f32 to vector<8x1xf32>
    %39 = arith.divf %37, %38 : vector<8x1xf32>
    %40 = arith.mulf %33, %33 : vector<8x32xf32>
    %cst_17 = arith.constant dense<0.000000e+00> : vector<8xf32>
    %41 = vector.multi_reduction <add>, %40, %cst_17 [1] : vector<8x32xf32> to vector<8xf32>
    %42 = vector.shape_cast %41 : vector<8xf32> to vector<8x1xf32>
    %cst_18 = arith.constant 3.200000e+01 : f32
    %43 = vector.broadcast %cst_18 : f32 to vector<8x1xf32>
    %44 = arith.divf %42, %43 : vector<8x1xf32>
    %45 = arith.mulf %39, %39 : vector<8x1xf32>
    %46 = arith.subf %44, %45 : vector<8x1xf32>
    %47 = vector.broadcast %39 : vector<8x1xf32> to vector<8x32xf32>
    %48 = arith.subf %33, %47 : vector<8x32xf32>
    %cst_19 = arith.constant 9.99999974E-6 : f32
    %49 = vector.broadcast %cst_19 : f32 to vector<8x1xf32>
    %50 = arith.addf %46, %49 : vector<8x1xf32>
    %51 = math.rsqrt %50 : vector<8x1xf32>
    %52 = vector.broadcast %51 : vector<8x1xf32> to vector<8x32xf32>
    %53 = arith.mulf %48, %52 : vector<8x32xf32>
    %54 = vector.broadcast %34 : vector<1x32xf32> to vector<8x32xf32>
    %55 = arith.mulf %53, %54 : vector<8x32xf32>
    %56 = vector.broadcast %35 : vector<1x32xf32> to vector<8x32xf32>
    %57 = arith.addf %55, %56 : vector<8x32xf32>
    %c0_20 = arith.constant 0 : index
    %c0_21 = arith.constant 0 : index
    %c0_22 = arith.constant 0 : index
    %58 = vector.load %arg2[%c0_20, %c0_21, %c0_22] : memref<1x1x8xf32, #tpu.memory_space<vmem>>, vector<1x1x8xf32>
    %59 = vector.shape_cast %58 : vector<1x1x8xf32> to vector<1x8xf32>
    %cst_23 = arith.constant 1.000000e+00 : f32
    %60 = vector.broadcast %cst_23 : f32 to vector<1x8xf32>
    %61 = arith.subf %60, %59 : vector<1x8xf32>
    %cst_24 = arith.constant -1.000000e+04 : f32
    %62 = vector.broadcast %cst_24 : f32 to vector<1x8xf32>
    %63 = arith.mulf %61, %62 : vector<1x8xf32>
    %c0_25 = arith.constant 0 : index
    %c0_26 = arith.constant 0 : index
    %c0_27 = arith.constant 0 : index
    %64 = vector.load %arg8[%c0_25, %c0_26, %c0_27] : memref<2x32x96xf32, #tpu.memory_space<vmem>>, vector<1x32x96xf32>
    %65 = vector.shape_cast %64 : vector<1x32x96xf32> to vector<32x96xf32>
    %cst_28 = arith.constant dense<0.000000e+00> : vector<8x96xf32>
    %66 = tpu.matmul %57, %65, %cst_28 {dimension_numbers = #tpu.dot_dimension_numbers<[1], [0], [0], [1], [0, 0, 1, 1], [], []>} : vector<8x32xf32>, vector<32x96xf32>, vector<8x96xf32> -> vector<8x96xf32>
    %c0_29 = arith.constant 0 : index
    %c0_30 = arith.constant 0 : index
    %c0_31 = arith.constant 0 : index
    %67 = vector.load %arg9[%c0_29, %c0_30, %c0_31] : memref<2x1x96xf32, #tpu.memory_space<vmem>>, vector<1x1x96xf32>
    %68 = vector.shape_cast %67 : vector<1x1x96xf32> to vector<1x96xf32>
    %69 = vector.broadcast %68 : vector<1x96xf32> to vector<8x96xf32>
    %70 = arith.addf %66, %69 : vector<8x96xf32>
    %71 = vector.extract_strided_slice %70 {offsets = [0, 0], sizes = [8, 32], strides = [1, 1]} : vector<8x96xf32> to vector<8x32xf32>
    %72 = vector.extract_strided_slice %70 {offsets = [0, 32], sizes = [8, 32], strides = [1, 1]} : vector<8x96xf32> to vector<8x32xf32>
    %73 = vector.extract_strided_slice %70 {offsets = [0, 64], sizes = [8, 32], strides = [1, 1]} : vector<8x96xf32> to vector<8x32xf32>
    %74 = vector.extract_strided_slice %71 {offsets = [0, 0], sizes = [8, 8], strides = [1, 1]} : vector<8x32xf32> to vector<8x8xf32>
    %75 = vector.extract_strided_slice %72 {offsets = [0, 0], sizes = [8, 8], strides = [1, 1]} : vector<8x32xf32> to vector<8x8xf32>
    %76 = vector.extract_strided_slice %73 {offsets = [0, 0], sizes = [8, 8], strides = [1, 1]} : vector<8x32xf32> to vector<8x8xf32>
    %cst_32 = arith.constant dense<0.000000e+00> : vector<8x8xf32>
    %77 = tpu.matmul %74, %75, %cst_32 {dimension_numbers = #tpu.dot_dimension_numbers<[1], [1], [0], [0], [0, 0, 1, 0], [], []>} : vector<8x8xf32>, vector<8x8xf32>, vector<8x8xf32> -> vector<8x8xf32>
    %cst_33 = arith.constant 0.353553385 : f32
    %78 = vector.broadcast %cst_33 : f32 to vector<8x8xf32>
    %79 = arith.mulf %77, %78 : vector<8x8xf32>
    %80 = vector.broadcast %63 : vector<1x8xf32> to vector<8x8xf32>
    %81 = arith.addf %79, %80 : vector<8x8xf32>
    %cst_34 = arith.constant dense<0xFF800000> : vector<8xf32>
    %82 = vector.multi_reduction <maximumf>, %81, %cst_34 [1] : vector<8x8xf32> to vector<8xf32>
    %83 = vector.shape_cast %82 : vector<8xf32> to vector<8x1xf32>
    %84 = vector.broadcast %83 : vector<8x1xf32> to vector<8x8xf32>
    %85 = arith.subf %81, %84 : vector<8x8xf32>
    %86 = math.exp %85 : vector<8x8xf32>
    %cst_35 = arith.constant dense<0.000000e+00> : vector<8xf32>
    %87 = vector.multi_reduction <add>, %86, %cst_35 [1] : vector<8x8xf32> to vector<8xf32>
    %88 = vector.shape_cast %87 : vector<8xf32> to vector<8x1xf32>
    %89 = tpu.reciprocal %88 {approx = true} : vector<8x1xf32> -> vector<8x1xf32>
    %90 = vector.broadcast %89 : vector<8x1xf32> to vector<8x8xf32>
    %91 = arith.mulf %86, %90 : vector<8x8xf32>
    %cst_36 = arith.constant dense<0.000000e+00> : vector<8x8xf32>
    %92 = tpu.matmul %91, %76, %cst_36 {dimension_numbers = #tpu.dot_dimension_numbers<[1], [0], [0], [1], [0, 0, 1, 1], [], []>} : vector<8x8xf32>, vector<8x8xf32>, vector<8x8xf32> -> vector<8x8xf32>
    %c0_37 = arith.constant 0 : index
    %c0_38 = arith.constant 0 : index
    %93 = vector.load %arg25[%c0_37, %c0_38] : memref<8x32xf32, #tpu.memory_space<vmem>>, vector<8x8xf32>
    tpu.vector_store %arg25[%c0_37, %c0_38], %92 {strides = array<i32>} : memref<8x32xf32, #tpu.memory_space<vmem>>, vector<8x8xf32>,
    %94 = vector.extract_strided_slice %71 {offsets = [0, 8], sizes = [8, 8], strides = [1, 1]} : vector<8x32xf32> to vector<8x8xf32>
    %95 = vector.extract_strided_slice %72 {offsets = [0, 8], sizes = [8, 8], strides = [1, 1]} : vector<8x32xf32> to vector<8x8xf32>
    %96 = vector.extract_strided_slice %73 {offsets = [0, 8], sizes = [8, 8], strides = [1, 1]} : vector<8x32xf32> to vector<8x8xf32>
    %cst_39 = arith.constant dense<0.000000e+00> : vector<8x8xf32>
    %97 = tpu.matmul %94, %95, %cst_39 {dimension_numbers = #tpu.dot_dimension_numbers<[1], [1], [0], [0], [0, 0, 1, 0], [], []>} : vector<8x8xf32>, vector<8x8xf32>, vector<8x8xf32> -> vector<8x8xf32>
    %cst_40 = arith.constant 0.353553385 : f32
    %98 = vector.broadcast %cst_40 : f32 to vector<8x8xf32>
    %99 = arith.mulf %97, %98 : vector<8x8xf32>
    %100 = vector.broadcast %63 : vector<1x8xf32> to vector<8x8xf32>
    %101 = arith.addf %99, %100 : vector<8x8xf32>
    %cst_41 = arith.constant dense<0xFF800000> : vector<8xf32>
    %102 = vector.multi_reduction <maximumf>, %101, %cst_41 [1] : vector<8x8xf32> to vector<8xf32>
    %103 = vector.shape_cast %102 : vector<8xf32> to vector<8x1xf32>
    %104 = vector.broadcast %103 : vector<8x1xf32> to vector<8x8xf32>
    %105 = arith.subf %101, %104 : vector<8x8xf32>
    %106 = math.exp %105 : vector<8x8xf32>
    %cst_42 = arith.constant dense<0.000000e+00> : vector<8xf32>
    %107 = vector.multi_reduction <add>, %106, %cst_42 [1] : vector<8x8xf32> to vector<8xf32>
    %108 = vector.shape_cast %107 : vector<8xf32> to vector<8x1xf32>
    %109 = tpu.reciprocal %108 {approx = true} : vector<8x1xf32> -> vector<8x1xf32>
    %110 = vector.broadcast %109 : vector<8x1xf32> to vector<8x8xf32>
    %111 = arith.mulf %106, %110 : vector<8x8xf32>
    %cst_43 = arith.constant dense<0.000000e+00> : vector<8x8xf32>
    %112 = tpu.matmul %111, %96, %cst_43 {dimension_numbers = #tpu.dot_dimension_numbers<[1], [0], [0], [1], [0, 0, 1, 1], [], []>} : vector<8x8xf32>, vector<8x8xf32>, vector<8x8xf32> -> vector<8x8xf32>
    %c0_44 = arith.constant 0 : index
    %c8 = arith.constant 8 : index
    %113 = vector.load %arg25[%c0_44, %c8] : memref<8x32xf32, #tpu.memory_space<vmem>>, vector<8x8xf32>
    tpu.vector_store %arg25[%c0_44, %c8], %112 {strides = array<i32>} : memref<8x32xf32, #tpu.memory_space<vmem>>, vector<8x8xf32>,
    %114 = vector.extract_strided_slice %71 {offsets = [0, 16], sizes = [8, 8], strides = [1, 1]} : vector<8x32xf32> to vector<8x8xf32>
    %115 = vector.extract_strided_slice %72 {offsets = [0, 16], sizes = [8, 8], strides = [1, 1]} : vector<8x32xf32> to vector<8x8xf32>
    %116 = vector.extract_strided_slice %73 {offsets = [0, 16], sizes = [8, 8], strides = [1, 1]} : vector<8x32xf32> to vector<8x8xf32>
    %cst_45 = arith.constant dense<0.000000e+00> : vector<8x8xf32>
    %117 = tpu.matmul %114, %115, %cst_45 {dimension_numbers = #tpu.dot_dimension_numbers<[1], [1], [0], [0], [0, 0, 1, 0], [], []>} : vector<8x8xf32>, vector<8x8xf32>, vector<8x8xf32> -> vector<8x8xf32>
    %cst_46 = arith.constant 0.353553385 : f32
    %118 = vector.broadcast %cst_46 : f32 to vector<8x8xf32>
    %119 = arith.mulf %117, %118 : vector<8x8xf32>
    %120 = vector.broadcast %63 : vector<1x8xf32> to vector<8x8xf32>
    %121 = arith.addf %119, %120 : vector<8x8xf32>
    %cst_47 = arith.constant dense<0xFF800000> : vector<8xf32>
    %122 = vector.multi_reduction <maximumf>, %121, %cst_47 [1] : vector<8x8xf32> to vector<8xf32>
    %123 = vector.shape_cast %122 : vector<8xf32> to vector<8x1xf32>
    %124 = vector.broadcast %123 : vector<8x1xf32> to vector<8x8xf32>
    %125 = arith.subf %121, %124 : vector<8x8xf32>
    %126 = math.exp %125 : vector<8x8xf32>
    %cst_48 = arith.constant dense<0.000000e+00> : vector<8xf32>
    %127 = vector.multi_reduction <add>, %126, %cst_48 [1] : vector<8x8xf32> to vector<8xf32>
    %128 = vector.shape_cast %127 : vector<8xf32> to vector<8x1xf32>
    %129 = tpu.reciprocal %128 {approx = true} : vector<8x1xf32> -> vector<8x1xf32>
    %130 = vector.broadcast %129 : vector<8x1xf32> to vector<8x8xf32>
    %131 = arith.mulf %126, %130 : vector<8x8xf32>
    %cst_49 = arith.constant dense<0.000000e+00> : vector<8x8xf32>
    %132 = tpu.matmul %131, %116, %cst_49 {dimension_numbers = #tpu.dot_dimension_numbers<[1], [0], [0], [1], [0, 0, 1, 1], [], []>} : vector<8x8xf32>, vector<8x8xf32>, vector<8x8xf32> -> vector<8x8xf32>
    %c0_50 = arith.constant 0 : index
    %c16 = arith.constant 16 : index
    %133 = vector.load %arg25[%c0_50, %c16] : memref<8x32xf32, #tpu.memory_space<vmem>>, vector<8x8xf32>
    tpu.vector_store %arg25[%c0_50, %c16], %132 {strides = array<i32>} : memref<8x32xf32, #tpu.memory_space<vmem>>, vector<8x8xf32>,
    %134 = vector.extract_strided_slice %71 {offsets = [0, 24], sizes = [8, 8], strides = [1, 1]} : vector<8x32xf32> to vector<8x8xf32>
    %135 = vector.extract_strided_slice %72 {offsets = [0, 24], sizes = [8, 8], strides = [1, 1]} : vector<8x32xf32> to vector<8x8xf32>
    %136 = vector.extract_strided_slice %73 {offsets = [0, 24], sizes = [8, 8], strides = [1, 1]} : vector<8x32xf32> to vector<8x8xf32>
    %cst_51 = arith.constant dense<0.000000e+00> : vector<8x8xf32>
    %137 = tpu.matmul %134, %135, %cst_51 {dimension_numbers = #tpu.dot_dimension_numbers<[1], [1], [0], [0], [0, 0, 1, 0], [], []>} : vector<8x8xf32>, vector<8x8xf32>, vector<8x8xf32> -> vector<8x8xf32>
    %cst_52 = arith.constant 0.353553385 : f32
    %138 = vector.broadcast %cst_52 : f32 to vector<8x8xf32>
    %139 = arith.mulf %137, %138 : vector<8x8xf32>
    %140 = vector.broadcast %63 : vector<1x8xf32> to vector<8x8xf32>
    %141 = arith.addf %139, %140 : vector<8x8xf32>
    %cst_53 = arith.constant dense<0xFF800000> : vector<8xf32>
    %142 = vector.multi_reduction <maximumf>, %141, %cst_53 [1] : vector<8x8xf32> to vector<8xf32>
    %143 = vector.shape_cast %142 : vector<8xf32> to vector<8x1xf32>
    %144 = vector.broadcast %143 : vector<8x1xf32> to vector<8x8xf32>
    %145 = arith.subf %141, %144 : vector<8x8xf32>
    %146 = math.exp %145 : vector<8x8xf32>
    %cst_54 = arith.constant dense<0.000000e+00> : vector<8xf32>
    %147 = vector.multi_reduction <add>, %146, %cst_54 [1] : vector<8x8xf32> to vector<8xf32>
    %148 = vector.shape_cast %147 : vector<8xf32> to vector<8x1xf32>
    %149 = tpu.reciprocal %148 {approx = true} : vector<8x1xf32> -> vector<8x1xf32>
    %150 = vector.broadcast %149 : vector<8x1xf32> to vector<8x8xf32>
    %151 = arith.mulf %146, %150 : vector<8x8xf32>
    %cst_55 = arith.constant dense<0.000000e+00> : vector<8x8xf32>
    %152 = tpu.matmul %151, %136, %cst_55 {dimension_numbers = #tpu.dot_dimension_numbers<[1], [0], [0], [1], [0, 0, 1, 1], [], []>} : vector<8x8xf32>, vector<8x8xf32>, vector<8x8xf32> -> vector<8x8xf32>
    %c0_56 = arith.constant 0 : index
    %c24 = arith.constant 24 : index
    %153 = vector.load %arg25[%c0_56, %c24] : memref<8x32xf32, #tpu.memory_space<vmem>>, vector<8x8xf32>
    tpu.vector_store %arg25[%c0_56, %c24], %152 {strides = array<i32>} : memref<8x32xf32, #tpu.memory_space<vmem>>, vector<8x8xf32>,
    %c0_57 = arith.constant 0 : index
    %c0_58 = arith.constant 0 : index
    %154 = vector.load %arg25[%c0_57, %c0_58] : memref<8x32xf32, #tpu.memory_space<vmem>>, vector<8x32xf32>
    %c0_59 = arith.constant 0 : index
    %c0_60 = arith.constant 0 : index
    %c0_61 = arith.constant 0 : index
    %155 = vector.load %arg10[%c0_59, %c0_60, %c0_61] : memref<2x32x32xf32, #tpu.memory_space<vmem>>, vector<1x32x32xf32>
    %156 = vector.shape_cast %155 : vector<1x32x32xf32> to vector<32x32xf32>
    %cst_62 = arith.constant dense<0.000000e+00> : vector<8x32xf32>
    %157 = tpu.matmul %154, %156, %cst_62 {dimension_numbers = #tpu.dot_dimension_numbers<[1], [0], [0], [1], [0, 0, 1, 1], [], []>} : vector<8x32xf32>, vector<32x32xf32>, vector<8x32xf32> -> vector<8x32xf32>
    %c0_63 = arith.constant 0 : index
    %c0_64 = arith.constant 0 : index
    %c0_65 = arith.constant 0 : index
    %158 = vector.load %arg11[%c0_63, %c0_64, %c0_65] : memref<2x1x32xf32, #tpu.memory_space<vmem>>, vector<1x1x32xf32>
    %159 = vector.shape_cast %158 : vector<1x1x32xf32> to vector<1x32xf32>
    %160 = vector.broadcast %159 : vector<1x32xf32> to vector<8x32xf32>
    %161 = arith.addf %157, %160 : vector<8x32xf32>
    %162 = arith.addf %161, %57 : vector<8x32xf32>
    %c0_66 = arith.constant 0 : index
    %c0_67 = arith.constant 0 : index
    %c0_68 = arith.constant 0 : index
    %163 = vector.load %arg12[%c0_66, %c0_67, %c0_68] : memref<2x1x32xf32, #tpu.memory_space<vmem>>, vector<1x1x32xf32>
    %164 = vector.shape_cast %163 : vector<1x1x32xf32> to vector<1x32xf32>
    %c0_69 = arith.constant 0 : index
    %c0_70 = arith.constant 0 : index
    %c0_71 = arith.constant 0 : index
    %165 = vector.load %arg13[%c0_69, %c0_70, %c0_71] : memref<2x1x32xf32, #tpu.memory_space<vmem>>, vector<1x1x32xf32>
    %166 = vector.shape_cast %165 : vector<1x1x32xf32> to vector<1x32xf32>
    %cst_72 = arith.constant dense<0.000000e+00> : vector<8xf32>
    %167 = vector.multi_reduction <add>, %162, %cst_72 [1] : vector<8x32xf32> to vector<8xf32>
    %168 = vector.shape_cast %167 : vector<8xf32> to vector<8x1xf32>
    %cst_73 = arith.constant 3.200000e+01 : f32
    %169 = vector.broadcast %cst_73 : f32 to vector<8x1xf32>
    %170 = arith.divf %168, %169 : vector<8x1xf32>
    %171 = arith.mulf %162, %162 : vector<8x32xf32>
    %cst_74 = arith.constant dense<0.000000e+00> : vector<8xf32>
    %172 = vector.multi_reduction <add>, %171, %cst_74 [1] : vector<8x32xf32> to vector<8xf32>
    %173 = vector.shape_cast %172 : vector<8xf32> to vector<8x1xf32>
    %cst_75 = arith.constant 3.200000e+01 : f32
    %174 = vector.broadcast %cst_75 : f32 to vector<8x1xf32>
    %175 = arith.divf %173, %174 : vector<8x1xf32>
    %176 = arith.mulf %170, %170 : vector<8x1xf32>
    %177 = arith.subf %175, %176 : vector<8x1xf32>
    %178 = vector.broadcast %170 : vector<8x1xf32> to vector<8x32xf32>
    %179 = arith.subf %162, %178 : vector<8x32xf32>
    %cst_76 = arith.constant 9.99999974E-6 : f32
    %180 = vector.broadcast %cst_76 : f32 to vector<8x1xf32>
    %181 = arith.addf %177, %180 : vector<8x1xf32>
    %182 = math.rsqrt %181 : vector<8x1xf32>
    %183 = vector.broadcast %182 : vector<8x1xf32> to vector<8x32xf32>
    %184 = arith.mulf %179, %183 : vector<8x32xf32>
    %185 = vector.broadcast %164 : vector<1x32xf32> to vector<8x32xf32>
    %186 = arith.mulf %184, %185 : vector<8x32xf32>
    %187 = vector.broadcast %166 : vector<1x32xf32> to vector<8x32xf32>
    %188 = arith.addf %186, %187 : vector<8x32xf32>
    %c0_77 = arith.constant 0 : index
    %c0_78 = arith.constant 0 : index
    %c0_79 = arith.constant 0 : index
    %189 = vector.load %arg14[%c0_77, %c0_78, %c0_79] : memref<2x32x64xf32, #tpu.memory_space<vmem>>, vector<1x32x64xf32>
    %190 = vector.shape_cast %189 : vector<1x32x64xf32> to vector<32x64xf32>
    %cst_80 = arith.constant dense<0.000000e+00> : vector<8x64xf32>
    %191 = tpu.matmul %188, %190, %cst_80 {dimension_numbers = #tpu.dot_dimension_numbers<[1], [0], [0], [1], [0, 0, 1, 1], [], []>} : vector<8x32xf32>, vector<32x64xf32>, vector<8x64xf32> -> vector<8x64xf32>
    %c0_81 = arith.constant 0 : index
    %c0_82 = arith.constant 0 : index
    %c0_83 = arith.constant 0 : index
    %192 = vector.load %arg15[%c0_81, %c0_82, %c0_83] : memref<2x1x64xf32, #tpu.memory_space<vmem>>, vector<1x1x64xf32>
    %193 = vector.shape_cast %192 : vector<1x1x64xf32> to vector<1x64xf32>
    %194 = vector.broadcast %193 : vector<1x64xf32> to vector<8x64xf32>
    %195 = arith.addf %191, %194 : vector<8x64xf32>
    %cst_84 = arith.constant 5.000000e-01 : f32
    %196 = vector.broadcast %cst_84 : f32 to vector<8x64xf32>
    %197 = arith.mulf %196, %195 : vector<8x64xf32>
    %cst_85 = arith.constant 0.707106769 : f32
    %198 = vector.broadcast %cst_85 : f32 to vector<8x64xf32>
    %199 = arith.mulf %195, %198 : vector<8x64xf32>
    %200 = math.erf %199 : vector<8x64xf32>
    %cst_86 = arith.constant 1.000000e+00 : f32
    %201 = vector.broadcast %cst_86 : f32 to vector<8x64xf32>
    %202 = arith.addf %201, %200 : vector<8x64xf32>
    %203 = arith.mulf %197, %202 : vector<8x64xf32>
    %c0_87 = arith.constant 0 : index
    %c0_88 = arith.constant 0 : index
    %c0_89 = arith.constant 0 : index
    %204 = vector.load %arg16[%c0_87, %c0_88, %c0_89] : memref<2x64x32xf32, #tpu.memory_space<vmem>>, vector<1x64x32xf32>
    %205 = vector.shape_cast %204 : vector<1x64x32xf32> to vector<64x32xf32>
    %cst_90 = arith.constant dense<0.000000e+00> : vector<8x32xf32>
    %206 = tpu.matmul %203, %205, %cst_90 {dimension_numbers = #tpu.dot_dimension_numbers<[1], [0], [0], [1], [0, 0, 1, 1], [], []>} : vector<8x64xf32>, vector<64x32xf32>, vector<8x32xf32> -> vector<8x32xf32>
    %c0_91 = arith.constant 0 : index
    %c0_92 = arith.constant 0 : index
    %c0_93 = arith.constant 0 : index
    %207 = vector.load %arg17[%c0_91, %c0_92, %c0_93] : memref<2x1x32xf32, #tpu.memory_space<vmem>>, vector<1x1x32xf32>
    %208 = vector.shape_cast %207 : vector<1x1x32xf32> to vector<1x32xf32>
    %209 = vector.broadcast %208 : vector<1x32xf32> to vector<8x32xf32>
    %210 = arith.addf %206, %209 : vector<8x32xf32>
    %211 = arith.addf %210, %188 : vector<8x32xf32>
    %c0_94 = arith.constant 0 : index
    %c0_95 = arith.constant 0 : index
    %c0_96 = arith.constant 0 : index
    %212 = vector.load %arg18[%c0_94, %c0_95, %c0_96] : memref<2x1x32xf32, #tpu.memory_space<vmem>>, vector<1x1x32xf32>
    %213 = vector.shape_cast %212 : vector<1x1x32xf32> to vector<1x32xf32>
    %c0_97 = arith.constant 0 : index
    %c0_98 = arith.constant 0 : index
    %c0_99 = arith.constant 0 : index
    %214 = vector.load %arg19[%c0_97, %c0_98, %c0_99] : memref<2x1x32xf32, #tpu.memory_space<vmem>>, vector<1x1x32xf32>
    %215 = vector.shape_cast %214 : vector<1x1x32xf32> to vector<1x32xf32>
    %cst_100 = arith.constant dense<0.000000e+00> : vector<8xf32>
    %216 = vector.multi_reduction <add>, %211, %cst_100 [1] : vector<8x32xf32> to vector<8xf32>
    %217 = vector.shape_cast %216 : vector<8xf32> to vector<8x1xf32>
    %cst_101 = arith.constant 3.200000e+01 : f32
    %218 = vector.broadcast %cst_101 : f32 to vector<8x1xf32>
    %219 = arith.divf %217, %218 : vector<8x1xf32>
    %220 = arith.mulf %211, %211 : vector<8x32xf32>
    %cst_102 = arith.constant dense<0.000000e+00> : vector<8xf32>
    %221 = vector.multi_reduction <add>, %220, %cst_102 [1] : vector<8x32xf32> to vector<8xf32>
    %222 = vector.shape_cast %221 : vector<8xf32> to vector<8x1xf32>
    %cst_103 = arith.constant 3.200000e+01 : f32
    %223 = vector.broadcast %cst_103 : f32 to vector<8x1xf32>
    %224 = arith.divf %222, %223 : vector<8x1xf32>
    %225 = arith.mulf %219, %219 : vector<8x1xf32>
    %226 = arith.subf %224, %225 : vector<8x1xf32>
    %227 = vector.broadcast %219 : vector<8x1xf32> to vector<8x32xf32>
    %228 = arith.subf %211, %227 : vector<8x32xf32>
    %cst_104 = arith.constant 9.99999974E-6 : f32
    %229 = vector.broadcast %cst_104 : f32 to vector<8x1xf32>
    %230 = arith.addf %226, %229 : vector<8x1xf32>
    %231 = math.rsqrt %230 : vector<8x1xf32>
    %232 = vector.broadcast %231 : vector<8x1xf32> to vector<8x32xf32>
    %233 = arith.mulf %228, %232 : vector<8x32xf32>
    %234 = vector.broadcast %213 : vector<1x32xf32> to vector<8x32xf32>
    %235 = arith.mulf %233, %234 : vector<8x32xf32>
    %236 = vector.broadcast %215 : vector<1x32xf32> to vector<8x32xf32>
    %237 = arith.addf %235, %236 : vector<8x32xf32>
    %c1 = arith.constant 1 : index
    %c0_105 = arith.constant 0 : index
    %c0_106 = arith.constant 0 : index
    %238 = vector.load %arg8[%c1, %c0_105, %c0_106] : memref<2x32x96xf32, #tpu.memory_space<vmem>>, vector<1x32x96xf32>
    %239 = vector.shape_cast %238 : vector<1x32x96xf32> to vector<32x96xf32>
    %cst_107 = arith.constant dense<0.000000e+00> : vector<8x96xf32>
    %240 = tpu.matmul %237, %239, %cst_107 {dimension_numbers = #tpu.dot_dimension_numbers<[1], [0], [0], [1], [0, 0, 1, 1], [], []>} : vector<8x32xf32>, vector<32x96xf32>, vector<8x96xf32> -> vector<8x96xf32>
    %c1_108 = arith.constant 1 : index
    %c0_109 = arith.constant 0 : index
    %c0_110 = arith.constant 0 : index
    %241 = vector.load %arg9[%c1_108, %c0_109, %c0_110] : memref<2x1x96xf32, #tpu.memory_space<vmem>>, vector<1x1x96xf32>
    %242 = vector.shape_cast %241 : vector<1x1x96xf32> to vector<1x96xf32>
    %243 = vector.broadcast %242 : vector<1x96xf32> to vector<8x96xf32>
    %244 = arith.addf %240, %243 : vector<8x96xf32>
    %245 = vector.extract_strided_slice %244 {offsets = [0, 0], sizes = [8, 32], strides = [1, 1]} : vector<8x96xf32> to vector<8x32xf32>
    %246 = vector.extract_strided_slice %244 {offsets = [0, 32], sizes = [8, 32], strides = [1, 1]} : vector<8x96xf32> to vector<8x32xf32>
    %247 = vector.extract_strided_slice %244 {offsets = [0, 64], sizes = [8, 32], strides = [1, 1]} : vector<8x96xf32> to vector<8x32xf32>
    %248 = vector.extract_strided_slice %245 {offsets = [0, 0], sizes = [8, 8], strides = [1, 1]} : vector<8x32xf32> to vector<8x8xf32>
    %249 = vector.extract_strided_slice %246 {offsets = [0, 0], sizes = [8, 8], strides = [1, 1]} : vector<8x32xf32> to vector<8x8xf32>
    %250 = vector.extract_strided_slice %247 {offsets = [0, 0], sizes = [8, 8], strides = [1, 1]} : vector<8x32xf32> to vector<8x8xf32>
    %cst_111 = arith.constant dense<0.000000e+00> : vector<8x8xf32>
    %251 = tpu.matmul %248, %249, %cst_111 {dimension_numbers = #tpu.dot_dimension_numbers<[1], [1], [0], [0], [0, 0, 1, 0], [], []>} : vector<8x8xf32>, vector<8x8xf32>, vector<8x8xf32> -> vector<8x8xf32>
    %cst_112 = arith.constant 0.353553385 : f32
    %252 = vector.broadcast %cst_112 : f32 to vector<8x8xf32>
    %253 = arith.mulf %251, %252 : vector<8x8xf32>
    %254 = vector.broadcast %63 : vector<1x8xf32> to vector<8x8xf32>
    %255 = arith.addf %253, %254 : vector<8x8xf32>
    %cst_113 = arith.constant dense<0xFF800000> : vector<8xf32>
    %256 = vector.multi_reduction <maximumf>, %255, %cst_113 [1] : vector<8x8xf32> to vector<8xf32>
    %257 = vector.shape_cast %256 : vector<8xf32> to vector<8x1xf32>
    %258 = vector.broadcast %257 : vector<8x1xf32> to vector<8x8xf32>
    %259 = arith.subf %255, %258 : vector<8x8xf32>
    %260 = math.exp %259 : vector<8x8xf32>
    %cst_114 = arith.constant dense<0.000000e+00> : vector<8xf32>
    %261 = vector.multi_reduction <add>, %260, %cst_114 [1] : vector<8x8xf32> to vector<8xf32>
    %262 = vector.shape_cast %261 : vector<8xf32> to vector<8x1xf32>
    %263 = tpu.reciprocal %262 {approx = true} : vector<8x1xf32> -> vector<8x1xf32>
    %264 = vector.broadcast %263 : vector<8x1xf32> to vector<8x8xf32>
    %265 = arith.mulf %260, %264 : vector<8x8xf32>
    %cst_115 = arith.constant dense<0.000000e+00> : vector<8x8xf32>
    %266 = tpu.matmul %265, %250, %cst_115 {dimension_numbers = #tpu.dot_dimension_numbers<[1], [0], [0], [1], [0, 0, 1, 1], [], []>} : vector<8x8xf32>, vector<8x8xf32>, vector<8x8xf32> -> vector<8x8xf32>
    %c0_116 = arith.constant 0 : index
    %c0_117 = arith.constant 0 : index
    %267 = vector.load %arg25[%c0_116, %c0_117] : memref<8x32xf32, #tpu.memory_space<vmem>>, vector<8x8xf32>
    tpu.vector_store %arg25[%c0_116, %c0_117], %266 {strides = array<i32>} : memref<8x32xf32, #tpu.memory_space<vmem>>, vector<8x8xf32>,
    %268 = vector.extract_strided_slice %245 {offsets = [0, 8], sizes = [8, 8], strides = [1, 1]} : vector<8x32xf32> to vector<8x8xf32>
    %269 = vector.extract_strided_slice %246 {offsets = [0, 8], sizes = [8, 8], strides = [1, 1]} : vector<8x32xf32> to vector<8x8xf32>
    %270 = vector.extract_strided_slice %247 {offsets = [0, 8], sizes = [8, 8], strides = [1, 1]} : vector<8x32xf32> to vector<8x8xf32>
    %cst_118 = arith.constant dense<0.000000e+00> : vector<8x8xf32>
    %271 = tpu.matmul %268, %269, %cst_118 {dimension_numbers = #tpu.dot_dimension_numbers<[1], [1], [0], [0], [0, 0, 1, 0], [], []>} : vector<8x8xf32>, vector<8x8xf32>, vector<8x8xf32> -> vector<8x8xf32>
    %cst_119 = arith.constant 0.353553385 : f32
    %272 = vector.broadcast %cst_119 : f32 to vector<8x8xf32>
    %273 = arith.mulf %271, %272 : vector<8x8xf32>
    %274 = vector.broadcast %63 : vector<1x8xf32> to vector<8x8xf32>
    %275 = arith.addf %273, %274 : vector<8x8xf32>
    %cst_120 = arith.constant dense<0xFF800000> : vector<8xf32>
    %276 = vector.multi_reduction <maximumf>, %275, %cst_120 [1] : vector<8x8xf32> to vector<8xf32>
    %277 = vector.shape_cast %276 : vector<8xf32> to vector<8x1xf32>
    %278 = vector.broadcast %277 : vector<8x1xf32> to vector<8x8xf32>
    %279 = arith.subf %275, %278 : vector<8x8xf32>
    %280 = math.exp %279 : vector<8x8xf32>
    %cst_121 = arith.constant dense<0.000000e+00> : vector<8xf32>
    %281 = vector.multi_reduction <add>, %280, %cst_121 [1] : vector<8x8xf32> to vector<8xf32>
    %282 = vector.shape_cast %281 : vector<8xf32> to vector<8x1xf32>
    %283 = tpu.reciprocal %282 {approx = true} : vector<8x1xf32> -> vector<8x1xf32>
    %284 = vector.broadcast %283 : vector<8x1xf32> to vector<8x8xf32>
    %285 = arith.mulf %280, %284 : vector<8x8xf32>
    %cst_122 = arith.constant dense<0.000000e+00> : vector<8x8xf32>
    %286 = tpu.matmul %285, %270, %cst_122 {dimension_numbers = #tpu.dot_dimension_numbers<[1], [0], [0], [1], [0, 0, 1, 1], [], []>} : vector<8x8xf32>, vector<8x8xf32>, vector<8x8xf32> -> vector<8x8xf32>
    %c0_123 = arith.constant 0 : index
    %c8_124 = arith.constant 8 : index
    %287 = vector.load %arg25[%c0_123, %c8_124] : memref<8x32xf32, #tpu.memory_space<vmem>>, vector<8x8xf32>
    tpu.vector_store %arg25[%c0_123, %c8_124], %286 {strides = array<i32>} : memref<8x32xf32, #tpu.memory_space<vmem>>, vector<8x8xf32>,
    %288 = vector.extract_strided_slice %245 {offsets = [0, 16], sizes = [8, 8], strides = [1, 1]} : vector<8x32xf32> to vector<8x8xf32>
    %289 = vector.extract_strided_slice %246 {offsets = [0, 16], sizes = [8, 8], strides = [1, 1]} : vector<8x32xf32> to vector<8x8xf32>
    %290 = vector.extract_strided_slice %247 {offsets = [0, 16], sizes = [8, 8], strides = [1, 1]} : vector<8x32xf32> to vector<8x8xf32>
    %cst_125 = arith.constant dense<0.000000e+00> : vector<8x8xf32>
    %291 = tpu.matmul %288, %289, %cst_125 {dimension_numbers = #tpu.dot_dimension_numbers<[1], [1], [0], [0], [0, 0, 1, 0], [], []>} : vector<8x8xf32>, vector<8x8xf32>, vector<8x8xf32> -> vector<8x8xf32>
    %cst_126 = arith.constant 0.353553385 : f32
    %292 = vector.broadcast %cst_126 : f32 to vector<8x8xf32>
    %293 = arith.mulf %291, %292 : vector<8x8xf32>
    %294 = vector.broadcast %63 : vector<1x8xf32> to vector<8x8xf32>
    %295 = arith.addf %293, %294 : vector<8x8xf32>
    %cst_127 = arith.constant dense<0xFF800000> : vector<8xf32>
    %296 = vector.multi_reduction <maximumf>, %295, %cst_127 [1] : vector<8x8xf32> to vector<8xf32>
    %297 = vector.shape_cast %296 : vector<8xf32> to vector<8x1xf32>
    %298 = vector.broadcast %297 : vector<8x1xf32> to vector<8x8xf32>
    %299 = arith.subf %295, %298 : vector<8x8xf32>
    %300 = math.exp %299 : vector<8x8xf32>
    %cst_128 = arith.constant dense<0.000000e+00> : vector<8xf32>
    %301 = vector.multi_reduction <add>, %300, %cst_128 [1] : vector<8x8xf32> to vector<8xf32>
    %302 = vector.shape_cast %301 : vector<8xf32> to vector<8x1xf32>
    %303 = tpu.reciprocal %302 {approx = true} : vector<8x1xf32> -> vector<8x1xf32>
    %304 = vector.broadcast %303 : vector<8x1xf32> to vector<8x8xf32>
    %305 = arith.mulf %300, %304 : vector<8x8xf32>
    %cst_129 = arith.constant dense<0.000000e+00> : vector<8x8xf32>
    %306 = tpu.matmul %305, %290, %cst_129 {dimension_numbers = #tpu.dot_dimension_numbers<[1], [0], [0], [1], [0, 0, 1, 1], [], []>} : vector<8x8xf32>, vector<8x8xf32>, vector<8x8xf32> -> vector<8x8xf32>
    %c0_130 = arith.constant 0 : index
    %c16_131 = arith.constant 16 : index
    %307 = vector.load %arg25[%c0_130, %c16_131] : memref<8x32xf32, #tpu.memory_space<vmem>>, vector<8x8xf32>
    tpu.vector_store %arg25[%c0_130, %c16_131], %306 {strides = array<i32>} : memref<8x32xf32, #tpu.memory_space<vmem>>, vector<8x8xf32>,
    %308 = vector.extract_strided_slice %245 {offsets = [0, 24], sizes = [8, 8], strides = [1, 1]} : vector<8x32xf32> to vector<8x8xf32>
    %309 = vector.extract_strided_slice %246 {offsets = [0, 24], sizes = [8, 8], strides = [1, 1]} : vector<8x32xf32> to vector<8x8xf32>
    %310 = vector.extract_strided_slice %247 {offsets = [0, 24], sizes = [8, 8], strides = [1, 1]} : vector<8x32xf32> to vector<8x8xf32>
    %cst_132 = arith.constant dense<0.000000e+00> : vector<8x8xf32>
    %311 = tpu.matmul %308, %309, %cst_132 {dimension_numbers = #tpu.dot_dimension_numbers<[1], [1], [0], [0], [0, 0, 1, 0], [], []>} : vector<8x8xf32>, vector<8x8xf32>, vector<8x8xf32> -> vector<8x8xf32>
    %cst_133 = arith.constant 0.353553385 : f32
    %312 = vector.broadcast %cst_133 : f32 to vector<8x8xf32>
    %313 = arith.mulf %311, %312 : vector<8x8xf32>
    %314 = vector.broadcast %63 : vector<1x8xf32> to vector<8x8xf32>
    %315 = arith.addf %313, %314 : vector<8x8xf32>
    %cst_134 = arith.constant dense<0xFF800000> : vector<8xf32>
    %316 = vector.multi_reduction <maximumf>, %315, %cst_134 [1] : vector<8x8xf32> to vector<8xf32>
    %317 = vector.shape_cast %316 : vector<8xf32> to vector<8x1xf32>
    %318 = vector.broadcast %317 : vector<8x1xf32> to vector<8x8xf32>
    %319 = arith.subf %315, %318 : vector<8x8xf32>
    %320 = math.exp %319 : vector<8x8xf32>
    %cst_135 = arith.constant dense<0.000000e+00> : vector<8xf32>
    %321 = vector.multi_reduction <add>, %320, %cst_135 [1] : vector<8x8xf32> to vector<8xf32>
    %322 = vector.shape_cast %321 : vector<8xf32> to vector<8x1xf32>
    %323 = tpu.reciprocal %322 {approx = true} : vector<8x1xf32> -> vector<8x1xf32>
    %324 = vector.broadcast %323 : vector<8x1xf32> to vector<8x8xf32>
    %325 = arith.mulf %320, %324 : vector<8x8xf32>
    %cst_136 = arith.constant dense<0.000000e+00> : vector<8x8xf32>
    %326 = tpu.matmul %325, %310, %cst_136 {dimension_numbers = #tpu.dot_dimension_numbers<[1], [0], [0], [1], [0, 0, 1, 1], [], []>} : vector<8x8xf32>, vector<8x8xf32>, vector<8x8xf32> -> vector<8x8xf32>
    %c0_137 = arith.constant 0 : index
    %c24_138 = arith.constant 24 : index
    %327 = vector.load %arg25[%c0_137, %c24_138] : memref<8x32xf32, #tpu.memory_space<vmem>>, vector<8x8xf32>
    tpu.vector_store %arg25[%c0_137, %c24_138], %326 {strides = array<i32>} : memref<8x32xf32, #tpu.memory_space<vmem>>, vector<8x8xf32>,
    %c0_139 = arith.constant 0 : index
    %c0_140 = arith.constant 0 : index
    %328 = vector.load %arg25[%c0_139, %c0_140] : memref<8x32xf32, #tpu.memory_space<vmem>>, vector<8x32xf32>
    %c1_141 = arith.constant 1 : index
    %c0_142 = arith.constant 0 : index
    %c0_143 = arith.constant 0 : index
    %329 = vector.load %arg10[%c1_141, %c0_142, %c0_143] : memref<2x32x32xf32, #tpu.memory_space<vmem>>, vector<1x32x32xf32>
    %330 = vector.shape_cast %329 : vector<1x32x32xf32> to vector<32x32xf32>
    %cst_144 = arith.constant dense<0.000000e+00> : vector<8x32xf32>
    %331 = tpu.matmul %328, %330, %cst_144 {dimension_numbers = #tpu.dot_dimension_numbers<[1], [0], [0], [1], [0, 0, 1, 1], [], []>} : vector<8x32xf32>, vector<32x32xf32>, vector<8x32xf32> -> vector<8x32xf32>
    %c1_145 = arith.constant 1 : index
    %c0_146 = arith.constant 0 : index
    %c0_147 = arith.constant 0 : index
    %332 = vector.load %arg11[%c1_145, %c0_146, %c0_147] : memref<2x1x32xf32, #tpu.memory_space<vmem>>, vector<1x1x32xf32>
    %333 = vector.shape_cast %332 : vector<1x1x32xf32> to vector<1x32xf32>
    %334 = vector.broadcast %333 : vector<1x32xf32> to vector<8x32xf32>
    %335 = arith.addf %331, %334 : vector<8x32xf32>
    %336 = arith.addf %335, %237 : vector<8x32xf32>
    %c1_148 = arith.constant 1 : index
    %c0_149 = arith.constant 0 : index
    %c0_150 = arith.constant 0 : index
    %337 = vector.load %arg12[%c1_148, %c0_149, %c0_150] : memref<2x1x32xf32, #tpu.memory_space<vmem>>, vector<1x1x32xf32>
    %338 = vector.shape_cast %337 : vector<1x1x32xf32> to vector<1x32xf32>
    %c1_151 = arith.constant 1 : index
    %c0_152 = arith.constant 0 : index
    %c0_153 = arith.constant 0 : index
    %339 = vector.load %arg13[%c1_151, %c0_152, %c0_153] : memref<2x1x32xf32, #tpu.memory_space<vmem>>, vector<1x1x32xf32>
    %340 = vector.shape_cast %339 : vector<1x1x32xf32> to vector<1x32xf32>
    %cst_154 = arith.constant dense<0.000000e+00> : vector<8xf32>
    %341 = vector.multi_reduction <add>, %336, %cst_154 [1] : vector<8x32xf32> to vector<8xf32>
    %342 = vector.shape_cast %341 : vector<8xf32> to vector<8x1xf32>
    %cst_155 = arith.constant 3.200000e+01 : f32
    %343 = vector.broadcast %cst_155 : f32 to vector<8x1xf32>
    %344 = arith.divf %342, %343 : vector<8x1xf32>
    %345 = arith.mulf %336, %336 : vector<8x32xf32>
    %cst_156 = arith.constant dense<0.000000e+00> : vector<8xf32>
    %346 = vector.multi_reduction <add>, %345, %cst_156 [1] : vector<8x32xf32> to vector<8xf32>
    %347 = vector.shape_cast %346 : vector<8xf32> to vector<8x1xf32>
    %cst_157 = arith.constant 3.200000e+01 : f32
    %348 = vector.broadcast %cst_157 : f32 to vector<8x1xf32>
    %349 = arith.divf %347, %348 : vector<8x1xf32>
    %350 = arith.mulf %344, %344 : vector<8x1xf32>
    %351 = arith.subf %349, %350 : vector<8x1xf32>
    %352 = vector.broadcast %344 : vector<8x1xf32> to vector<8x32xf32>
    %353 = arith.subf %336, %352 : vector<8x32xf32>
    %cst_158 = arith.constant 9.99999974E-6 : f32
    %354 = vector.broadcast %cst_158 : f32 to vector<8x1xf32>
    %355 = arith.addf %351, %354 : vector<8x1xf32>
    %356 = math.rsqrt %355 : vector<8x1xf32>
    %357 = vector.broadcast %356 : vector<8x1xf32> to vector<8x32xf32>
    %358 = arith.mulf %353, %357 : vector<8x32xf32>
    %359 = vector.broadcast %338 : vector<1x32xf32> to vector<8x32xf32>
    %360 = arith.mulf %358, %359 : vector<8x32xf32>
    %361 = vector.broadcast %340 : vector<1x32xf32> to vector<8x32xf32>
    %362 = arith.addf %360, %361 : vector<8x32xf32>
    %c1_159 = arith.constant 1 : index
    %c0_160 = arith.constant 0 : index
    %c0_161 = arith.constant 0 : index
    %363 = vector.load %arg14[%c1_159, %c0_160, %c0_161] : memref<2x32x64xf32, #tpu.memory_space<vmem>>, vector<1x32x64xf32>
    %364 = vector.shape_cast %363 : vector<1x32x64xf32> to vector<32x64xf32>
    %cst_162 = arith.constant dense<0.000000e+00> : vector<8x64xf32>
    %365 = tpu.matmul %362, %364, %cst_162 {dimension_numbers = #tpu.dot_dimension_numbers<[1], [0], [0], [1], [0, 0, 1, 1], [], []>} : vector<8x32xf32>, vector<32x64xf32>, vector<8x64xf32> -> vector<8x64xf32>
    %c1_163 = arith.constant 1 : index
    %c0_164 = arith.constant 0 : index
    %c0_165 = arith.constant 0 : index
    %366 = vector.load %arg15[%c1_163, %c0_164, %c0_165] : memref<2x1x64xf32, #tpu.memory_space<vmem>>, vector<1x1x64xf32>
    %367 = vector.shape_cast %366 : vector<1x1x64xf32> to vector<1x64xf32>
    %368 = vector.broadcast %367 : vector<1x64xf32> to vector<8x64xf32>
    %369 = arith.addf %365, %368 : vector<8x64xf32>
    %cst_166 = arith.constant 5.000000e-01 : f32
    %370 = vector.broadcast %cst_166 : f32 to vector<8x64xf32>
    %371 = arith.mulf %370, %369 : vector<8x64xf32>
    %cst_167 = arith.constant 0.707106769 : f32
    %372 = vector.broadcast %cst_167 : f32 to vector<8x64xf32>
    %373 = arith.mulf %369, %372 : vector<8x64xf32>
    %374 = math.erf %373 : vector<8x64xf32>
    %cst_168 = arith.constant 1.000000e+00 : f32
    %375 = vector.broadcast %cst_168 : f32 to vector<8x64xf32>
    %376 = arith.addf %375, %374 : vector<8x64xf32>
    %377 = arith.mulf %371, %376 : vector<8x64xf32>
    %c1_169 = arith.constant 1 : index
    %c0_170 = arith.constant 0 : index
    %c0_171 = arith.constant 0 : index
    %378 = vector.load %arg16[%c1_169, %c0_170, %c0_171] : memref<2x64x32xf32, #tpu.memory_space<vmem>>, vector<1x64x32xf32>
    %379 = vector.shape_cast %378 : vector<1x64x32xf32> to vector<64x32xf32>
    %cst_172 = arith.constant dense<0.000000e+00> : vector<8x32xf32>
    %380 = tpu.matmul %377, %379, %cst_172 {dimension_numbers = #tpu.dot_dimension_numbers<[1], [0], [0], [1], [0, 0, 1, 1], [], []>} : vector<8x64xf32>, vector<64x32xf32>, vector<8x32xf32> -> vector<8x32xf32>
    %c1_173 = arith.constant 1 : index
    %c0_174 = arith.constant 0 : index
    %c0_175 = arith.constant 0 : index
    %381 = vector.load %arg17[%c1_173, %c0_174, %c0_175] : memref<2x1x32xf32, #tpu.memory_space<vmem>>, vector<1x1x32xf32>
    %382 = vector.shape_cast %381 : vector<1x1x32xf32> to vector<1x32xf32>
    %383 = vector.broadcast %382 : vector<1x32xf32> to vector<8x32xf32>
    %384 = arith.addf %380, %383 : vector<8x32xf32>
    %385 = arith.addf %384, %362 : vector<8x32xf32>
    %c1_176 = arith.constant 1 : index
    %c0_177 = arith.constant 0 : index
    %c0_178 = arith.constant 0 : index
    %386 = vector.load %arg18[%c1_176, %c0_177, %c0_178] : memref<2x1x32xf32, #tpu.memory_space<vmem>>, vector<1x1x32xf32>
    %387 = vector.shape_cast %386 : vector<1x1x32xf32> to vector<1x32xf32>
    %c1_179 = arith.constant 1 : index
    %c0_180 = arith.constant 0 : index
    %c0_181 = arith.constant 0 : index
    %388 = vector.load %arg19[%c1_179, %c0_180, %c0_181] : memref<2x1x32xf32, #tpu.memory_space<vmem>>, vector<1x1x32xf32>
    %389 = vector.shape_cast %388 : vector<1x1x32xf32> to vector<1x32xf32>
    %cst_182 = arith.constant dense<0.000000e+00> : vector<8xf32>
    %390 = vector.multi_reduction <add>, %385, %cst_182 [1] : vector<8x32xf32> to vector<8xf32>
    %391 = vector.shape_cast %390 : vector<8xf32> to vector<8x1xf32>
    %cst_183 = arith.constant 3.200000e+01 : f32
    %392 = vector.broadcast %cst_183 : f32 to vector<8x1xf32>
    %393 = arith.divf %391, %392 : vector<8x1xf32>
    %394 = arith.mulf %385, %385 : vector<8x32xf32>
    %cst_184 = arith.constant dense<0.000000e+00> : vector<8xf32>
    %395 = vector.multi_reduction <add>, %394, %cst_184 [1] : vector<8x32xf32> to vector<8xf32>
    %396 = vector.shape_cast %395 : vector<8xf32> to vector<8x1xf32>
    %cst_185 = arith.constant 3.200000e+01 : f32
    %397 = vector.broadcast %cst_185 : f32 to vector<8x1xf32>
    %398 = arith.divf %396, %397 : vector<8x1xf32>
    %399 = arith.mulf %393, %393 : vector<8x1xf32>
    %400 = arith.subf %398, %399 : vector<8x1xf32>
    %401 = vector.broadcast %393 : vector<8x1xf32> to vector<8x32xf32>
    %402 = arith.subf %385, %401 : vector<8x32xf32>
    %cst_186 = arith.constant 9.99999974E-6 : f32
    %403 = vector.broadcast %cst_186 : f32 to vector<8x1xf32>
    %404 = arith.addf %400, %403 : vector<8x1xf32>
    %405 = math.rsqrt %404 : vector<8x1xf32>
    %406 = vector.broadcast %405 : vector<8x1xf32> to vector<8x32xf32>
    %407 = arith.mulf %402, %406 : vector<8x32xf32>
    %408 = vector.broadcast %387 : vector<1x32xf32> to vector<8x32xf32>
    %409 = arith.mulf %407, %408 : vector<8x32xf32>
    %410 = vector.broadcast %389 : vector<1x32xf32> to vector<8x32xf32>
    %411 = arith.addf %409, %410 : vector<8x32xf32>
    %412 = vector.extract_strided_slice %411 {offsets = [0, 0], sizes = [1, 32], strides = [1, 1]} : vector<8x32xf32> to vector<1x32xf32>
    %c0_187 = arith.constant 0 : index
    %c0_188 = arith.constant 0 : index
    %413 = vector.load %arg20[%c0_187, %c0_188] : memref<32x32xf32, #tpu.memory_space<vmem>>, vector<32x32xf32>
    %cst_189 = arith.constant dense<0.000000e+00> : vector<1x32xf32>
    %414 = tpu.matmul %412, %413, %cst_189 {dimension_numbers = #tpu.dot_dimension_numbers<[1], [0], [0], [1], [0, 0, 1, 1], [], []>} : vector<1x32xf32>, vector<32x32xf32>, vector<1x32xf32> -> vector<1x32xf32>
    %c0_190 = arith.constant 0 : index
    %c0_191 = arith.constant 0 : index
    %415 = vector.load %arg21[%c0_190, %c0_191] : memref<1x32xf32, #tpu.memory_space<vmem>>, vector<1x32xf32>
    %416 = arith.addf %414, %415 : vector<1x32xf32>
    %417 = math.tanh %416 : vector<1x32xf32>
    %c0_192 = arith.constant 0 : index
    %c0_193 = arith.constant 0 : index
    %418 = vector.load %arg22[%c0_192, %c0_193] : memref<32x1xf32, #tpu.memory_space<vmem>>, vector<32x1xf32>
    %cst_194 = arith.constant dense<0.000000e+00> : vector<1x1xf32>
    %419 = tpu.matmul %417, %418, %cst_194 {dimension_numbers = #tpu.dot_dimension_numbers<[1], [0], [0], [1], [0, 0, 1, 1], [], []>} : vector<1x32xf32>, vector<32x1xf32>, vector<1x1xf32> -> vector<1x1xf32>
    %c0_195 = arith.constant 0 : index
    %c0_196 = arith.constant 0 : index
    %420 = vector.load %arg23[%c0_195, %c0_196] : memref<1x1xf32, #tpu.memory_space<vmem>>, vector<1x1xf32>
    %421 = arith.addf %419, %420 : vector<1x1xf32>
    %c0_197 = arith.constant 0 : index
    %c0_198 = arith.constant 0 : index
    %c0_199 = arith.constant 0 : index
    %422 = vector.load %arg24[%c0_197, %c0_198, %c0_199] : memref<1x1x1xf32, #tpu.memory_space<vmem>>, vector<1x1x1xf32>
    %423 = vector.shape_cast %422 : vector<1x1x1xf32> to vector<1x1xf32>
    %424 = vector.shape_cast %421 : vector<1x1xf32> to vector<1x1x1xf32>
    tpu.vector_store %arg24[%c0_197, %c0_198, %c0_199], %424 {strides = array<i32>} : memref<1x1x1xf32, #tpu.memory_space<vmem>>, vector<1x1x1xf32>,
    return
  }
  func.func @transform_0(%arg0: i32) -> (i32, i32, i32) {
    %c0_i32 = arith.constant 0 : i32
    %c0_i32_0 = arith.constant 0 : i32
    %c0_i32_1 = arith.constant 0 : i32
    return %arg0, %c0_i32, %c0_i32_0 : i32, i32, i32
  }
  func.func @transform_1(%arg0: i32) -> (i32, i32, i32) {
    %c0_i32 = arith.constant 0 : i32
    %c0_i32_0 = arith.constant 0 : i32
    %c0_i32_1 = arith.constant 0 : i32
    return %arg0, %c0_i32, %c0_i32_0 : i32, i32, i32
  }
  func.func @transform_2(%arg0: i32) -> (i32, i32) {
    %c0_i32 = arith.constant 0 : i32
    %c0_i32_0 = arith.constant 0 : i32
    %c0_i32_1 = arith.constant 0 : i32
    return %c0_i32, %c0_i32_0 : i32, i32
  }
  func.func @transform_3(%arg0: i32) -> (i32, i32) {
    %c0_i32 = arith.constant 0 : i32
    %c0_i32_0 = arith.constant 0 : i32
    %c0_i32_1 = arith.constant 0 : i32
    return %c0_i32, %c0_i32_0 : i32, i32
  }
  func.func @transform_4(%arg0: i32) -> (i32, i32) {
    %c0_i32 = arith.constant 0 : i32
    %c0_i32_0 = arith.constant 0 : i32
    %c0_i32_1 = arith.constant 0 : i32
    return %c0_i32, %c0_i32_0 : i32, i32
  }
  func.func @transform_5(%arg0: i32) -> (i32, i32) {
    %c0_i32 = arith.constant 0 : i32
    %c0_i32_0 = arith.constant 0 : i32
    %c0_i32_1 = arith.constant 0 : i32
    return %c0_i32, %c0_i32_0 : i32, i32
  }
  func.func @transform_6(%arg0: i32) -> (i32, i32) {
    %c0_i32 = arith.constant 0 : i32
    %c0_i32_0 = arith.constant 0 : i32
    %c0_i32_1 = arith.constant 0 : i32
    return %c0_i32, %c0_i32_0 : i32, i32
  }
  func.func @transform_7(%arg0: i32) -> (i32, i32, i32) {
    %c0_i32 = arith.constant 0 : i32
    %c0_i32_0 = arith.constant 0 : i32
    %c0_i32_1 = arith.constant 0 : i32
    %c0_i32_2 = arith.constant 0 : i32
    return %c0_i32, %c0_i32_0, %c0_i32_1 : i32, i32, i32
  }
  func.func @transform_8(%arg0: i32) -> (i32, i32, i32) {
    %c0_i32 = arith.constant 0 : i32
    %c0_i32_0 = arith.constant 0 : i32
    %c0_i32_1 = arith.constant 0 : i32
    %c0_i32_2 = arith.constant 0 : i32
    return %c0_i32, %c0_i32_0, %c0_i32_1 : i32, i32, i32
  }
  func.func @transform_9(%arg0: i32) -> (i32, i32, i32) {
    %c0_i32 = arith.constant 0 : i32
    %c0_i32_0 = arith.constant 0 : i32
    %c0_i32_1 = arith.constant 0 : i32
    %c0_i32_2 = arith.constant 0 : i32
    return %c0_i32, %c0_i32_0, %c0_i32_1 : i32, i32, i32
  }
  func.func @transform_10(%arg0: i32) -> (i32, i32, i32) {
    %c0_i32 = arith.constant 0 : i32
    %c0_i32_0 = arith.constant 0 : i32
    %c0_i32_1 = arith.constant 0 : i32
    %c0_i32_2 = arith.constant 0 : i32
    return %c0_i32, %c0_i32_0, %c0_i32_1 : i32, i32, i32
  }
  func.func @transform_11(%arg0: i32) -> (i32, i32, i32) {
    %c0_i32 = arith.constant 0 : i32
    %c0_i32_0 = arith.constant 0 : i32
    %c0_i32_1 = arith.constant 0 : i32
    %c0_i32_2 = arith.constant 0 : i32
    return %c0_i32, %c0_i32_0, %c0_i32_1 : i32, i32, i32
  }
  func.func @transform_12(%arg0: i32) -> (i32, i32, i32) {
    %c0_i32 = arith.constant 0 : i32
    %c0_i32_0 = arith.constant 0 : i32
    %c0_i32_1 = arith.constant 0 : i32
    %c0_i32_2 = arith.constant 0 : i32
    return %c0_i32, %c0_i32_0, %c0_i32_1 : i32, i32, i32
  }
  func.func @transform_13(%arg0: i32) -> (i32, i32, i32) {
    %c0_i32 = arith.constant 0 : i32
    %c0_i32_0 = arith.constant 0 : i32
    %c0_i32_1 = arith.constant 0 : i32
    %c0_i32_2 = arith.constant 0 : i32
    return %c0_i32, %c0_i32_0, %c0_i32_1 : i32, i32, i32
  }
  func.func @transform_14(%arg0: i32) -> (i32, i32, i32) {
    %c0_i32 = arith.constant 0 : i32
    %c0_i32_0 = arith.constant 0 : i32
    %c0_i32_1 = arith.constant 0 : i32
    %c0_i32_2 = arith.constant 0 : i32
    return %c0_i32, %c0_i32_0, %c0_i32_1 : i32, i32, i32
  }
  func.func @transform_15(%arg0: i32) -> (i32, i32, i32) {
    %c0_i32 = arith.constant 0 : i32
    %c0_i32_0 = arith.constant 0 : i32
    %c0_i32_1 = arith.constant 0 : i32
    %c0_i32_2 = arith.constant 0 : i32
    return %c0_i32, %c0_i32_0, %c0_i32_1 : i32, i32, i32
  }
  func.func @transform_16(%arg0: i32) -> (i32, i32, i32) {
    %c0_i32 = arith.constant 0 : i32
    %c0_i32_0 = arith.constant 0 : i32
    %c0_i32_1 = arith.constant 0 : i32
    %c0_i32_2 = arith.constant 0 : i32
    return %c0_i32, %c0_i32_0, %c0_i32_1 : i32, i32, i32
  }
  func.func @transform_17(%arg0: i32) -> (i32, i32, i32) {
    %c0_i32 = arith.constant 0 : i32
    %c0_i32_0 = arith.constant 0 : i32
    %c0_i32_1 = arith.constant 0 : i32
    %c0_i32_2 = arith.constant 0 : i32
    return %c0_i32, %c0_i32_0, %c0_i32_1 : i32, i32, i32
  }
  func.func @transform_18(%arg0: i32) -> (i32, i32, i32) {
    %c0_i32 = arith.constant 0 : i32
    %c0_i32_0 = arith.constant 0 : i32
    %c0_i32_1 = arith.constant 0 : i32
    %c0_i32_2 = arith.constant 0 : i32
    return %c0_i32, %c0_i32_0, %c0_i32_1 : i32, i32, i32
  }
  func.func @transform_19(%arg0: i32) -> (i32, i32) {
    %c0_i32 = arith.constant 0 : i32
    %c0_i32_0 = arith.constant 0 : i32
    %c0_i32_1 = arith.constant 0 : i32
    return %c0_i32, %c0_i32_0 : i32, i32
  }
  func.func @transform_20(%arg0: i32) -> (i32, i32) {
    %c0_i32 = arith.constant 0 : i32
    %c0_i32_0 = arith.constant 0 : i32
    %c0_i32_1 = arith.constant 0 : i32
    return %c0_i32, %c0_i32_0 : i32, i32
  }
  func.func @transform_21(%arg0: i32) -> (i32, i32) {
    %c0_i32 = arith.constant 0 : i32
    %c0_i32_0 = arith.constant 0 : i32
    %c0_i32_1 = arith.constant 0 : i32
    return %c0_i32, %c0_i32_0 : i32, i32
  }
  func.func @transform_22(%arg0: i32) -> (i32, i32) {
    %c0_i32 = arith.constant 0 : i32
    %c0_i32_0 = arith.constant 0 : i32
    %c0_i32_1 = arith.constant 0 : i32
    return %c0_i32, %c0_i32_0 : i32, i32
  }
  func.func @transform_23(%arg0: i32) -> (i32, i32, i32) {
    %c0_i32 = arith.constant 0 : i32
    %c0_i32_0 = arith.constant 0 : i32
    %c0_i32_1 = arith.constant 0 : i32
    return %arg0, %c0_i32, %c0_i32_0 : i32, i32, i32
  }
}

</mosaic_0001>

<llo_original>
// kernel: regression_model_forward.1
$region0: #{regression_model_forward.1}
  #allocation0 [shape = 'u32[]', space=smem, size = 0x4, offset = 0x4, fixed_abs, tag = 'smem constant byte address 0x4 - core index']
  #allocation1 [shape = 'u32[144,128]{1,0:T(1,128)}', space=vmem, size = 0x12000, scoped, tag = 'internal scratch']
  #allocation2 [shape = 'f32[8,32]{1,0:T(8,128)}', space=vmem, size = 0x1000, scoped, tag = 'scratch operand']
  #allocation3 [shape = 'f32[1,1]{1,0:T(1,128)S(1)}', space=vmem, size = 0x200, scoped, tag = 'scoped memory for regression_model_forward.1']
  %s0 = inlined_call_operand.vmem [shape: s32[2,8,1], index: 0, kind: input, shape index: {}]
  %s1 = inlined_call_operand.vmem [shape: f32[2,1,8], index: 1, kind: input, shape index: {}]
  %s2 = inlined_call_operand.vmem [shape: f32[50,32], index: 2, kind: input, shape index: {}]
  %s3 = inlined_call_operand.vmem [shape: f32[64,32], index: 3, kind: input, shape index: {}]
  %s4 = inlined_call_operand.vmem [shape: f32[1,32], index: 4, kind: input, shape index: {}]
  %s5 = inlined_call_operand.vmem [shape: f32[1,32], index: 5, kind: input, shape index: {}]
  %s6 = inlined_call_operand.vmem [shape: f32[1,32], index: 6, kind: input, shape index: {}]
  %s7 = inlined_call_operand.vmem [shape: f32[2,32,96], index: 7, kind: input, shape index: {}]
  %s8 = inlined_call_operand.vmem [shape: f32[2,1,96], index: 8, kind: input, shape index: {}]
  %s9 = inlined_call_operand.vmem [shape: f32[2,32,32], index: 9, kind: input, shape index: {}]
  %s10 = inlined_call_operand.vmem [shape: f32[2,1,32], index: 10, kind: input, shape index: {}]
  %s11 = inlined_call_operand.vmem [shape: f32[2,1,32], index: 11, kind: input, shape index: {}]
  %s12 = inlined_call_operand.vmem [shape: f32[2,1,32], index: 12, kind: input, shape index: {}]
  %s13 = inlined_call_operand.vmem [shape: f32[2,32,64], index: 13, kind: input, shape index: {}]
  %s14 = inlined_call_operand.vmem [shape: f32[2,1,64], index: 14, kind: input, shape index: {}]
  %s15 = inlined_call_operand.vmem [shape: f32[2,64,32], index: 15, kind: input, shape index: {}]
  %s16 = inlined_call_operand.vmem [shape: f32[2,1,32], index: 16, kind: input, shape index: {}]
  %s17 = inlined_call_operand.vmem [shape: f32[2,1,32], index: 17, kind: input, shape index: {}]
  %s18 = inlined_call_operand.vmem [shape: f32[2,1,32], index: 18, kind: input, shape index: {}]
  %s19 = inlined_call_operand.vmem [shape: f32[32,32], index: 19, kind: input, shape index: {}]
  %s20 = inlined_call_operand.vmem [shape: f32[1,32], index: 20, kind: input, shape index: {}]
  %s21 = inlined_call_operand.vmem [shape: f32[32,1], index: 21, kind: input, shape index: {}]
  %s22 = inlined_call_operand.<no memory space> [shape: f32[1,1], index: 22, kind: input, shape index: {}]
  %s23 = inlined_call_operand.vmem [shape: f32[2,1,1], index: 23, kind: output, shape index: {}]
  %s24 = sld [smem:[#allocation0]]
  $region125: #{regression_model_forward.1} parent=0
    _
  %s26 = ssub.s32 1, %s24
  %s27 = scalar_select 0, %s26, %s24
  %v28 = vstv %s22
  %29 = vst [vmem:[#allocation3] sm:$0x1] %v28
  loop: start=0, step=1, limit=4
  $region2: #{regression_model_forward.1} parent=0 // loop_pre_header
    _
  $region3: #{regression_model_forward.1} parent=0 // loop_header
    %s31 = sphi 0, %s35
    %p32 = scmp.ge.s32.totalorder %s31, 4
    %s41 = sphi 0, %s43
    %s44 = sphi 0, %s41
    %s45 = sphi 0, %s44
    %s61 = sphi 0, %s45
    %s67 = sphi 0, %s69
    %s70 = sphi 0, %s67
    %s71 = sphi 0, %s70
    %s87 = sphi 0, %s71
    %s91 = sphi 0, %s91
    %s93 = sphi 0, %s91
    %s94 = sphi 0, %s93
    %s108 = sphi 0, %s94
    %s112 = sphi 0, %s112
    %s114 = sphi 0, %s112
    %s115 = sphi 0, %s114
    %s129 = sphi 0, %s115
    %s133 = sphi 0, %s133
    %s135 = sphi 0, %s133
    %s136 = sphi 0, %s135
    %s150 = sphi 0, %s136
    %s154 = sphi 0, %s154
    %s156 = sphi 0, %s154
    %s157 = sphi 0, %s156
    %s171 = sphi 0, %s157
    %s175 = sphi 0, %s175
    %s177 = sphi 0, %s175
    %s178 = sphi 0, %s177
    %s192 = sphi 0, %s178
    %s196 = sphi 0, %s196
    %s198 = sphi 0, %s196
    %s199 = sphi 0, %s198
    %s213 = sphi 0, %s199
    %s217 = sphi 0, %s217
    %s219 = sphi 0, %s217
    %s220 = sphi 0, %s219
    %s234 = sphi 0, %s220
    %s238 = sphi 0, %s238
    %s240 = sphi 0, %s238
    %s241 = sphi 0, %s240
    %s255 = sphi 0, %s241
    %s259 = sphi 0, %s259
    %s261 = sphi 0, %s259
    %s262 = sphi 0, %s261
    %s276 = sphi 0, %s262
    %s280 = sphi 0, %s280
    %s282 = sphi 0, %s280
    %s283 = sphi 0, %s282
    %s297 = sphi 0, %s283
    %s301 = sphi 0, %s301
    %s303 = sphi 0, %s301
    %s304 = sphi 0, %s303
    %s318 = sphi 0, %s304
    %s322 = sphi 0, %s322
    %s324 = sphi 0, %s322
    %s325 = sphi 0, %s324
    %s339 = sphi 0, %s325
    %s343 = sphi 0, %s343
    %s345 = sphi 0, %s343
    %s346 = sphi 0, %s345
    %s360 = sphi 0, %s346
    %s364 = sphi 0, %s364
    %s366 = sphi 0, %s364
    %s367 = sphi 0, %s366
    %s381 = sphi 0, %s367
    %s385 = sphi 0, %s385
    %s387 = sphi 0, %s385
    %s388 = sphi 0, %s387
    %s402 = sphi 0, %s388
    %s406 = sphi 0, %s406
    %s408 = sphi 0, %s406
    %s409 = sphi 0, %s408
    %s423 = sphi 0, %s409
    %s427 = sphi 0, %s427
    %s429 = sphi 0, %s427
    %s430 = sphi 0, %s429
    %s444 = sphi 0, %s430
    %s448 = sphi 0, %s448
    %s450 = sphi 0, %s448
    %s451 = sphi 0, %s450
    %s465 = sphi 0, %s451
    %s469 = sphi 0, %s469
    %s471 = sphi 0, %s469
    %s472 = sphi 0, %s471
    %s486 = sphi 0, %s472
    %s490 = sphi 0, %s490
    %s492 = sphi 0, %s490
    %s493 = sphi 0, %s492
    %s507 = sphi 0, %s493
    %s511 = sphi 0, %s511
    %s513 = sphi 0, %s511
    %s514 = sphi 0, %s513
    %s528 = sphi 0, %s514
    %s534 = sphi 0, %s536
    %s537 = sphi 0, %s534
    %s538 = sphi 0, %s537
    %s554 = sphi 0, %s538
  $region4: #{regression_model_forward.1} parent=0 // loop_header_branch
    %34 = sbr.rel (%p32) target = $region8
  $region5: #{regression_model_forward.1} parent=0 // loop_body
    %s36 = ssub.s32 %s31, 1
    %s37 = ssub.s32 %s31, 2
    %s38 = sadd.s32 %s31, 1
    %s39 = ssub.s32 %s31, %s38
    %p40 = scmp.eq.s32.totalorder %s39, 0
    %s42 = sadd.s32 %s41, 1
    %s43 = scalar_select %p40, %s41, %s42
    %p46 = pneg %p40
    %p47 = scmp.eq.s32.totalorder %s31, 1
    %p48 = por %p46, %p47
    %p49 = scmp.ne.s32.totalorder %s41, %s44
    %p50 = scmp.eq.s32.totalorder %s31, 0
    %p51 = por %p49, %p50
    %p52 = scmp.ne.s32.totalorder %s41, %s44
    %p53 = scmp.eq.s32.totalorder %s36, 1
    %p54 = por %p52, %p53
    %p55 = scmp.ne.s32.totalorder %s44, %s45
    %p56 = scmp.eq.s32.totalorder %s36, 0
    %p57 = por %p55, %p56
    %p58 = scmp.ne.s32.totalorder %s44, %s45
    %p59 = scmp.eq.s32.totalorder %s37, 1
    %p60 = por %p58, %p59
    %p62 = scmp.ne.s32.totalorder %s45, %s61
    %p63 = scmp.eq.s32.totalorder %s37, 0
    %p64 = por %p62, %p63
    %s65 = ssub.s32 %s31, %s38
    %p66 = scmp.eq.s32.totalorder %s65, 0
    %s68 = sadd.s32 %s67, 1
    %s69 = scalar_select %p66, %s67, %s68
    %p72 = pneg %p66
    %p73 = scmp.eq.s32.totalorder %s31, 1
    %p74 = por %p72, %p73
    %p75 = scmp.ne.s32.totalorder %s67, %s70
    %p76 = scmp.eq.s32.totalorder %s31, 0
    %p77 = por %p75, %p76
    %p78 = scmp.ne.s32.totalorder %s67, %s70
    %p79 = scmp.eq.s32.totalorder %s36, 1
    %p80 = por %p78, %p79
    %p81 = scmp.ne.s32.totalorder %s70, %s71
    %p82 = scmp.eq.s32.totalorder %s36, 0
    %p83 = por %p81, %p82
    %p84 = scmp.ne.s32.totalorder %s70, %s71
    %p85 = scmp.eq.s32.totalorder %s37, 1
    %p86 = por %p84, %p85
    %p88 = scmp.ne.s32.totalorder %s71, %s87
    %p89 = scmp.eq.s32.totalorder %s37, 0
    %p90 = por %p88, %p89
    %s92 = sadd.s32 %s91, 1
    %p95 = scmp.eq.s32.totalorder %s31, 1
    %p96 = scmp.ne.s32.totalorder %s91, %s93
    %p97 = scmp.eq.s32.totalorder %s31, 0
    %p98 = por %p96, %p97
    %p99 = scmp.ne.s32.totalorder %s91, %s93
    %p100 = scmp.eq.s32.totalorder %s36, 1
    %p101 = por %p99, %p100
    %p102 = scmp.ne.s32.totalorder %s93, %s94
    %p103 = scmp.eq.s32.totalorder %s36, 0
    %p104 = por %p102, %p103
    %p105 = scmp.ne.s32.totalorder %s93, %s94
    %p106 = scmp.eq.s32.totalorder %s37, 1
    %p107 = por %p105, %p106
    %p109 = scmp.ne.s32.totalorder %s94, %s108
    %p110 = scmp.eq.s32.totalorder %s37, 0
    %p111 = por %p109, %p110
    %s113 = sadd.s32 %s112, 1
    %p116 = scmp.eq.s32.totalorder %s31, 1
    %p117 = scmp.ne.s32.totalorder %s112, %s114
    %p118 = scmp.eq.s32.totalorder %s31, 0
    %p119 = por %p117, %p118
    %p120 = scmp.ne.s32.totalorder %s112, %s114
    %p121 = scmp.eq.s32.totalorder %s36, 1
    %p122 = por %p120, %p121
    %p123 = scmp.ne.s32.totalorder %s114, %s115
    %p124 = scmp.eq.s32.totalorder %s36, 0
    %p125 = por %p123, %p124
    %p126 = scmp.ne.s32.totalorder %s114, %s115
    %p127 = scmp.eq.s32.totalorder %s37, 1
    %p128 = por %p126, %p127
    %p130 = scmp.ne.s32.totalorder %s115, %s129
    %p131 = scmp.eq.s32.totalorder %s37, 0
    %p132 = por %p130, %p131
    %s134 = sadd.s32 %s133, 1
    %p137 = scmp.eq.s32.totalorder %s31, 1
    %p138 = scmp.ne.s32.totalorder %s133, %s135
    %p139 = scmp.eq.s32.totalorder %s31, 0
    %p140 = por %p138, %p139
    %p141 = scmp.ne.s32.totalorder %s133, %s135
    %p142 = scmp.eq.s32.totalorder %s36, 1
    %p143 = por %p141, %p142
    %p144 = scmp.ne.s32.totalorder %s135, %s136
    %p145 = scmp.eq.s32.totalorder %s36, 0
    %p146 = por %p144, %p145
    %p147 = scmp.ne.s32.totalorder %s135, %s136
    %p148 = scmp.eq.s32.totalorder %s37, 1
    %p149 = por %p147, %p148
    %p151 = scmp.ne.s32.totalorder %s136, %s150
    %p152 = scmp.eq.s32.totalorder %s37, 0
    %p153 = por %p151, %p152
    %s155 = sadd.s32 %s154, 1
    %p158 = scmp.eq.s32.totalorder %s31, 1
    %p159 = scmp.ne.s32.totalorder %s154, %s156
    %p160 = scmp.eq.s32.totalorder %s31, 0
    %p161 = por %p159, %p160
    %p162 = scmp.ne.s32.totalorder %s154, %s156
    %p163 = scmp.eq.s32.totalorder %s36, 1
    %p164 = por %p162, %p163
    %p165 = scmp.ne.s32.totalorder %s156, %s157
    %p166 = scmp.eq.s32.totalorder %s36, 0
    %p167 = por %p165, %p166
    %p168 = scmp.ne.s32.totalorder %s156, %s157
    %p169 = scmp.eq.s32.totalorder %s37, 1
    %p170 = por %p168, %p169
    %p172 = scmp.ne.s32.totalorder %s157, %s171
    %p173 = scmp.eq.s32.totalorder %s37, 0
    %p174 = por %p172, %p173
    %s176 = sadd.s32 %s175, 1
    %p179 = scmp.eq.s32.totalorder %s31, 1
    %p180 = scmp.ne.s32.totalorder %s175, %s177
    %p181 = scmp.eq.s32.totalorder %s31, 0
    %p182 = por %p180, %p181
    %p183 = scmp.ne.s32.totalorder %s175, %s177
    %p184 = scmp.eq.s32.totalorder %s36, 1
    %p185 = por %p183, %p184
    %p186 = scmp.ne.s32.totalorder %s177, %s178
    %p187 = scmp.eq.s32.totalorder %s36, 0
    %p188 = por %p186, %p187
    %p189 = scmp.ne.s32.totalorder %s177, %s178
    %p190 = scmp.eq.s32.totalorder %s37, 1
    %p191 = por %p189, %p190
    %p193 = scmp.ne.s32.totalorder %s178, %s192
    %p194 = scmp.eq.s32.totalorder %s37, 0
    %p195 = por %p193, %p194
    %s197 = sadd.s32 %s196, 1
    %p200 = scmp.eq.s32.totalorder %s31, 1
    %p201 = scmp.ne.s32.totalorder %s196, %s198
    %p202 = scmp.eq.s32.totalorder %s31, 0
    %p203 = por %p201, %p202
    %p204 = scmp.ne.s32.totalorder %s196, %s198
    %p205 = scmp.eq.s32.totalorder %s36, 1
    %p206 = por %p204, %p205
    %p207 = scmp.ne.s32.totalorder %s198, %s199
    %p208 = scmp.eq.s32.totalorder %s36, 0
    %p209 = por %p207, %p208
    %p210 = scmp.ne.s32.totalorder %s198, %s199
    %p211 = scmp.eq.s32.totalorder %s37, 1
    %p212 = por %p210, %p211
    %p214 = scmp.ne.s32.totalorder %s199, %s213
    %p215 = scmp.eq.s32.totalorder %s37, 0
    %p216 = por %p214, %p215
    %s218 = sadd.s32 %s217, 1
    %p221 = scmp.eq.s32.totalorder %s31, 1
    %p222 = scmp.ne.s32.totalorder %s217, %s219
    %p223 = scmp.eq.s32.totalorder %s31, 0
    %p224 = por %p222, %p223
    %p225 = scmp.ne.s32.totalorder %s217, %s219
    %p226 = scmp.eq.s32.totalorder %s36, 1
    %p227 = por %p225, %p226
    %p228 = scmp.ne.s32.totalorder %s219, %s220
    %p229 = scmp.eq.s32.totalorder %s36, 0
    %p230 = por %p228, %p229
    %p231 = scmp.ne.s32.totalorder %s219, %s220
    %p232 = scmp.eq.s32.totalorder %s37, 1
    %p233 = por %p231, %p232
    %p235 = scmp.ne.s32.totalorder %s220, %s234
    %p236 = scmp.eq.s32.totalorder %s37, 0
    %p237 = por %p235, %p236
    %s239 = sadd.s32 %s238, 1
    %p242 = scmp.eq.s32.totalorder %s31, 1
    %p243 = scmp.ne.s32.totalorder %s238, %s240
    %p244 = scmp.eq.s32.totalorder %s31, 0
    %p245 = por %p243, %p244
    %p246 = scmp.ne.s32.totalorder %s238, %s240
    %p247 = scmp.eq.s32.totalorder %s36, 1
    %p248 = por %p246, %p247
    %p249 = scmp.ne.s32.totalorder %s240, %s241
    %p250 = scmp.eq.s32.totalorder %s36, 0
    %p251 = por %p249, %p250
    %p252 = scmp.ne.s32.totalorder %s240, %s241
    %p253 = scmp.eq.s32.totalorder %s37, 1
    %p254 = por %p252, %p253
    %p256 = scmp.ne.s32.totalorder %s241, %s255
    %p257 = scmp.eq.s32.totalorder %s37, 0
    %p258 = por %p256, %p257
    %s260 = sadd.s32 %s259, 1
    %p263 = scmp.eq.s32.totalorder %s31, 1
    %p264 = scmp.ne.s32.totalorder %s259, %s261
    %p265 = scmp.eq.s32.totalorder %s31, 0
    %p266 = por %p264, %p265
    %p267 = scmp.ne.s32.totalorder %s259, %s261
    %p268 = scmp.eq.s32.totalorder %s36, 1
    %p269 = por %p267, %p268
    %p270 = scmp.ne.s32.totalorder %s261, %s262
    %p271 = scmp.eq.s32.totalorder %s36, 0
    %p272 = por %p270, %p271
    %p273 = scmp.ne.s32.totalorder %s261, %s262
    %p274 = scmp.eq.s32.totalorder %s37, 1
    %p275 = por %p273, %p274
    %p277 = scmp.ne.s32.totalorder %s262, %s276
    %p278 = scmp.eq.s32.totalorder %s37, 0
    %p279 = por %p277, %p278
    %s281 = sadd.s32 %s280, 1
    %p284 = scmp.eq.s32.totalorder %s31, 1
    %p285 = scmp.ne.s32.totalorder %s280, %s282
    %p286 = scmp.eq.s32.totalorder %s31, 0
    %p287 = por %p285, %p286
    %p288 = scmp.ne.s32.totalorder %s280, %s282
    %p289 = scmp.eq.s32.totalorder %s36, 1
    %p290 = por %p288, %p289
    %p291 = scmp.ne.s32.totalorder %s282, %s283
    %p292 = scmp.eq.s32.totalorder %s36, 0
    %p293 = por %p291, %p292
    %p294 = scmp.ne.s32.totalorder %s282, %s283
    %p295 = scmp.eq.s32.totalorder %s37, 1
    %p296 = por %p294, %p295
    %p298 = scmp.ne.s32.totalorder %s283, %s297
    %p299 = scmp.eq.s32.totalorder %s37, 0
    %p300 = por %p298, %p299
    %s302 = sadd.s32 %s301, 1
    %p305 = scmp.eq.s32.totalorder %s31, 1
    %p306 = scmp.ne.s32.totalorder %s301, %s303
    %p307 = scmp.eq.s32.totalorder %s31, 0
    %p308 = por %p306, %p307
    %p309 = scmp.ne.s32.totalorder %s301, %s303
    %p310 = scmp.eq.s32.totalorder %s36, 1
    %p311 = por %p309, %p310
    %p312 = scmp.ne.s32.totalorder %s303, %s304
    %p313 = scmp.eq.s32.totalorder %s36, 0
    %p314 = por %p312, %p313
    %p315 = scmp.ne.s32.totalorder %s303, %s304
    %p316 = scmp.eq.s32.totalorder %s37, 1
    %p317 = por %p315, %p316
    %p319 = scmp.ne.s32.totalorder %s304, %s318
    %p320 = scmp.eq.s32.totalorder %s37, 0
    %p321 = por %p319, %p320
    %s323 = sadd.s32 %s322, 1
    %p326 = scmp.eq.s32.totalorder %s31, 1
    %p327 = scmp.ne.s32.totalorder %s322, %s324
    %p328 = scmp.eq.s32.totalorder %s31, 0
    %p329 = por %p327, %p328
    %p330 = scmp.ne.s32.totalorder %s322, %s324
    %p331 = scmp.eq.s32.totalorder %s36, 1
    %p332 = por %p330, %p331
    %p333 = scmp.ne.s32.totalorder %s324, %s325
    %p334 = scmp.eq.s32.totalorder %s36, 0
    %p335 = por %p333, %p334
    %p336 = scmp.ne.s32.totalorder %s324, %s325
    %p337 = scmp.eq.s32.totalorder %s37, 1
    %p338 = por %p336, %p337
    %p340 = scmp.ne.s32.totalorder %s325, %s339
    %p341 = scmp.eq.s32.totalorder %s37, 0
    %p342 = por %p340, %p341
    %s344 = sadd.s32 %s343, 1
    %p347 = scmp.eq.s32.totalorder %s31, 1
    %p348 = scmp.ne.s32.totalorder %s343, %s345
    %p349 = scmp.eq.s32.totalorder %s31, 0
    %p350 = por %p348, %p349
    %p351 = scmp.ne.s32.totalorder %s343, %s345
    %p352 = scmp.eq.s32.totalorder %s36, 1
    %p353 = por %p351, %p352
    %p354 = scmp.ne.s32.totalorder %s345, %s346
    %p355 = scmp.eq.s32.totalorder %s36, 0
    %p356 = por %p354, %p355
    %p357 = scmp.ne.s32.totalorder %s345, %s346
    %p358 = scmp.eq.s32.totalorder %s37, 1
    %p359 = por %p357, %p358
    %p361 = scmp.ne.s32.totalorder %s346, %s360
    %p362 = scmp.eq.s32.totalorder %s37, 0
    %p363 = por %p361, %p362
    %s365 = sadd.s32 %s364, 1
    %p368 = scmp.eq.s32.totalorder %s31, 1
    %p369 = scmp.ne.s32.totalorder %s364, %s366
    %p370 = scmp.eq.s32.totalorder %s31, 0
    %p371 = por %p369, %p370
    %p372 = scmp.ne.s32.totalorder %s364, %s366
    %p373 = scmp.eq.s32.totalorder %s36, 1
    %p374 = por %p372, %p373
    %p375 = scmp.ne.s32.totalorder %s366, %s367
    %p376 = scmp.eq.s32.totalorder %s36, 0
    %p377 = por %p375, %p376
    %p378 = scmp.ne.s32.totalorder %s366, %s367
    %p379 = scmp.eq.s32.totalorder %s37, 1
    %p380 = por %p378, %p379
    %p382 = scmp.ne.s32.totalorder %s367, %s381
    %p383 = scmp.eq.s32.totalorder %s37, 0
    %p384 = por %p382, %p383
    %s386 = sadd.s32 %s385, 1
    %p389 = scmp.eq.s32.totalorder %s31, 1
    %p390 = scmp.ne.s32.totalorder %s385, %s387
    %p391 = scmp.eq.s32.totalorder %s31, 0
    %p392 = por %p390, %p391
    %p393 = scmp.ne.s32.totalorder %s385, %s387
    %p394 = scmp.eq.s32.totalorder %s36, 1
    %p395 = por %p393, %p394
    %p396 = scmp.ne.s32.totalorder %s387, %s388
    %p397 = scmp.eq.s32.totalorder %s36, 0
    %p398 = por %p396, %p397
    %p399 = scmp.ne.s32.totalorder %s387, %s388
    %p400 = scmp.eq.s32.totalorder %s37, 1
    %p401 = por %p399, %p400
    %p403 = scmp.ne.s32.totalorder %s388, %s402
    %p404 = scmp.eq.s32.totalorder %s37, 0
    %p405 = por %p403, %p404
    %s407 = sadd.s32 %s406, 1
    %p410 = scmp.eq.s32.totalorder %s31, 1
    %p411 = scmp.ne.s32.totalorder %s406, %s408
    %p412 = scmp.eq.s32.totalorder %s31, 0
    %p413 = por %p411, %p412
    %p414 = scmp.ne.s32.totalorder %s406, %s408
    %p415 = scmp.eq.s32.totalorder %s36, 1
    %p416 = por %p414, %p415
    %p417 = scmp.ne.s32.totalorder %s408, %s409
    %p418 = scmp.eq.s32.totalorder %s36, 0
    %p419 = por %p417, %p418
    %p420 = scmp.ne.s32.totalorder %s408, %s409
    %p421 = scmp.eq.s32.totalorder %s37, 1
    %p422 = por %p420, %p421
    %p424 = scmp.ne.s32.totalorder %s409, %s423
    %p425 = scmp.eq.s32.totalorder %s37, 0
    %p426 = por %p424, %p425
    %s428 = sadd.s32 %s427, 1
    %p431 = scmp.eq.s32.totalorder %s31, 1
    %p432 = scmp.ne.s32.totalorder %s427, %s429
    %p433 = scmp.eq.s32.totalorder %s31, 0
    %p434 = por %p432, %p433
    %p435 = scmp.ne.s32.totalorder %s427, %s429
    %p436 = scmp.eq.s32.totalorder %s36, 1
    %p437 = por %p435, %p436
    %p438 = scmp.ne.s32.totalorder %s429, %s430
    %p439 = scmp.eq.s32.totalorder %s36, 0
    %p440 = por %p438, %p439
    %p441 = scmp.ne.s32.totalorder %s429, %s430
    %p442 = scmp.eq.s32.totalorder %s37, 1
    %p443 = por %p441, %p442
    %p445 = scmp.ne.s32.totalorder %s430, %s444
    %p446 = scmp.eq.s32.totalorder %s37, 0
    %p447 = por %p445, %p446
    %s449 = sadd.s32 %s448, 1
    %p452 = scmp.eq.s32.totalorder %s31, 1
    %p453 = scmp.ne.s32.totalorder %s448, %s450
    %p454 = scmp.eq.s32.totalorder %s31, 0
    %p455 = por %p453, %p454
    %p456 = scmp.ne.s32.totalorder %s448, %s450
    %p457 = scmp.eq.s32.totalorder %s36, 1
    %p458 = por %p456, %p457
    %p459 = scmp.ne.s32.totalorder %s450, %s451
    %p460 = scmp.eq.s32.totalorder %s36, 0
    %p461 = por %p459, %p460
    %p462 = scmp.ne.s32.totalorder %s450, %s451
    %p463 = scmp.eq.s32.totalorder %s37, 1
    %p464 = por %p462, %p463
    %p466 = scmp.ne.s32.totalorder %s451, %s465
    %p467 = scmp.eq.s32.totalorder %s37, 0
    %p468 = por %p466, %p467
    %s470 = sadd.s32 %s469, 1
    %p473 = scmp.eq.s32.totalorder %s31, 1
    %p474 = scmp.ne.s32.totalorder %s469, %s471
    %p475 = scmp.eq.s32.totalorder %s31, 0
    %p476 = por %p474, %p475
    %p477 = scmp.ne.s32.totalorder %s469, %s471
    %p478 = scmp.eq.s32.totalorder %s36, 1
    %p479 = por %p477, %p478
    %p480 = scmp.ne.s32.totalorder %s471, %s472
    %p481 = scmp.eq.s32.totalorder %s36, 0
    %p482 = por %p480, %p481
    %p483 = scmp.ne.s32.totalorder %s471, %s472
    %p484 = scmp.eq.s32.totalorder %s37, 1
    %p485 = por %p483, %p484
    %p487 = scmp.ne.s32.totalorder %s472, %s486
    %p488 = scmp.eq.s32.totalorder %s37, 0
    %p489 = por %p487, %p488
    %s491 = sadd.s32 %s490, 1
    %p494 = scmp.eq.s32.totalorder %s31, 1
    %p495 = scmp.ne.s32.totalorder %s490, %s492
    %p496 = scmp.eq.s32.totalorder %s31, 0
    %p497 = por %p495, %p496
    %p498 = scmp.ne.s32.totalorder %s490, %s492
    %p499 = scmp.eq.s32.totalorder %s36, 1
    %p500 = por %p498, %p499
    %p501 = scmp.ne.s32.totalorder %s492, %s493
    %p502 = scmp.eq.s32.totalorder %s36, 0
    %p503 = por %p501, %p502
    %p504 = scmp.ne.s32.totalorder %s492, %s493
    %p505 = scmp.eq.s32.totalorder %s37, 1
    %p506 = por %p504, %p505
    %p508 = scmp.ne.s32.totalorder %s493, %s507
    %p509 = scmp.eq.s32.totalorder %s37, 0
    %p510 = por %p508, %p509
    %s512 = sadd.s32 %s511, 1
    %p515 = scmp.eq.s32.totalorder %s31, 1
    %p516 = scmp.ne.s32.totalorder %s511, %s513
    %p517 = scmp.eq.s32.totalorder %s31, 0
    %p518 = por %p516, %p517
    %p519 = scmp.ne.s32.totalorder %s511, %s513
    %p520 = scmp.eq.s32.totalorder %s36, 1
    %p521 = por %p519, %p520
    %p522 = scmp.ne.s32.totalorder %s513, %s514
    %p523 = scmp.eq.s32.totalorder %s36, 0
    %p524 = por %p522, %p523
    %p525 = scmp.ne.s32.totalorder %s513, %s514
    %p526 = scmp.eq.s32.totalorder %s37, 1
    %p527 = por %p525, %p526
    %p529 = scmp.ne.s32.totalorder %s514, %s528
    %p530 = scmp.eq.s32.totalorder %s37, 0
    %p531 = por %p529, %p530
    %s532 = ssub.s32 %s31, %s38
    %p533 = scmp.eq.s32.totalorder %s532, 0
    %s535 = sadd.s32 %s534, 1
    %s536 = scalar_select %p533, %s534, %s535
    %p539 = pneg %p533
    %p540 = scmp.eq.s32.totalorder %s31, 1
    %p541 = por %p539, %p540
    %p542 = scmp.ne.s32.totalorder %s534, %s537
    %p543 = scmp.eq.s32.totalorder %s31, 0
    %p544 = por %p542, %p543
    %p545 = scmp.ne.s32.totalorder %s534, %s537
    %p546 = scmp.eq.s32.totalorder %s36, 1
    %p547 = por %p545, %p546
    %p548 = scmp.ne.s32.totalorder %s537, %s538
    %p549 = scmp.eq.s32.totalorder %s36, 0
    %p550 = por %p548, %p549
    %p551 = scmp.ne.s32.totalorder %s537, %s538
    %p552 = scmp.eq.s32.totalorder %s37, 1
    %p553 = por %p551, %p552
    %p555 = scmp.ne.s32.totalorder %s538, %s554
    %p556 = scmp.eq.s32.totalorder %s37, 0
    %p557 = por %p555, %p556
    %p558 = scmp.le.s32.totalorder 1, %s31
    %p559 = scmp.lt.s32.totalorder %s31, 3
    %p560 = pnand %p558, %p559
    %p561 = pneg %p560
    // Predicated region
    $region9: #{regression_model_forward.1} parent=5 // pred_check
      _
    $region10: #{regression_model_forward.1} parent=5 // pred_check_branch
      %563 = sbr.rel (%p560) target = $region12
    $region11: #{regression_model_forward.1} parent=5 // pred_region
      %s564 = ssub.s32 %s31, 1
      // Predicated region
      $region13: #{regression_model_forward.1} parent=11 // pred_check
        %p565 = pneg %p104
      $region14: #{regression_model_forward.1} parent=11 // pred_check_branch
        %567 = sbr.rel (%p565) target = $region16
      $region15: #{regression_model_forward.1} parent=11 // pred_region
        _
      $region16: #{regression_model_forward.1} parent=11 // pred_fallthru
        _
      // Predicated region
      $region17: #{regression_model_forward.1} parent=11 // pred_check
        %p568 = pneg %p125
      $region18: #{regression_model_forward.1} parent=11 // pred_check_branch
        %570 = sbr.rel (%p568) target = $region20
      $region19: #{regression_model_forward.1} parent=11 // pred_region
        _
      $region20: #{regression_model_forward.1} parent=11 // pred_fallthru
        _
      // Predicated region
      $region21: #{regression_model_forward.1} parent=11 // pred_check
        %p571 = pneg %p146
      $region22: #{regression_model_forward.1} parent=11 // pred_check_branch
        %573 = sbr.rel (%p571) target = $region24
      $region23: #{regression_model_forward.1} parent=11 // pred_region
        _
      $region24: #{regression_model_forward.1} parent=11 // pred_fallthru
        _
      // Predicated region
      $region25: #{regression_model_forward.1} parent=11 // pred_check
        %p574 = pneg %p167
      $region26: #{regression_model_forward.1} parent=11 // pred_check_branch
        %576 = sbr.rel (%p574) target = $region28
      $region27: #{regression_model_forward.1} parent=11 // pred_region
        _
      $region28: #{regression_model_forward.1} parent=11 // pred_fallthru
        _
      // Predicated region
      $region29: #{regression_model_forward.1} parent=11 // pred_check
        %p577 = pneg %p188
      $region30: #{regression_model_forward.1} parent=11 // pred_check_branch
        %579 = sbr.rel (%p577) target = $region32
      $region31: #{regression_model_forward.1} parent=11 // pred_region
        _
      $region32: #{regression_model_forward.1} parent=11 // pred_fallthru
        _
      // Predicated region
      $region33: #{regression_model_forward.1} parent=11 // pred_check
        %p580 = pneg %p209
      $region34: #{regression_model_forward.1} parent=11 // pred_check_branch
        %582 = sbr.rel (%p580) target = $region36
      $region35: #{regression_model_forward.1} parent=11 // pred_region
        _
      $region36: #{regression_model_forward.1} parent=11 // pred_fallthru
        _
      // Predicated region
      $region37: #{regression_model_forward.1} parent=11 // pred_check
        %p583 = pneg %p230
      $region38: #{regression_model_forward.1} parent=11 // pred_check_branch
        %585 = sbr.rel (%p583) target = $region40
      $region39: #{regression_model_forward.1} parent=11 // pred_region
        _
      $region40: #{regression_model_forward.1} parent=11 // pred_fallthru
        _
      // Predicated region
      $region41: #{regression_model_forward.1} parent=11 // pred_check
        %p586 = pneg %p251
      $region42: #{regression_model_forward.1} parent=11 // pred_check_branch
        %588 = sbr.rel (%p586) target = $region44
      $region43: #{regression_model_forward.1} parent=11 // pred_region
        _
      $region44: #{regression_model_forward.1} parent=11 // pred_fallthru
        _
      // Predicated region
      $region45: #{regression_model_forward.1} parent=11 // pred_check
        %p589 = pneg %p272
      $region46: #{regression_model_forward.1} parent=11 // pred_check_branch
        %591 = sbr.rel (%p589) target = $region48
      $region47: #{regression_model_forward.1} parent=11 // pred_region
        _
      $region48: #{regression_model_forward.1} parent=11 // pred_fallthru
        _
      // Predicated region
      $region49: #{regression_model_forward.1} parent=11 // pred_check
        %p592 = pneg %p293
      $region50: #{regression_model_forward.1} parent=11 // pred_check_branch
        %594 = sbr.rel (%p592) target = $region52
      $region51: #{regression_model_forward.1} parent=11 // pred_region
        _
      $region52: #{regression_model_forward.1} parent=11 // pred_fallthru
        _
      // Predicated region
      $region53: #{regression_model_forward.1} parent=11 // pred_check
        %p595 = pneg %p314
      $region54: #{regression_model_forward.1} parent=11 // pred_check_branch
        %597 = sbr.rel (%p595) target = $region56
      $region55: #{regression_model_forward.1} parent=11 // pred_region
        _
      $region56: #{regression_model_forward.1} parent=11 // pred_fallthru
        _
      // Predicated region
      $region57: #{regression_model_forward.1} parent=11 // pred_check
        %p598 = pneg %p335
      $region58: #{regression_model_forward.1} parent=11 // pred_check_branch
        %600 = sbr.rel (%p598) target = $region60
      $region59: #{regression_model_forward.1} parent=11 // pred_region
        _
      $region60: #{regression_model_forward.1} parent=11 // pred_fallthru
        _
      // Predicated region
      $region61: #{regression_model_forward.1} parent=11 // pred_check
        %p601 = pneg %p356
      $region62: #{regression_model_forward.1} parent=11 // pred_check_branch
        %603 = sbr.rel (%p601) target = $region64
      $region63: #{regression_model_forward.1} parent=11 // pred_region
        _
      $region64: #{regression_model_forward.1} parent=11 // pred_fallthru
        _
      // Predicated region
      $region65: #{regression_model_forward.1} parent=11 // pred_check
        %p604 = pneg %p377
      $region66: #{regression_model_forward.1} parent=11 // pred_check_branch
        %606 = sbr.rel (%p604) target = $region68
      $region67: #{regression_model_forward.1} parent=11 // pred_region
        _
      $region68: #{regression_model_forward.1} parent=11 // pred_fallthru
        _
      // Predicated region
      $region69: #{regression_model_forward.1} parent=11 // pred_check
        %p607 = pneg %p398
      $region70: #{regression_model_forward.1} parent=11 // pred_check_branch
        %609 = sbr.rel (%p607) target = $region72
      $region71: #{regression_model_forward.1} parent=11 // pred_region
        _
      $region72: #{regression_model_forward.1} parent=11 // pred_fallthru
        _
      // Predicated region
      $region73: #{regression_model_forward.1} parent=11 // pred_check
        %p610 = pneg %p419
      $region74: #{regression_model_forward.1} parent=11 // pred_check_branch
        %612 = sbr.rel (%p610) target = $region76
      $region75: #{regression_model_forward.1} parent=11 // pred_region
        _
      $region76: #{regression_model_forward.1} parent=11 // pred_fallthru
        _
      // Predicated region
      $region77: #{regression_model_forward.1} parent=11 // pred_check
        %p613 = pneg %p440
      $region78: #{regression_model_forward.1} parent=11 // pred_check_branch
        %615 = sbr.rel (%p613) target = $region80
      $region79: #{regression_model_forward.1} parent=11 // pred_region
        _
      $region80: #{regression_model_forward.1} parent=11 // pred_fallthru
        _
      // Predicated region
      $region81: #{regression_model_forward.1} parent=11 // pred_check
        %p616 = pneg %p461
      $region82: #{regression_model_forward.1} parent=11 // pred_check_branch
        %618 = sbr.rel (%p616) target = $region84
      $region83: #{regression_model_forward.1} parent=11 // pred_region
        _
      $region84: #{regression_model_forward.1} parent=11 // pred_fallthru
        _
      // Predicated region
      $region85: #{regression_model_forward.1} parent=11 // pred_check
        %p619 = pneg %p482
      $region86: #{regression_model_forward.1} parent=11 // pred_check_branch
        %621 = sbr.rel (%p619) target = $region88
      $region87: #{regression_model_forward.1} parent=11 // pred_region
        _
      $region88: #{regression_model_forward.1} parent=11 // pred_fallthru
        _
      // Predicated region
      $region89: #{regression_model_forward.1} parent=11 // pred_check
        %p622 = pneg %p503
      $region90: #{regression_model_forward.1} parent=11 // pred_check_branch
        %624 = sbr.rel (%p622) target = $region92
      $region91: #{regression_model_forward.1} parent=11 // pred_region
        _
      $region92: #{regression_model_forward.1} parent=11 // pred_fallthru
        _
      // Predicated region
      $region93: #{regression_model_forward.1} parent=11 // pred_check
        %p625 = pneg %p524
      $region94: #{regression_model_forward.1} parent=11 // pred_check_branch
        %627 = sbr.rel (%p625) target = $region96
      $region95: #{regression_model_forward.1} parent=11 // pred_region
        _
      $region96: #{regression_model_forward.1} parent=11 // pred_fallthru
        _
    $region12: #{regression_model_forward.1} parent=5 // pred_fallthru
      _
    %p628 = scmp.lt.s32.totalorder %s31, 2
    // Predicated region
    $region97: #{regression_model_forward.1} parent=5 // pred_check
      %p629 = pneg %p628
    $region98: #{regression_model_forward.1} parent=5 // pred_check_branch
      %631 = sbr.rel (%p629) target = $region100
    $region99: #{regression_model_forward.1} parent=5 // pred_region
      // Predicated region
      $region101: #{regression_model_forward.1} parent=99 // pred_check
        %p632 = pneg %p51
      $region102: #{regression_model_forward.1} parent=99 // pred_check_branch
        %634 = sbr.rel (%p632) target = $region104
      $region103: #{regression_model_forward.1} parent=99 // pred_region
        %p635 = scmp.lt.s32.totalorder %s31, 1
        %s636 = scalar_select %p635, %s31, 1
        %s637 = smul.addr %s636, 8
        %s638 = scalar_lea.vmem %s0, %s637
      $region104: #{regression_model_forward.1} parent=99 // pred_fallthru
        _
      // Predicated region
      $region105: #{regression_model_forward.1} parent=99 // pred_check
        %p639 = pneg %p77
      $region106: #{regression_model_forward.1} parent=99 // pred_check_branch
        %641 = sbr.rel (%p639) target = $region108
      $region107: #{regression_model_forward.1} parent=99 // pred_region
        %p642 = scmp.lt.s32.totalorder %s31, 1
        %s643 = scalar_select %p642, %s31, 1
        %s644 = scalar_lea.vmem %s1, %s643
      $region108: #{regression_model_forward.1} parent=99 // pred_fallthru
        _
    $region100: #{regression_model_forward.1} parent=5 // pred_fallthru
      _
    %p645 = scmp.le.s32.totalorder 1, %s31
    %p646 = scmp.lt.s32.totalorder %s31, 3
    %p647 = pnand %p645, %p646
    %p648 = pneg %p647
    // Predicated region
    $region109: #{regression_model_forward.1} parent=5 // pred_check
      _
    $region110: #{regression_model_forward.1} parent=5 // pred_check_branch
      %650 = sbr.rel (%p647) target = $region112
    $region111: #{regression_model_forward.1} parent=5 // pred_region
      %s651 = ssub.s32 %s31, 1
      %p652 = scmp.lt.s32.totalorder %s36, 1
      %s653 = scalar_select %p652, %s36, 1
      %s654 = smul.addr %s653, 8
      %s655 = scalar_lea.vmem %s0, %s654
      %p656 = pneg %p57
      %p657 = pneg %p54
      %p658 = scmp.lt.s32.totalorder %s36, 1
      %s659 = scalar_select %p658, %s36, 1
      %s660 = scalar_lea.vmem %s1, %s659
      %p661 = pneg %p83
      %p662 = pneg %p80
      %p663 = pneg %p104
      %p664 = pneg %p101
      %p665 = pneg %p125
      %p666 = pneg %p122
      %p667 = pneg %p146
      %p668 = pneg %p143
      %p669 = pneg %p167
      %p670 = pneg %p164
      %p671 = pneg %p188
      %p672 = pneg %p185
      %p673 = pneg %p209
      %p674 = pneg %p206
      %p675 = pneg %p230
      %p676 = pneg %p227
      %p677 = pneg %p251
      %p678 = pneg %p248
      %p679 = pneg %p272
      %p680 = pneg %p269
      %p681 = pneg %p293
      %p682 = pneg %p290
      %p683 = pneg %p314
      %p684 = pneg %p311
      %p685 = pneg %p335
      %p686 = pneg %p332
      %p687 = pneg %p356
      %p688 = pneg %p353
      %p689 = pneg %p377
      %p690 = pneg %p374
      %p691 = pneg %p398
      %p692 = pneg %p395
      %p693 = pneg %p419
      %p694 = pneg %p416
      %p695 = pneg %p440
      %p696 = pneg %p437
      %p697 = pneg %p461
      %p698 = pneg %p458
      %p699 = pneg %p482
      %p700 = pneg %p479
      %p701 = pneg %p503
      %p702 = pneg %p500
      %p703 = pneg %p524
      %p704 = pneg %p521
      %p705 = pneg %p550
      %p706 = pneg %p547
      %p707 = scmp.lt.s32.totalorder %s36, 1
      %s708 = scalar_select %p707, %s36, 1
      %s709 = scalar_lea.vmem %s23, %s708
      %p710 = scmp.lt.s32.totalorder %s36, 1
      %s711 = scalar_select %p710, %s36, 1
      %s712 = smul.addr %s711, 8
      %s713 = scalar_lea.vmem %s0, %s712
      %p714 = scmp.lt.s32.totalorder %s36, 1
      %s715 = scalar_select %p714, %s36, 1
      %s716 = scalar_lea.vmem %s1, %s715
      %p717 = scmp.lt.s32.totalorder %s36, 1
      %s718 = scalar_select %p717, %s36, 1
      %s719 = scalar_lea.vmem %s23, %s718
      %v720 = vld [vmem:[%s713] sm:$0xff]
      %vm721 = vcmp.ne.s32.totalorder %v720, 1
      %v722 = vsel %vm721, 1, 0
      %v723 = vcvt.s32.f32 %v722
      %v724 = vlaneseq
      %v725 = vand.u32 %v724, 127
      %v726 = vlaneseq
      %v727 = vshrl.u32 %v726, 7
      %vm728 = vcmp.le.s32.totalorder %v725, %v727
      %v729 = vsel %vm728, 1, 0
      %v730 = vcvt.s32.f32 %v729
      %vm731 = vcmask 64512
      %v733 = vsel %vm731, %v730, 0
      %735 = vmatprep.subr.mxu0 0.0
      %736 = vmatpush1.msra.mxu0 %v723
      %737 = vmatprep.subr.mxu0 0.0
      %738 = vmatpush1.msra.mxu0 0.0
      %739 = vmatprep.subr.mxu0 0.0
      %740 = vmatpush1.msra.mxu0 0.0
      %741 = vmatprep.subr.mxu0 0.0
      %742 = vmatpush1.msra.mxu0 0.0
      %743 = vmatprep.subr.mxu0 0.0
      %744 = vmatpush1.msra.mxu0 0.0
      %745 = vmatprep.subr.mxu0 0.0
      %746 = vmatpush1.msra.mxu0 0.0
      %747 = vmatprep.subr.mxu0 0.0
      %748 = vmatpush1.msra.mxu0 0.0
      %749 = vmatprep.subr.mxu0 0.0
      %750 = vmatpush1.msra.mxu0 0.0
      %751 = vmatprep.subr.mxu0 0.0
      %752 = vmatpush1.msra.mxu0 0.0
      %753 = vmatprep.subr.mxu0 0.0
      %754 = vmatpush1.msra.mxu0 0.0
      %755 = vmatprep.subr.mxu0 0.0
      %756 = vmatpush1.msra.mxu0 0.0
      %757 = vmatprep.subr.mxu0 0.0
      %758 = vmatpush1.msra.mxu0 0.0
      %759 = vmatprep.subr.mxu0 0.0
      %760 = vmatpush1.msra.mxu0 0.0
      %761 = vmatprep.subr.mxu0 0.0
      %762 = vmatpush1.msra.mxu0 0.0
      %763 = vmatprep.subr.mxu0 0.0
      %764 = vmatpush1.msra.mxu0 0.0
      %765 = vmatprep.subr.mxu0 0.0
      %766 = vmatpush1.msra.mxu0 0.0
      %767 = vmatprep.subr.mxu0 0.0
      %768 = vmatpush1.msra.mxu0 0.0
      %769 = vmatprep.subr.mxu0 0.0
      %770 = vmatpush1.msra.mxu0 0.0
      %771 = vmatprep.subr.mxu0 0.0
      %772 = vmatpush1.msra.mxu0 0.0
      %773 = vmatprep.subr.mxu0 0.0
      %774 = vmatpush1.msra.mxu0 0.0
      %775 = vmatprep.subr.mxu0 0.0
      %776 = vmatpush1.msra.mxu0 0.0
      %777 = vmatprep.subr.mxu0 0.0
      %778 = vmatpush1.msra.mxu0 0.0
      %779 = vmatprep.subr.mxu0 0.0
      %780 = vmatpush1.msra.mxu0 0.0
      %781 = vmatprep.subr.mxu0 0.0
      %782 = vmatpush1.msra.mxu0 0.0
      %783 = vmatprep.subr.mxu0 0.0
      %784 = vmatpush1.msra.mxu0 0.0
      %785 = vmatprep.subr.mxu0 0.0
      %786 = vmatpush1.msra.mxu0 0.0
      %787 = vmatprep.subr.mxu0 0.0
      %788 = vmatpush1.msra.mxu0 0.0
      %789 = vmatprep.subr.mxu0 0.0
      %790 = vmatpush1.msra.mxu0 0.0
      %791 = vmatprep.subr.mxu0 0.0
      %792 = vmatpush1.msra.mxu0 0.0
      %793 = vmatprep.subr.mxu0 0.0
      %794 = vmatpush1.msra.mxu0 0.0
      %795 = vmatprep.subr.mxu0 0.0
      %796 = vmatpush1.msra.mxu0 0.0
      %797 = vmatprep.subr.mxu0 0.0
      %798 = vmatpush1.msra.mxu0 0.0
      %799 = vmatprep.mubr.f32.mxu0 0.0
      %800 = vmatmul.mubr.f32.gmra.mrb[0].mxu0 %v733
      %v801 = vpop.f32.mrb[0].mxu0
      %v802 = vadd.f32 0.0, %v801
      %v803 = vpop.f32.mrb[0].mxu0
      %804 = vdwg.mxu0
      %v805 = vmul.f32 %v802, %v723
      %v806 = vadd.f32 %v805, 1.0
      %807 = vset.pattern.permute.xlu0 0
      %808 = vperm.xlu0 %807, %v720
      %v809 = vpop.permute.xlu0 %808
      %vm810 = vcmp.eq.s32.totalorder %v809, %v725
      %v811 = vsel %vm810, 1, 0
      %v812 = vcvt.s32.f32 %v811
      %v813 = vcvt.s32.f32 %v725
      %815 = vset.pattern.permute.xlu0 0
      %816 = vperm.xlu0 %815, %v806
      %v817 = vpop.permute.xlu0 %816
      %vm819 = vcmp.eq.f32.partialorder %v817, %v813
      %v820 = vsel %vm819, 1, 0
      %v821 = vcvt.s32.f32 %v820
      %v822 = vld [vmem:[%s2] sm:$0xff]
      %v823 = vld [vmem:[%s2 + $0x8] sm:$0xff]
      %v824 = vld [vmem:[%s2 + $0x10] sm:$0xff]
      %v825 = vld [vmem:[%s2 + $0x18] sm:$0xff]
      %v826 = vld [vmem:[%s2 + $0x20] sm:$0xff]
      %v827 = vld [vmem:[%s2 + $0x28] sm:$0xff]
      %v828 = vld [vmem:[%s2 + $0x30] sm:$0x3]
      %v829 = vld [vmem:[%s3] sm:$0xff]
      %v830 = vld [vmem:[%s3 + $0x8] sm:$0xff]
      %v831 = vld [vmem:[%s3 + $0x10] sm:$0xff]
      %v832 = vld [vmem:[%s3 + $0x18] sm:$0xff]
      %v833 = vld [vmem:[%s3 + $0x20] sm:$0xff]
      %v834 = vld [vmem:[%s3 + $0x28] sm:$0xff]
      %v835 = vld [vmem:[%s3 + $0x30] sm:$0xff]
      %v836 = vld [vmem:[%s3 + $0x38] sm:$0xff]
      %vm837 = vcmask 523264
      %v839 = vsel %vm837, %v821, 0
      %841 = vmatprep.subr.mxu0 0.0
      %842 = vmatpush1.msra.mxu0 %v829
      %843 = vmatprep.subr.mxu0 0.0
      %844 = vmatpush1.msra.mxu0 %v830
      %845 = vmatprep.subr.mxu0 0.0
      %846 = vmatpush1.msra.mxu0 %v831
      %847 = vmatprep.subr.mxu0 0.0
      %848 = vmatpush1.msra.mxu0 %v832
      %849 = vmatprep.subr.mxu0 0.0
      %850 = vmatpush1.msra.mxu0 %v833
      %851 = vmatprep.subr.mxu0 0.0
      %852 = vmatpush1.msra.mxu0 %v834
      %853 = vmatprep.subr.mxu0 0.0
      %854 = vmatpush1.msra.mxu0 %v835
      %855 = vmatprep.subr.mxu0 0.0
      %856 = vmatpush1.msra.mxu0 %v836
      %857 = vmatprep.subr.mxu0 0.0
      %858 = vmatpush1.msra.mxu0 0.0
      %859 = vmatprep.subr.mxu0 0.0
      %860 = vmatpush1.msra.mxu0 0.0
      %861 = vmatprep.subr.mxu0 0.0
      %862 = vmatpush1.msra.mxu0 0.0
      %863 = vmatprep.subr.mxu0 0.0
      %864 = vmatpush1.msra.mxu0 0.0
      %865 = vmatprep.subr.mxu0 0.0
      %866 = vmatpush1.msra.mxu0 0.0
      %867 = vmatprep.subr.mxu0 0.0
      %868 = vmatpush1.msra.mxu0 0.0
      %869 = vmatprep.subr.mxu0 0.0
      %870 = vmatpush1.msra.mxu0 0.0
      %871 = vmatprep.subr.mxu0 0.0
      %872 = vmatpush1.msra.mxu0 0.0
      %873 = vmatprep.subr.mxu0 0.0
      %874 = vmatpush1.msra.mxu0 0.0
      %875 = vmatprep.subr.mxu0 0.0
      %876 = vmatpush1.msra.mxu0 0.0
      %877 = vmatprep.subr.mxu0 0.0
      %878 = vmatpush1.msra.mxu0 0.0
      %879 = vmatprep.subr.mxu0 0.0
      %880 = vmatpush1.msra.mxu0 0.0
      %881 = vmatprep.subr.mxu0 0.0
      %882 = vmatpush1.msra.mxu0 0.0
      %883 = vmatprep.subr.mxu0 0.0
      %884 = vmatpush1.msra.mxu0 0.0
      %885 = vmatprep.subr.mxu0 0.0
      %886 = vmatpush1.msra.mxu0 0.0
      %887 = vmatprep.subr.mxu0 0.0
      %888 = vmatpush1.msra.mxu0 0.0
      %889 = vmatprep.subr.mxu0 0.0
      %890 = vmatpush1.msra.mxu0 0.0
      %891 = vmatprep.subr.mxu0 0.0
      %892 = vmatpush1.msra.mxu0 0.0
      %893 = vmatprep.subr.mxu0 0.0
      %894 = vmatpush1.msra.mxu0 0.0
      %895 = vmatprep.subr.mxu0 0.0
      %896 = vmatpush1.msra.mxu0 0.0
      %897 = vmatprep.subr.mxu0 0.0
      %898 = vmatpush1.msra.mxu0 0.0
      %899 = vmatprep.subr.mxu0 0.0
      %900 = vmatpush1.msra.mxu0 0.0
      %901 = vmatprep.subr.mxu0 0.0
      %902 = vmatpush1.msra.mxu0 0.0
      %903 = vmatprep.subr.mxu0 0.0
      %904 = vmatpush1.msra.mxu0 0.0
      %905 = vmatprep.mubr.f32.mxu0 0.0
      %906 = vmatmul.mubr.f32.gmra.mrb[0].mxu0 %v839
      %v907 = vpop.f32.mrb[0].mxu0
      %v908 = vadd.f32 0.0, %v907
      %v909 = vpop.f32.mrb[0].mxu0
      %910 = vdwg.mxu0
      %vm911 = vcmask 408576
      %v913 = vsel %vm911, %v812, 0
      %vm915 = vcmask 1041408
      %v917 = vsel %vm915, %v828, 0
      %919 = vmatprep.subr.mxu0 0.0
      %920 = vmatpush1.msra.mxu0 %v822
      %921 = vmatprep.subr.mxu0 0.0
      %922 = vmatpush1.msra.mxu0 %v823
      %923 = vmatprep.subr.mxu0 0.0
      %924 = vmatpush1.msra.mxu0 %v824
      %925 = vmatprep.subr.mxu0 0.0
      %926 = vmatpush1.msra.mxu0 %v825
      %927 = vmatprep.subr.mxu0 0.0
      %928 = vmatpush1.msra.mxu0 %v826
      %929 = vmatprep.subr.mxu0 0.0
      %930 = vmatpush1.msra.mxu0 %v827
      %931 = vmatprep.subr.mxu0 0.0
      %932 = vmatpush1.msra.mxu0 %v917
      %933 = vmatprep.subr.mxu0 0.0
      %934 = vmatpush1.msra.mxu0 0.0
      %935 = vmatprep.subr.mxu0 0.0
      %936 = vmatpush1.msra.mxu0 0.0
      %937 = vmatprep.subr.mxu0 0.0
      %938 = vmatpush1.msra.mxu0 0.0
      %939 = vmatprep.subr.mxu0 0.0
      %940 = vmatpush1.msra.mxu0 0.0
      %941 = vmatprep.subr.mxu0 0.0
      %942 = vmatpush1.msra.mxu0 0.0
      %943 = vmatprep.subr.mxu0 0.0
      %944 = vmatpush1.msra.mxu0 0.0
      %945 = vmatprep.subr.mxu0 0.0
      %946 = vmatpush1.msra.mxu0 0.0
      %947 = vmatprep.subr.mxu0 0.0
      %948 = vmatpush1.msra.mxu0 0.0
      %949 = vmatprep.subr.mxu0 0.0
      %950 = vmatpush1.msra.mxu0 0.0
      %951 = vmatprep.subr.mxu0 0.0
      %952 = vmatpush1.msra.mxu0 0.0
      %953 = vmatprep.subr.mxu0 0.0
      %954 = vmatpush1.msra.mxu0 0.0
      %955 = vmatprep.subr.mxu0 0.0
      %956 = vmatpush1.msra.mxu0 0.0
      %957 = vmatprep.subr.mxu0 0.0
      %958 = vmatpush1.msra.mxu0 0.0
      %959 = vmatprep.subr.mxu0 0.0
      %960 = vmatpush1.msra.mxu0 0.0
      %961 = vmatprep.subr.mxu0 0.0
      %962 = vmatpush1.msra.mxu0 0.0
      %963 = vmatprep.subr.mxu0 0.0
      %964 = vmatpush1.msra.mxu0 0.0
      %965 = vmatprep.subr.mxu0 0.0
      %966 = vmatpush1.msra.mxu0 0.0
      %967 = vmatprep.subr.mxu0 0.0
      %968 = vmatpush1.msra.mxu0 0.0
      %969 = vmatprep.subr.mxu0 0.0
      %970 = vmatpush1.msra.mxu0 0.0
      %971 = vmatprep.subr.mxu0 0.0
      %972 = vmatpush1.msra.mxu0 0.0
      %973 = vmatprep.subr.mxu0 0.0
      %974 = vmatpush1.msra.mxu0 0.0
      %975 = vmatprep.subr.mxu0 0.0
      %976 = vmatpush1.msra.mxu0 0.0
      %977 = vmatprep.subr.mxu0 0.0
      %978 = vmatpush1.msra.mxu0 0.0
      %979 = vmatprep.subr.mxu0 0.0
      %980 = vmatpush1.msra.mxu0 0.0
      %981 = vmatprep.subr.mxu0 0.0
      %982 = vmatpush1.msra.mxu0 0.0
      %983 = vmatprep.mubr.f32.mxu0 0.0
      %984 = vmatmul.mubr.f32.gmra.mrb[0].mxu0 %v913
      %v985 = vpop.f32.mrb[0].mxu0
      %v986 = vadd.f32 %v908, %v985
      %v987 = vpop.f32.mrb[0].mxu0
      %988 = vdwg.mxu0
      %v989 = vld [vmem:[%s4] sm:$0x1]
      %v991 = vlaneseq
      %v992 = vshrl.u32 %v991, 7
      %v993 = vsub.s32 0, %v992
      %v994 = vrot.slane %v989, %v993
      %v996 = vadd.f32 %v986, %v994
      %v997 = vld [vmem:[%s5] sm:$0x1]
      %v998 = vld [vmem:[%s6] sm:$0x1]
      %vm999 = vcmask 261120
      %v1000 = vsel %vm999, %v996, 0.0
      %1001 = vadd.xlane.f32.xlu0 %v1000
      %v1002 = vpop.xlane.xlu0 %1001
      %v1003 = vrcp.pop 32.0
      %v1004 = vmul.f32 %v1002, %v1003
      %v1005 = vmul.f32 %v996, %v996
      %v1006 = vsel %vm999, %v1005, 0.0
      %1007 = vadd.xlane.f32.xlu0 %v1006
      %v1008 = vpop.xlane.xlu0 %1007
      %v1009 = vmul.f32 %v1008, %v1003
      %v1010 = vmul.f32 %v1004, %v1004
      %v1011 = vsub.f32 %v1009, %v1010
      %v1012 = vsub.f32 %v996, %v1004
      %v1013 = vadd.f32 %v1011, 1e-05
      %v1014 = vrsqrt.pop %v1013
      %v1015 = vmul.f32 %v1012, %v1014
      %v1017 = vlaneseq
      %v1018 = vshrl.u32 %v1017, 7
      %v1019 = vsub.s32 0, %v1018
      %v1020 = vrot.slane %v997, %v1019
      %v1022 = vmul.f32 %v1015, %v1020
      %v1024 = vlaneseq
      %v1025 = vshrl.u32 %v1024, 7
      %v1026 = vsub.s32 0, %v1025
      %v1027 = vrot.slane %v998, %v1026
      %v1029 = vadd.f32 %v1022, %v1027
      %v1030 = vld [vmem:[%s716] sm:$0x1]
      %v1031 = vsub.f32 1.0, %v1030
      %v1032 = vmul.f32 %v1031, -10000.0
      %v1033 = vld [vmem:[%s7] sm:$0xff]
      %v1034 = vld [vmem:[%s7 + $0x8] sm:$0xff]
      %v1035 = vld [vmem:[%s7 + $0x10] sm:$0xff]
      %v1036 = vld [vmem:[%s7 + $0x18] sm:$0xff]
      %v1037 = vld [vmem:[%s8] sm:$0x1]
      %v1039 = vlaneseq
      %v1040 = vshrl.u32 %v1039, 7
      %v1041 = vsub.s32 0, %v1040
      %v1042 = vrot.slane %v1037, %v1041
      %v1045 = vsel %vm999, %v1029, 0
      %1047 = vmatprep.subr.mxu0 0.0
      %1048 = vmatpush1.msra.mxu0 %v1033
      %1049 = vmatprep.subr.mxu0 0.0
      %1050 = vmatpush1.msra.mxu0 %v1034
      %1051 = vmatprep.subr.mxu0 0.0
      %1052 = vmatpush1.msra.mxu0 %v1035
      %1053 = vmatprep.subr.mxu0 0.0
      %1054 = vmatpush1.msra.mxu0 %v1036
      %1055 = vmatprep.subr.mxu0 0.0
      %1056 = vmatpush1.msra.mxu0 0.0
      %1057 = vmatprep.subr.mxu0 0.0
      %1058 = vmatpush1.msra.mxu0 0.0
      %1059 = vmatprep.subr.mxu0 0.0
      %1060 = vmatpush1.msra.mxu0 0.0
      %1061 = vmatprep.subr.mxu0 0.0
      %1062 = vmatpush1.msra.mxu0 0.0
      %1063 = vmatprep.subr.mxu0 0.0
      %1064 = vmatpush1.msra.mxu0 0.0
      %1065 = vmatprep.subr.mxu0 0.0
      %1066 = vmatpush1.msra.mxu0 0.0
      %1067 = vmatprep.subr.mxu0 0.0
      %1068 = vmatpush1.msra.mxu0 0.0
      %1069 = vmatprep.subr.mxu0 0.0
      %1070 = vmatpush1.msra.mxu0 0.0
      %1071 = vmatprep.subr.mxu0 0.0
      %1072 = vmatpush1.msra.mxu0 0.0
      %1073 = vmatprep.subr.mxu0 0.0
      %1074 = vmatpush1.msra.mxu0 0.0
      %1075 = vmatprep.subr.mxu0 0.0
      %1076 = vmatpush1.msra.mxu0 0.0
      %1077 = vmatprep.subr.mxu0 0.0
      %1078 = vmatpush1.msra.mxu0 0.0
      %1079 = vmatprep.subr.mxu0 0.0
      %1080 = vmatpush1.msra.mxu0 0.0
      %1081 = vmatprep.subr.mxu0 0.0
      %1082 = vmatpush1.msra.mxu0 0.0
      %1083 = vmatprep.subr.mxu0 0.0
      %1084 = vmatpush1.msra.mxu0 0.0
      %1085 = vmatprep.subr.mxu0 0.0
      %1086 = vmatpush1.msra.mxu0 0.0
      %1087 = vmatprep.subr.mxu0 0.0
      %1088 = vmatpush1.msra.mxu0 0.0
      %1089 = vmatprep.subr.mxu0 0.0
      %1090 = vmatpush1.msra.mxu0 0.0
      %1091 = vmatprep.subr.mxu0 0.0
      %1092 = vmatpush1.msra.mxu0 0.0
      %1093 = vmatprep.subr.mxu0 0.0
      %1094 = vmatpush1.msra.mxu0 0.0
      %1095 = vmatprep.subr.mxu0 0.0
      %1096 = vmatpush1.msra.mxu0 0.0
      %1097 = vmatprep.subr.mxu0 0.0
      %1098 = vmatpush1.msra.mxu0 0.0
      %1099 = vmatprep.subr.mxu0 0.0
      %1100 = vmatpush1.msra.mxu0 0.0
      %1101 = vmatprep.subr.mxu0 0.0
      %1102 = vmatpush1.msra.mxu0 0.0
      %1103 = vmatprep.subr.mxu0 0.0
      %1104 = vmatpush1.msra.mxu0 0.0
      %1105 = vmatprep.subr.mxu0 0.0
      %1106 = vmatpush1.msra.mxu0 0.0
      %1107 = vmatprep.subr.mxu0 0.0
      %1108 = vmatpush1.msra.mxu0 0.0
      %1109 = vmatprep.subr.mxu0 0.0
      %1110 = vmatpush1.msra.mxu0 0.0
      %1111 = vmatprep.mubr.f32.mxu0 0.0
      %1112 = vmatmul.mubr.f32.gmra.mrb[0].mxu0 %v1045
      %v1113 = vpop.f32.mrb[0].mxu0
      %v1114 = vadd.f32 %v1042, %v1113
      %v1115 = vpop.f32.mrb[0].mxu0
      %1116 = vdwg.mxu0
      %1118 = vrot.lane.b32.xlu0 %v1114, 96
      %v1119 = vpop.permute.xlu0 %1118
      %v1120 = vsel %vm731, %v1114, 0
      %v1122 = vsel %vm731, %v1119, 0
      %1124 = vmatprep.subr.mxu0 0.0
      %1125 = vmatpush1.xpose.msra.mxu0 %v1122
      %1126 = vmatprep.subr.mxu0 0.0
      %1127 = vmatpush1.xpose.msra.mxu0 0.0
      %1128 = vmatprep.subr.mxu0 0.0
      %1129 = vmatpush1.xpose.msra.mxu0 0.0
      %1130 = vmatprep.subr.mxu0 0.0
      %1131 = vmatpush1.xpose.msra.mxu0 0.0
      %1132 = vmatprep.subr.mxu0 0.0
      %1133 = vmatpush1.xpose.msra.mxu0 0.0
      %1134 = vmatprep.subr.mxu0 0.0
      %1135 = vmatpush1.xpose.msra.mxu0 0.0
      %1136 = vmatprep.subr.mxu0 0.0
      %1137 = vmatpush1.xpose.msra.mxu0 0.0
      %1138 = vmatprep.subr.mxu0 0.0
      %1139 = vmatpush1.xpose.msra.mxu0 0.0
      %1140 = vmatprep.subr.mxu0 0.0
      %1141 = vmatpush1.xpose.msra.mxu0 0.0
      %1142 = vmatprep.subr.mxu0 0.0
      %1143 = vmatpush1.xpose.msra.mxu0 0.0
      %1144 = vmatprep.subr.mxu0 0.0
      %1145 = vmatpush1.xpose.msra.mxu0 0.0
      %1146 = vmatprep.subr.mxu0 0.0
      %1147 = vmatpush1.xpose.msra.mxu0 0.0
      %1148 = vmatprep.subr.mxu0 0.0
      %1149 = vmatpush1.xpose.msra.mxu0 0.0
      %1150 = vmatprep.subr.mxu0 0.0
      %1151 = vmatpush1.xpose.msra.mxu0 0.0
      %1152 = vmatprep.subr.mxu0 0.0
      %1153 = vmatpush1.xpose.msra.mxu0 0.0
      %1154 = vmatprep.subr.mxu0 0.0
      %1155 = vmatpush1.xpose.msra.mxu0 0.0
      %1156 = vmatprep.subr.mxu0 0.0
      %1157 = vmatpush1.xpose.msra.mxu0 0.0
      %1158 = vmatprep.subr.mxu0 0.0
      %1159 = vmatpush1.xpose.msra.mxu0 0.0
      %1160 = vmatprep.subr.mxu0 0.0
      %1161 = vmatpush1.xpose.msra.mxu0 0.0
      %1162 = vmatprep.subr.mxu0 0.0
      %1163 = vmatpush1.xpose.msra.mxu0 0.0
      %1164 = vmatprep.subr.mxu0 0.0
      %1165 = vmatpush1.xpose.msra.mxu0 0.0
      %1166 = vmatprep.subr.mxu0 0.0
      %1167 = vmatpush1.xpose.msra.mxu0 0.0
      %1168 = vmatprep.subr.mxu0 0.0
      %1169 = vmatpush1.xpose.msra.mxu0 0.0
      %1170 = vmatprep.subr.mxu0 0.0
      %1171 = vmatpush1.xpose.msra.mxu0 0.0
      %1172 = vmatprep.subr.mxu0 0.0
      %1173 = vmatpush1.xpose.msra.mxu0 0.0
      %1174 = vmatprep.subr.mxu0 0.0
      %1175 = vmatpush1.xpose.msra.mxu0 0.0
      %1176 = vmatprep.subr.mxu0 0.0
      %1177 = vmatpush1.xpose.msra.mxu0 0.0
      %1178 = vmatprep.subr.mxu0 0.0
      %1179 = vmatpush1.xpose.msra.mxu0 0.0
      %1180 = vmatprep.subr.mxu0 0.0
      %1181 = vmatpush1.xpose.msra.mxu0 0.0
      %1182 = vmatprep.subr.mxu0 0.0
      %1183 = vmatpush1.xpose.msra.mxu0 0.0
      %1184 = vmatprep.subr.mxu0 0.0
      %1185 = vmatpush1.xpose.msra.mxu0 0.0
      %1186 = vmatprep.subr.mxu0 0.0
      %1187 = vmatpush1.xpose.msra.mxu0 0.0
      %1188 = vmatprep.mubr.f32.mxu0 0.0
      %1189 = vmatmul.mubr.f32.gmra.mrb[0].mxu0 %v1120
      %v1190 = vpop.f32.mrb[0].mxu0
      %v1191 = vadd.f32 0.0, %v1190
      %v1192 = vpop.f32.mrb[0].mxu0
      %1193 = vdwg.mxu0
      %v1194 = vmul.f32 %v1191, 0.35355338
      %v1196 = vlaneseq
      %v1197 = vshrl.u32 %v1196, 7
      %v1198 = vsub.s32 0, %v1197
      %v1199 = vrot.slane %v1032, %v1198
      %v1201 = vadd.f32 %v1194, %v1199
      %v1202 = vsel %vm731, %v1201, -inf
      %1203 = vmax.xlane.f32.xlu0 %v1202
      %v1204 = vpop.xlane.xlu0 %1203
      %v1205 = vsub.f32 %v1201, %v1204
      %v1206 = vmul.f32 %v1205, 1.442695
      %v1207 = vpow.pop %v1206
      %v1208 = vsel %vm731, %v1207, 0.0
      %1209 = vadd.xlane.f32.xlu0 %v1208
      %v1210 = vpop.xlane.xlu0 %1209
      %v1211 = vrcp.pop %v1210
      %v1212 = vmul.f32 %v1207, %v1211
      %1213 = vrot.lane.b32.xlu0 %v1114, 64
      %v1214 = vpop.permute.xlu0 %1213
      %v1217 = vsel %vm731, %v1212, 0
      %1219 = vmatprep.subr.mxu0 0.0
      %1220 = vmatpush1.msra.mxu0 %v1214
      %1221 = vmatprep.subr.mxu0 0.0
      %1222 = vmatpush1.msra.mxu0 0.0
      %1223 = vmatprep.subr.mxu0 0.0
      %1224 = vmatpush1.msra.mxu0 0.0
      %1225 = vmatprep.subr.mxu0 0.0
      %1226 = vmatpush1.msra.mxu0 0.0
      %1227 = vmatprep.subr.mxu0 0.0
      %1228 = vmatpush1.msra.mxu0 0.0
      %1229 = vmatprep.subr.mxu0 0.0
      %1230 = vmatpush1.msra.mxu0 0.0
      %1231 = vmatprep.subr.mxu0 0.0
      %1232 = vmatpush1.msra.mxu0 0.0
      %1233 = vmatprep.subr.mxu0 0.0
      %1234 = vmatpush1.msra.mxu0 0.0
      %1235 = vmatprep.subr.mxu0 0.0
      %1236 = vmatpush1.msra.mxu0 0.0
      %1237 = vmatprep.subr.mxu0 0.0
      %1238 = vmatpush1.msra.mxu0 0.0
      %1239 = vmatprep.subr.mxu0 0.0
      %1240 = vmatpush1.msra.mxu0 0.0
      %1241 = vmatprep.subr.mxu0 0.0
      %1242 = vmatpush1.msra.mxu0 0.0
      %1243 = vmatprep.subr.mxu0 0.0
      %1244 = vmatpush1.msra.mxu0 0.0
      %1245 = vmatprep.subr.mxu0 0.0
      %1246 = vmatpush1.msra.mxu0 0.0
      %1247 = vmatprep.subr.mxu0 0.0
      %1248 = vmatpush1.msra.mxu0 0.0
      %1249 = vmatprep.subr.mxu0 0.0
      %1250 = vmatpush1.msra.mxu0 0.0
      %1251 = vmatprep.subr.mxu0 0.0
      %1252 = vmatpush1.msra.mxu0 0.0
      %1253 = vmatprep.subr.mxu0 0.0
      %1254 = vmatpush1.msra.mxu0 0.0
      %1255 = vmatprep.subr.mxu0 0.0
      %1256 = vmatpush1.msra.mxu0 0.0
      %1257 = vmatprep.subr.mxu0 0.0
      %1258 = vmatpush1.msra.mxu0 0.0
      %1259 = vmatprep.subr.mxu0 0.0
      %1260 = vmatpush1.msra.mxu0 0.0
      %1261 = vmatprep.subr.mxu0 0.0
      %1262 = vmatpush1.msra.mxu0 0.0
      %1263 = vmatprep.subr.mxu0 0.0
      %1264 = vmatpush1.msra.mxu0 0.0
      %1265 = vmatprep.subr.mxu0 0.0
      %1266 = vmatpush1.msra.mxu0 0.0
      %1267 = vmatprep.subr.mxu0 0.0
      %1268 = vmatpush1.msra.mxu0 0.0
      %1269 = vmatprep.subr.mxu0 0.0
      %1270 = vmatpush1.msra.mxu0 0.0
      %1271 = vmatprep.subr.mxu0 0.0
      %1272 = vmatpush1.msra.mxu0 0.0
      %1273 = vmatprep.subr.mxu0 0.0
      %1274 = vmatpush1.msra.mxu0 0.0
      %1275 = vmatprep.subr.mxu0 0.0
      %1276 = vmatpush1.msra.mxu0 0.0
      %1277 = vmatprep.subr.mxu0 0.0
      %1278 = vmatpush1.msra.mxu0 0.0
      %1279 = vmatprep.subr.mxu0 0.0
      %1280 = vmatpush1.msra.mxu0 0.0
      %1281 = vmatprep.subr.mxu0 0.0
      %1282 = vmatpush1.msra.mxu0 0.0
      %1283 = vmatprep.mubr.f32.mxu0 0.0
      %1284 = vmatmul.mubr.f32.gmra.mrb[0].mxu0 %v1217
      %v1285 = vpop.f32.mrb[0].mxu0
      %v1286 = vadd.f32 0.0, %v1285
      %v1287 = vpop.f32.mrb[0].mxu0
      %1288 = vdwg.mxu0
      %1289 = vst.msk [vmem:[#allocation2] sm:$0xff] %vm731, %v1286
      %1290 = vrot.lane.b32.xlu0 %v1114, 120
      %v1291 = vpop.permute.xlu0 %1290
      %1292 = vrot.lane.b32.xlu0 %v1114, 88
      %v1293 = vpop.permute.xlu0 %1292
      %v1294 = vsel %vm731, %v1291, 0
      %v1296 = vsel %vm731, %v1293, 0
      %1298 = vmatprep.subr.mxu0 0.0
      %1299 = vmatpush1.xpose.msra.mxu0 %v1296
      %1300 = vmatprep.subr.mxu0 0.0
      %1301 = vmatpush1.xpose.msra.mxu0 0.0
      %1302 = vmatprep.subr.mxu0 0.0
      %1303 = vmatpush1.xpose.msra.mxu0 0.0
      %1304 = vmatprep.subr.mxu0 0.0
      %1305 = vmatpush1.xpose.msra.mxu0 0.0
      %1306 = vmatprep.subr.mxu0 0.0
      %1307 = vmatpush1.xpose.msra.mxu0 0.0
      %1308 = vmatprep.subr.mxu0 0.0
      %1309 = vmatpush1.xpose.msra.mxu0 0.0
      %1310 = vmatprep.subr.mxu0 0.0
      %1311 = vmatpush1.xpose.msra.mxu0 0.0
      %1312 = vmatprep.subr.mxu0 0.0
      %1313 = vmatpush1.xpose.msra.mxu0 0.0
      %1314 = vmatprep.subr.mxu0 0.0
      %1315 = vmatpush1.xpose.msra.mxu0 0.0
      %1316 = vmatprep.subr.mxu0 0.0
      %1317 = vmatpush1.xpose.msra.mxu0 0.0
      %1318 = vmatprep.subr.mxu0 0.0
      %1319 = vmatpush1.xpose.msra.mxu0 0.0
      %1320 = vmatprep.subr.mxu0 0.0
      %1321 = vmatpush1.xpose.msra.mxu0 0.0
      %1322 = vmatprep.subr.mxu0 0.0
      %1323 = vmatpush1.xpose.msra.mxu0 0.0
      %1324 = vmatprep.subr.mxu0 0.0
      %1325 = vmatpush1.xpose.msra.mxu0 0.0
      %1326 = vmatprep.subr.mxu0 0.0
      %1327 = vmatpush1.xpose.msra.mxu0 0.0
      %1328 = vmatprep.subr.mxu0 0.0
      %1329 = vmatpush1.xpose.msra.mxu0 0.0
      %1330 = vmatprep.subr.mxu0 0.0
      %1331 = vmatpush1.xpose.msra.mxu0 0.0
      %1332 = vmatprep.subr.mxu0 0.0
      %1333 = vmatpush1.xpose.msra.mxu0 0.0
      %1334 = vmatprep.subr.mxu0 0.0
      %1335 = vmatpush1.xpose.msra.mxu0 0.0
      %1336 = vmatprep.subr.mxu0 0.0
      %1337 = vmatpush1.xpose.msra.mxu0 0.0
      %1338 = vmatprep.subr.mxu0 0.0
      %1339 = vmatpush1.xpose.msra.mxu0 0.0
      %1340 = vmatprep.subr.mxu0 0.0
      %1341 = vmatpush1.xpose.msra.mxu0 0.0
      %1342 = vmatprep.subr.mxu0 0.0
      %1343 = vmatpush1.xpose.msra.mxu0 0.0
      %1344 = vmatprep.subr.mxu0 0.0
      %1345 = vmatpush1.xpose.msra.mxu0 0.0
      %1346 = vmatprep.subr.mxu0 0.0
      %1347 = vmatpush1.xpose.msra.mxu0 0.0
      %1348 = vmatprep.subr.mxu0 0.0
      %1349 = vmatpush1.xpose.msra.mxu0 0.0
      %1350 = vmatprep.subr.mxu0 0.0
      %1351 = vmatpush1.xpose.msra.mxu0 0.0
      %1352 = vmatprep.subr.mxu0 0.0
      %1353 = vmatpush1.xpose.msra.mxu0 0.0
      %1354 = vmatprep.subr.mxu0 0.0
      %1355 = vmatpush1.xpose.msra.mxu0 0.0
      %1356 = vmatprep.subr.mxu0 0.0
      %1357 = vmatpush1.xpose.msra.mxu0 0.0
      %1358 = vmatprep.subr.mxu0 0.0
      %1359 = vmatpush1.xpose.msra.mxu0 0.0
      %1360 = vmatprep.subr.mxu0 0.0
      %1361 = vmatpush1.xpose.msra.mxu0 0.0
      %1362 = vmatprep.mubr.f32.mxu0 0.0
      %1363 = vmatmul.mubr.f32.gmra.mrb[0].mxu0 %v1294
      %v1364 = vpop.f32.mrb[0].mxu0
      %v1365 = vadd.f32 0.0, %v1364
      %v1366 = vpop.f32.mrb[0].mxu0
      %1367 = vdwg.mxu0
      %v1368 = vmul.f32 %v1365, 0.35355338
      %v1369 = vadd.f32 %v1368, %v1199
      %v1370 = vsel %vm731, %v1369, -inf
      %1371 = vmax.xlane.f32.xlu0 %v1370
      %v1372 = vpop.xlane.xlu0 %1371
      %v1373 = vsub.f32 %v1369, %v1372
      %v1374 = vmul.f32 %v1373, 1.442695
      %v1375 = vpow.pop %v1374
      %v1376 = vsel %vm731, %v1375, 0.0
      %1377 = vadd.xlane.f32.xlu0 %v1376
      %v1378 = vpop.xlane.xlu0 %1377
      %v1379 = vrcp.pop %v1378
      %v1380 = vmul.f32 %v1375, %v1379
      %1381 = vrot.lane.b32.xlu0 %v1114, 56
      %v1382 = vpop.permute.xlu0 %1381
      %v1385 = vsel %vm731, %v1380, 0
      %1387 = vmatprep.subr.mxu0 0.0
      %1388 = vmatpush1.msra.mxu0 %v1382
      %1389 = vmatprep.subr.mxu0 0.0
      %1390 = vmatpush1.msra.mxu0 0.0
      %1391 = vmatprep.subr.mxu0 0.0
      %1392 = vmatpush1.msra.mxu0 0.0
      %1393 = vmatprep.subr.mxu0 0.0
      %1394 = vmatpush1.msra.mxu0 0.0
      %1395 = vmatprep.subr.mxu0 0.0
      %1396 = vmatpush1.msra.mxu0 0.0
      %1397 = vmatprep.subr.mxu0 0.0
      %1398 = vmatpush1.msra.mxu0 0.0
      %1399 = vmatprep.subr.mxu0 0.0
      %1400 = vmatpush1.msra.mxu0 0.0
      %1401 = vmatprep.subr.mxu0 0.0
      %1402 = vmatpush1.msra.mxu0 0.0
      %1403 = vmatprep.subr.mxu0 0.0
      %1404 = vmatpush1.msra.mxu0 0.0
      %1405 = vmatprep.subr.mxu0 0.0
      %1406 = vmatpush1.msra.mxu0 0.0
      %1407 = vmatprep.subr.mxu0 0.0
      %1408 = vmatpush1.msra.mxu0 0.0
      %1409 = vmatprep.subr.mxu0 0.0
      %1410 = vmatpush1.msra.mxu0 0.0
      %1411 = vmatprep.subr.mxu0 0.0
      %1412 = vmatpush1.msra.mxu0 0.0
      %1413 = vmatprep.subr.mxu0 0.0
      %1414 = vmatpush1.msra.mxu0 0.0
      %1415 = vmatprep.subr.mxu0 0.0
      %1416 = vmatpush1.msra.mxu0 0.0
      %1417 = vmatprep.subr.mxu0 0.0
      %1418 = vmatpush1.msra.mxu0 0.0
      %1419 = vmatprep.subr.mxu0 0.0
      %1420 = vmatpush1.msra.mxu0 0.0
      %1421 = vmatprep.subr.mxu0 0.0
      %1422 = vmatpush1.msra.mxu0 0.0
      %1423 = vmatprep.subr.mxu0 0.0
      %1424 = vmatpush1.msra.mxu0 0.0
      %1425 = vmatprep.subr.mxu0 0.0
      %1426 = vmatpush1.msra.mxu0 0.0
      %1427 = vmatprep.subr.mxu0 0.0
      %1428 = vmatpush1.msra.mxu0 0.0
      %1429 = vmatprep.subr.mxu0 0.0
      %1430 = vmatpush1.msra.mxu0 0.0
      %1431 = vmatprep.subr.mxu0 0.0
      %1432 = vmatpush1.msra.mxu0 0.0
      %1433 = vmatprep.subr.mxu0 0.0
      %1434 = vmatpush1.msra.mxu0 0.0
      %1435 = vmatprep.subr.mxu0 0.0
      %1436 = vmatpush1.msra.mxu0 0.0
      %1437 = vmatprep.subr.mxu0 0.0
      %1438 = vmatpush1.msra.mxu0 0.0
      %1439 = vmatprep.subr.mxu0 0.0
      %1440 = vmatpush1.msra.mxu0 0.0
      %1441 = vmatprep.subr.mxu0 0.0
      %1442 = vmatpush1.msra.mxu0 0.0
      %1443 = vmatprep.subr.mxu0 0.0
      %1444 = vmatpush1.msra.mxu0 0.0
      %1445 = vmatprep.subr.mxu0 0.0
      %1446 = vmatpush1.msra.mxu0 0.0
      %1447 = vmatprep.subr.mxu0 0.0
      %1448 = vmatpush1.msra.mxu0 0.0
      %1449 = vmatprep.subr.mxu0 0.0
      %1450 = vmatpush1.msra.mxu0 0.0
      %1451 = vmatprep.mubr.f32.mxu0 0.0
      %1452 = vmatmul.mubr.f32.gmra.mrb[0].mxu0 %v1385
      %v1453 = vpop.f32.mrb[0].mxu0
      %v1454 = vadd.f32 0.0, %v1453
      %v1455 = vpop.f32.mrb[0].mxu0
      %1456 = vdwg.mxu0
      %1458 = vrot.lane.b32.xlu0 %v1454, 8
      %v1459 = vpop.permute.xlu0 %1458
      %vm1461 = vcmask 130112
      %1462 = vst.msk [vmem:[#allocation2] sm:$0xff] %vm1461, %v1459
      %1463 = vrot.lane.b32.xlu0 %v1114, 112
      %v1464 = vpop.permute.xlu0 %1463
      %1465 = vrot.lane.b32.xlu0 %v1114, 80
      %v1466 = vpop.permute.xlu0 %1465
      %v1467 = vsel %vm731, %v1464, 0
      %v1469 = vsel %vm731, %v1466, 0
      %1471 = vmatprep.subr.mxu0 0.0
      %1472 = vmatpush1.xpose.msra.mxu0 %v1469
      %1473 = vmatprep.subr.mxu0 0.0
      %1474 = vmatpush1.xpose.msra.mxu0 0.0
      %1475 = vmatprep.subr.mxu0 0.0
      %1476 = vmatpush1.xpose.msra.mxu0 0.0
      %1477 = vmatprep.subr.mxu0 0.0
      %1478 = vmatpush1.xpose.msra.mxu0 0.0
      %1479 = vmatprep.subr.mxu0 0.0
      %1480 = vmatpush1.xpose.msra.mxu0 0.0
      %1481 = vmatprep.subr.mxu0 0.0
      %1482 = vmatpush1.xpose.msra.mxu0 0.0
      %1483 = vmatprep.subr.mxu0 0.0
      %1484 = vmatpush1.xpose.msra.mxu0 0.0
      %1485 = vmatprep.subr.mxu0 0.0
      %1486 = vmatpush1.xpose.msra.mxu0 0.0
      %1487 = vmatprep.subr.mxu0 0.0
      %1488 = vmatpush1.xpose.msra.mxu0 0.0
      %1489 = vmatprep.subr.mxu0 0.0
      %1490 = vmatpush1.xpose.msra.mxu0 0.0
      %1491 = vmatprep.subr.mxu0 0.0
      %1492 = vmatpush1.xpose.msra.mxu0 0.0
      %1493 = vmatprep.subr.mxu0 0.0
      %1494 = vmatpush1.xpose.msra.mxu0 0.0
      %1495 = vmatprep.subr.mxu0 0.0
      %1496 = vmatpush1.xpose.msra.mxu0 0.0
      %1497 = vmatprep.subr.mxu0 0.0
      %1498 = vmatpush1.xpose.msra.mxu0 0.0
      %1499 = vmatprep.subr.mxu0 0.0
      %1500 = vmatpush1.xpose.msra.mxu0 0.0
      %1501 = vmatprep.subr.mxu0 0.0
      %1502 = vmatpush1.xpose.msra.mxu0 0.0
      %1503 = vmatprep.subr.mxu0 0.0
      %1504 = vmatpush1.xpose.msra.mxu0 0.0
      %1505 = vmatprep.subr.mxu0 0.0
      %1506 = vmatpush1.xpose.msra.mxu0 0.0
      %1507 = vmatprep.subr.mxu0 0.0
      %1508 = vmatpush1.xpose.msra.mxu0 0.0
      %1509 = vmatprep.subr.mxu0 0.0
      %1510 = vmatpush1.xpose.msra.mxu0 0.0
      %1511 = vmatprep.subr.mxu0 0.0
      %1512 = vmatpush1.xpose.msra.mxu0 0.0
      %1513 = vmatprep.subr.mxu0 0.0
      %1514 = vmatpush1.xpose.msra.mxu0 0.0
      %1515 = vmatprep.subr.mxu0 0.0
      %1516 = vmatpush1.xpose.msra.mxu0 0.0
      %1517 = vmatprep.subr.mxu0 0.0
      %1518 = vmatpush1.xpose.msra.mxu0 0.0
      %1519 = vmatprep.subr.mxu0 0.0
      %1520 = vmatpush1.xpose.msra.mxu0 0.0
      %1521 = vmatprep.subr.mxu0 0.0
      %1522 = vmatpush1.xpose.msra.mxu0 0.0
      %1523 = vmatprep.subr.mxu0 0.0
      %1524 = vmatpush1.xpose.msra.mxu0 0.0
      %1525 = vmatprep.subr.mxu0 0.0
      %1526 = vmatpush1.xpose.msra.mxu0 0.0
      %1527 = vmatprep.subr.mxu0 0.0
      %1528 = vmatpush1.xpose.msra.mxu0 0.0
      %1529 = vmatprep.subr.mxu0 0.0
      %1530 = vmatpush1.xpose.msra.mxu0 0.0
      %1531 = vmatprep.subr.mxu0 0.0
      %1532 = vmatpush1.xpose.msra.mxu0 0.0
      %1533 = vmatprep.subr.mxu0 0.0
      %1534 = vmatpush1.xpose.msra.mxu0 0.0
      %1535 = vmatprep.mubr.f32.mxu0 0.0
      %1536 = vmatmul.mubr.f32.gmra.mrb[0].mxu0 %v1467
      %v1537 = vpop.f32.mrb[0].mxu0
      %v1538 = vadd.f32 0.0, %v1537
      %v1539 = vpop.f32.mrb[0].mxu0
      %1540 = vdwg.mxu0
      %v1541 = vmul.f32 %v1538, 0.35355338
      %v1542 = vadd.f32 %v1541, %v1199
      %v1543 = vsel %vm731, %v1542, -inf
      %1544 = vmax.xlane.f32.xlu0 %v1543
      %v1545 = vpop.xlane.xlu0 %1544
      %v1546 = vsub.f32 %v1542, %v1545
      %v1547 = vmul.f32 %v1546, 1.442695
      %v1548 = vpow.pop %v1547
      %v1549 = vsel %vm731, %v1548, 0.0
      %1550 = vadd.xlane.f32.xlu0 %v1549
      %v1551 = vpop.xlane.xlu0 %1550
      %v1552 = vrcp.pop %v1551
      %v1553 = vmul.f32 %v1548, %v1552
      %1554 = vrot.lane.b32.xlu0 %v1114, 48
      %v1555 = vpop.permute.xlu0 %1554
      %v1558 = vsel %vm731, %v1553, 0
      %1560 = vmatprep.subr.mxu0 0.0
      %1561 = vmatpush1.msra.mxu0 %v1555
      %1562 = vmatprep.subr.mxu0 0.0
      %1563 = vmatpush1.msra.mxu0 0.0
      %1564 = vmatprep.subr.mxu0 0.0
      %1565 = vmatpush1.msra.mxu0 0.0
      %1566 = vmatprep.subr.mxu0 0.0
      %1567 = vmatpush1.msra.mxu0 0.0
      %1568 = vmatprep.subr.mxu0 0.0
      %1569 = vmatpush1.msra.mxu0 0.0
      %1570 = vmatprep.subr.mxu0 0.0
      %1571 = vmatpush1.msra.mxu0 0.0
      %1572 = vmatprep.subr.mxu0 0.0
      %1573 = vmatpush1.msra.mxu0 0.0
      %1574 = vmatprep.subr.mxu0 0.0
      %1575 = vmatpush1.msra.mxu0 0.0
      %1576 = vmatprep.subr.mxu0 0.0
      %1577 = vmatpush1.msra.mxu0 0.0
      %1578 = vmatprep.subr.mxu0 0.0
      %1579 = vmatpush1.msra.mxu0 0.0
      %1580 = vmatprep.subr.mxu0 0.0
      %1581 = vmatpush1.msra.mxu0 0.0
      %1582 = vmatprep.subr.mxu0 0.0
      %1583 = vmatpush1.msra.mxu0 0.0
      %1584 = vmatprep.subr.mxu0 0.0
      %1585 = vmatpush1.msra.mxu0 0.0
      %1586 = vmatprep.subr.mxu0 0.0
      %1587 = vmatpush1.msra.mxu0 0.0
      %1588 = vmatprep.subr.mxu0 0.0
      %1589 = vmatpush1.msra.mxu0 0.0
      %1590 = vmatprep.subr.mxu0 0.0
      %1591 = vmatpush1.msra.mxu0 0.0
      %1592 = vmatprep.subr.mxu0 0.0
      %1593 = vmatpush1.msra.mxu0 0.0
      %1594 = vmatprep.subr.mxu0 0.0
      %1595 = vmatpush1.msra.mxu0 0.0
      %1596 = vmatprep.subr.mxu0 0.0
      %1597 = vmatpush1.msra.mxu0 0.0
      %1598 = vmatprep.subr.mxu0 0.0
      %1599 = vmatpush1.msra.mxu0 0.0
      %1600 = vmatprep.subr.mxu0 0.0
      %1601 = vmatpush1.msra.mxu0 0.0
      %1602 = vmatprep.subr.mxu0 0.0
      %1603 = vmatpush1.msra.mxu0 0.0
      %1604 = vmatprep.subr.mxu0 0.0
      %1605 = vmatpush1.msra.mxu0 0.0
      %1606 = vmatprep.subr.mxu0 0.0
      %1607 = vmatpush1.msra.mxu0 0.0
      %1608 = vmatprep.subr.mxu0 0.0
      %1609 = vmatpush1.msra.mxu0 0.0
      %1610 = vmatprep.subr.mxu0 0.0
      %1611 = vmatpush1.msra.mxu0 0.0
      %1612 = vmatprep.subr.mxu0 0.0
      %1613 = vmatpush1.msra.mxu0 0.0
      %1614 = vmatprep.subr.mxu0 0.0
      %1615 = vmatpush1.msra.mxu0 0.0
      %1616 = vmatprep.subr.mxu0 0.0
      %1617 = vmatpush1.msra.mxu0 0.0
      %1618 = vmatprep.subr.mxu0 0.0
      %1619 = vmatpush1.msra.mxu0 0.0
      %1620 = vmatprep.subr.mxu0 0.0
      %1621 = vmatpush1.msra.mxu0 0.0
      %1622 = vmatprep.subr.mxu0 0.0
      %1623 = vmatpush1.msra.mxu0 0.0
      %1624 = vmatprep.mubr.f32.mxu0 0.0
      %1625 = vmatmul.mubr.f32.gmra.mrb[0].mxu0 %v1558
      %v1626 = vpop.f32.mrb[0].mxu0
      %v1627 = vadd.f32 0.0, %v1626
      %v1628 = vpop.f32.mrb[0].mxu0
      %1629 = vdwg.mxu0
      %1631 = vrot.lane.b32.xlu0 %v1627, 16
      %v1632 = vpop.permute.xlu0 %1631
      %vm1634 = vcmask 195712
      %1635 = vst.msk [vmem:[#allocation2] sm:$0xff] %vm1634, %v1632
      %1636 = vrot.lane.b32.xlu0 %v1114, 104
      %v1637 = vpop.permute.xlu0 %1636
      %1638 = vrot.lane.b32.xlu0 %v1114, 72
      %v1639 = vpop.permute.xlu0 %1638
      %v1640 = vsel %vm731, %v1637, 0
      %v1642 = vsel %vm731, %v1639, 0
      %1644 = vmatprep.subr.mxu0 0.0
      %1645 = vmatpush1.xpose.msra.mxu0 %v1642
      %1646 = vmatprep.subr.mxu0 0.0
      %1647 = vmatpush1.xpose.msra.mxu0 0.0
      %1648 = vmatprep.subr.mxu0 0.0
      %1649 = vmatpush1.xpose.msra.mxu0 0.0
      %1650 = vmatprep.subr.mxu0 0.0
      %1651 = vmatpush1.xpose.msra.mxu0 0.0
      %1652 = vmatprep.subr.mxu0 0.0
      %1653 = vmatpush1.xpose.msra.mxu0 0.0
      %1654 = vmatprep.subr.mxu0 0.0
      %1655 = vmatpush1.xpose.msra.mxu0 0.0
      %1656 = vmatprep.subr.mxu0 0.0
      %1657 = vmatpush1.xpose.msra.mxu0 0.0
      %1658 = vmatprep.subr.mxu0 0.0
      %1659 = vmatpush1.xpose.msra.mxu0 0.0
      %1660 = vmatprep.subr.mxu0 0.0
      %1661 = vmatpush1.xpose.msra.mxu0 0.0
      %1662 = vmatprep.subr.mxu0 0.0
      %1663 = vmatpush1.xpose.msra.mxu0 0.0
      %1664 = vmatprep.subr.mxu0 0.0
      %1665 = vmatpush1.xpose.msra.mxu0 0.0
      %1666 = vmatprep.subr.mxu0 0.0
      %1667 = vmatpush1.xpose.msra.mxu0 0.0
      %1668 = vmatprep.subr.mxu0 0.0
      %1669 = vmatpush1.xpose.msra.mxu0 0.0
      %1670 = vmatprep.subr.mxu0 0.0
      %1671 = vmatpush1.xpose.msra.mxu0 0.0
      %1672 = vmatprep.subr.mxu0 0.0
      %1673 = vmatpush1.xpose.msra.mxu0 0.0
      %1674 = vmatprep.subr.mxu0 0.0
      %1675 = vmatpush1.xpose.msra.mxu0 0.0
      %1676 = vmatprep.subr.mxu0 0.0
      %1677 = vmatpush1.xpose.msra.mxu0 0.0
      %1678 = vmatprep.subr.mxu0 0.0
      %1679 = vmatpush1.xpose.msra.mxu0 0.0
      %1680 = vmatprep.subr.mxu0 0.0
      %1681 = vmatpush1.xpose.msra.mxu0 0.0
      %1682 = vmatprep.subr.mxu0 0.0
      %1683 = vmatpush1.xpose.msra.mxu0 0.0
      %1684 = vmatprep.subr.mxu0 0.0
      %1685 = vmatpush1.xpose.msra.mxu0 0.0
      %1686 = vmatprep.subr.mxu0 0.0
      %1687 = vmatpush1.xpose.msra.mxu0 0.0
      %1688 = vmatprep.subr.mxu0 0.0
      %1689 = vmatpush1.xpose.msra.mxu0 0.0
      %1690 = vmatprep.subr.mxu0 0.0
      %1691 = vmatpush1.xpose.msra.mxu0 0.0
      %1692 = vmatprep.subr.mxu0 0.0
      %1693 = vmatpush1.xpose.msra.mxu0 0.0
      %1694 = vmatprep.subr.mxu0 0.0
      %1695 = vmatpush1.xpose.msra.mxu0 0.0
      %1696 = vmatprep.subr.mxu0 0.0
      %1697 = vmatpush1.xpose.msra.mxu0 0.0
      %1698 = vmatprep.subr.mxu0 0.0
      %1699 = vmatpush1.xpose.msra.mxu0 0.0
      %1700 = vmatprep.subr.mxu0 0.0
      %1701 = vmatpush1.xpose.msra.mxu0 0.0
      %1702 = vmatprep.subr.mxu0 0.0
      %1703 = vmatpush1.xpose.msra.mxu0 0.0
      %1704 = vmatprep.subr.mxu0 0.0
      %1705 = vmatpush1.xpose.msra.mxu0 0.0
      %1706 = vmatprep.subr.mxu0 0.0
      %1707 = vmatpush1.xpose.msra.mxu0 0.0
      %1708 = vmatprep.mubr.f32.mxu0 0.0
      %1709 = vmatmul.mubr.f32.gmra.mrb[0].mxu0 %v1640
      %v1710 = vpop.f32.mrb[0].mxu0
      %v1711 = vadd.f32 0.0, %v1710
      %v1712 = vpop.f32.mrb[0].mxu0
      %1713 = vdwg.mxu0
      %v1714 = vmul.f32 %v1711, 0.35355338
      %v1715 = vadd.f32 %v1714, %v1199
      %v1716 = vsel %vm731, %v1715, -inf
      %1717 = vmax.xlane.f32.xlu0 %v1716
      %v1718 = vpop.xlane.xlu0 %1717
      %v1719 = vsub.f32 %v1715, %v1718
      %v1720 = vmul.f32 %v1719, 1.442695
      %v1721 = vpow.pop %v1720
      %v1722 = vsel %vm731, %v1721, 0.0
      %1723 = vadd.xlane.f32.xlu0 %v1722
      %v1724 = vpop.xlane.xlu0 %1723
      %v1725 = vrcp.pop %v1724
      %v1726 = vmul.f32 %v1721, %v1725
      %1727 = vrot.lane.b32.xlu0 %v1114, 40
      %v1728 = vpop.permute.xlu0 %1727
      %v1731 = vsel %vm731, %v1726, 0
      %1733 = vmatprep.subr.mxu0 0.0
      %1734 = vmatpush1.msra.mxu0 %v1728
      %1735 = vmatprep.subr.mxu0 0.0
      %1736 = vmatpush1.msra.mxu0 0.0
      %1737 = vmatprep.subr.mxu0 0.0
      %1738 = vmatpush1.msra.mxu0 0.0
      %1739 = vmatprep.subr.mxu0 0.0
      %1740 = vmatpush1.msra.mxu0 0.0
      %1741 = vmatprep.subr.mxu0 0.0
      %1742 = vmatpush1.msra.mxu0 0.0
      %1743 = vmatprep.subr.mxu0 0.0
      %1744 = vmatpush1.msra.mxu0 0.0
      %1745 = vmatprep.subr.mxu0 0.0
      %1746 = vmatpush1.msra.mxu0 0.0
      %1747 = vmatprep.subr.mxu0 0.0
      %1748 = vmatpush1.msra.mxu0 0.0
      %1749 = vmatprep.subr.mxu0 0.0
      %1750 = vmatpush1.msra.mxu0 0.0
      %1751 = vmatprep.subr.mxu0 0.0
      %1752 = vmatpush1.msra.mxu0 0.0
      %1753 = vmatprep.subr.mxu0 0.0
      %1754 = vmatpush1.msra.mxu0 0.0
      %1755 = vmatprep.subr.mxu0 0.0
      %1756 = vmatpush1.msra.mxu0 0.0
      %1757 = vmatprep.subr.mxu0 0.0
      %1758 = vmatpush1.msra.mxu0 0.0
      %1759 = vmatprep.subr.mxu0 0.0
      %1760 = vmatpush1.msra.mxu0 0.0
      %1761 = vmatprep.subr.mxu0 0.0
      %1762 = vmatpush1.msra.mxu0 0.0
      %1763 = vmatprep.subr.mxu0 0.0
      %1764 = vmatpush1.msra.mxu0 0.0
      %1765 = vmatprep.subr.mxu0 0.0
      %1766 = vmatpush1.msra.mxu0 0.0
      %1767 = vmatprep.subr.mxu0 0.0
      %1768 = vmatpush1.msra.mxu0 0.0
      %1769 = vmatprep.subr.mxu0 0.0
      %1770 = vmatpush1.msra.mxu0 0.0
      %1771 = vmatprep.subr.mxu0 0.0
      %1772 = vmatpush1.msra.mxu0 0.0
      %1773 = vmatprep.subr.mxu0 0.0
      %1774 = vmatpush1.msra.mxu0 0.0
      %1775 = vmatprep.subr.mxu0 0.0
      %1776 = vmatpush1.msra.mxu0 0.0
      %1777 = vmatprep.subr.mxu0 0.0
      %1778 = vmatpush1.msra.mxu0 0.0
      %1779 = vmatprep.subr.mxu0 0.0
      %1780 = vmatpush1.msra.mxu0 0.0
      %1781 = vmatprep.subr.mxu0 0.0
      %1782 = vmatpush1.msra.mxu0 0.0
      %1783 = vmatprep.subr.mxu0 0.0
      %1784 = vmatpush1.msra.mxu0 0.0
      %1785 = vmatprep.subr.mxu0 0.0
      %1786 = vmatpush1.msra.mxu0 0.0
      %1787 = vmatprep.subr.mxu0 0.0
      %1788 = vmatpush1.msra.mxu0 0.0
      %1789 = vmatprep.subr.mxu0 0.0
      %1790 = vmatpush1.msra.mxu0 0.0
      %1791 = vmatprep.subr.mxu0 0.0
      %1792 = vmatpush1.msra.mxu0 0.0
      %1793 = vmatprep.subr.mxu0 0.0
      %1794 = vmatpush1.msra.mxu0 0.0
      %1795 = vmatprep.subr.mxu0 0.0
      %1796 = vmatpush1.msra.mxu0 0.0
      %1797 = vmatprep.mubr.f32.mxu0 0.0
      %1798 = vmatmul.mubr.f32.gmra.mrb[0].mxu0 %v1731
      %v1799 = vpop.f32.mrb[0].mxu0
      %v1800 = vadd.f32 0.0, %v1799
      %v1801 = vpop.f32.mrb[0].mxu0
      %1802 = vdwg.mxu0
      %1804 = vrot.lane.b32.xlu0 %v1800, 24
      %v1805 = vpop.permute.xlu0 %1804
      %vm1807 = vcmask 261312
      %1808 = vst.msk [vmem:[#allocation2] sm:$0xff] %vm1807, %v1805
      %v1809 = vld [vmem:[#allocation2] sm:$0xff]
      %v1810 = vld [vmem:[%s9] sm:$0xff]
      %v1811 = vld [vmem:[%s9 + $0x8] sm:$0xff]
      %v1812 = vld [vmem:[%s9 + $0x10] sm:$0xff]
      %v1813 = vld [vmem:[%s9 + $0x18] sm:$0xff]
      %v1814 = vld [vmem:[%s10] sm:$0x1]
      %v1816 = vlaneseq
      %v1817 = vshrl.u32 %v1816, 7
      %v1818 = vsub.s32 0, %v1817
      %v1819 = vrot.slane %v1814, %v1818
      %v1822 = vsel %vm999, %v1809, 0
      %1824 = vmatprep.subr.mxu0 0.0
      %1825 = vmatpush1.msra.mxu0 %v1810
      %1826 = vmatprep.subr.mxu0 0.0
      %1827 = vmatpush1.msra.mxu0 %v1811
      %1828 = vmatprep.subr.mxu0 0.0
      %1829 = vmatpush1.msra.mxu0 %v1812
      %1830 = vmatprep.subr.mxu0 0.0
      %1831 = vmatpush1.msra.mxu0 %v1813
      %1832 = vmatprep.subr.mxu0 0.0
      %1833 = vmatpush1.msra.mxu0 0.0
      %1834 = vmatprep.subr.mxu0 0.0
      %1835 = vmatpush1.msra.mxu0 0.0
      %1836 = vmatprep.subr.mxu0 0.0
      %1837 = vmatpush1.msra.mxu0 0.0
      %1838 = vmatprep.subr.mxu0 0.0
      %1839 = vmatpush1.msra.mxu0 0.0
      %1840 = vmatprep.subr.mxu0 0.0
      %1841 = vmatpush1.msra.mxu0 0.0
      %1842 = vmatprep.subr.mxu0 0.0
      %1843 = vmatpush1.msra.mxu0 0.0
      %1844 = vmatprep.subr.mxu0 0.0
      %1845 = vmatpush1.msra.mxu0 0.0
      %1846 = vmatprep.subr.mxu0 0.0
      %1847 = vmatpush1.msra.mxu0 0.0
      %1848 = vmatprep.subr.mxu0 0.0
      %1849 = vmatpush1.msra.mxu0 0.0
      %1850 = vmatprep.subr.mxu0 0.0
      %1851 = vmatpush1.msra.mxu0 0.0
      %1852 = vmatprep.subr.mxu0 0.0
      %1853 = vmatpush1.msra.mxu0 0.0
      %1854 = vmatprep.subr.mxu0 0.0
      %1855 = vmatpush1.msra.mxu0 0.0
      %1856 = vmatprep.subr.mxu0 0.0
      %1857 = vmatpush1.msra.mxu0 0.0
      %1858 = vmatprep.subr.mxu0 0.0
      %1859 = vmatpush1.msra.mxu0 0.0
      %1860 = vmatprep.subr.mxu0 0.0
      %1861 = vmatpush1.msra.mxu0 0.0
      %1862 = vmatprep.subr.mxu0 0.0
      %1863 = vmatpush1.msra.mxu0 0.0
      %1864 = vmatprep.subr.mxu0 0.0
      %1865 = vmatpush1.msra.mxu0 0.0
      %1866 = vmatprep.subr.mxu0 0.0
      %1867 = vmatpush1.msra.mxu0 0.0
      %1868 = vmatprep.subr.mxu0 0.0
      %1869 = vmatpush1.msra.mxu0 0.0
      %1870 = vmatprep.subr.mxu0 0.0
      %1871 = vmatpush1.msra.mxu0 0.0
      %1872 = vmatprep.subr.mxu0 0.0
      %1873 = vmatpush1.msra.mxu0 0.0
      %1874 = vmatprep.subr.mxu0 0.0
      %1875 = vmatpush1.msra.mxu0 0.0
      %1876 = vmatprep.subr.mxu0 0.0
      %1877 = vmatpush1.msra.mxu0 0.0
      %1878 = vmatprep.subr.mxu0 0.0
      %1879 = vmatpush1.msra.mxu0 0.0
      %1880 = vmatprep.subr.mxu0 0.0
      %1881 = vmatpush1.msra.mxu0 0.0
      %1882 = vmatprep.subr.mxu0 0.0
      %1883 = vmatpush1.msra.mxu0 0.0
      %1884 = vmatprep.subr.mxu0 0.0
      %1885 = vmatpush1.msra.mxu0 0.0
      %1886 = vmatprep.subr.mxu0 0.0
      %1887 = vmatpush1.msra.mxu0 0.0
      %1888 = vmatprep.mubr.f32.mxu0 0.0
      %1889 = vmatmul.mubr.f32.gmra.mrb[0].mxu0 %v1822
      %v1890 = vpop.f32.mrb[0].mxu0
      %v1891 = vadd.f32 %v1819, %v1890
      %v1892 = vpop.f32.mrb[0].mxu0
      %1893 = vdwg.mxu0
      %v1894 = vadd.f32 %v1891, %v1029
      %v1895 = vld [vmem:[%s11] sm:$0x1]
      %v1896 = vld [vmem:[%s12] sm:$0x1]
      %v1897 = vsel %vm999, %v1894, 0.0
      %1898 = vadd.xlane.f32.xlu0 %v1897
      %v1899 = vpop.xlane.xlu0 %1898
      %v1900 = vmul.f32 %v1899, %v1003
      %v1901 = vmul.f32 %v1894, %v1894
      %v1902 = vsel %vm999, %v1901, 0.0
      %1903 = vadd.xlane.f32.xlu0 %v1902
      %v1904 = vpop.xlane.xlu0 %1903
      %v1905 = vmul.f32 %v1904, %v1003
      %v1906 = vmul.f32 %v1900, %v1900
      %v1907 = vsub.f32 %v1905, %v1906
      %v1908 = vsub.f32 %v1894, %v1900
      %v1909 = vadd.f32 %v1907, 1e-05
      %v1910 = vrsqrt.pop %v1909
      %v1911 = vmul.f32 %v1908, %v1910
      %v1913 = vlaneseq
      %v1914 = vshrl.u32 %v1913, 7
      %v1915 = vsub.s32 0, %v1914
      %v1916 = vrot.slane %v1895, %v1915
      %v1918 = vmul.f32 %v1911, %v1916
      %v1920 = vlaneseq
      %v1921 = vshrl.u32 %v1920, 7
      %v1922 = vsub.s32 0, %v1921
      %v1923 = vrot.slane %v1896, %v1922
      %v1925 = vadd.f32 %v1918, %v1923
      %v1926 = vld [vmem:[%s13] sm:$0xff]
      %v1927 = vld [vmem:[%s13 + $0x8] sm:$0xff]
      %v1928 = vld [vmem:[%s13 + $0x10] sm:$0xff]
      %v1929 = vld [vmem:[%s13 + $0x18] sm:$0xff]
      %v1930 = vld [vmem:[%s14] sm:$0x1]
      %v1932 = vlaneseq
      %v1933 = vshrl.u32 %v1932, 7
      %v1934 = vsub.s32 0, %v1933
      %v1935 = vrot.slane %v1930, %v1934
      %v1938 = vsel %vm999, %v1925, 0
      %1940 = vmatprep.subr.mxu0 0.0
      %1941 = vmatpush1.msra.mxu0 %v1926
      %1942 = vmatprep.subr.mxu0 0.0
      %1943 = vmatpush1.msra.mxu0 %v1927
      %1944 = vmatprep.subr.mxu0 0.0
      %1945 = vmatpush1.msra.mxu0 %v1928
      %1946 = vmatprep.subr.mxu0 0.0
      %1947 = vmatpush1.msra.mxu0 %v1929
      %1948 = vmatprep.subr.mxu0 0.0
      %1949 = vmatpush1.msra.mxu0 0.0
      %1950 = vmatprep.subr.mxu0 0.0
      %1951 = vmatpush1.msra.mxu0 0.0
      %1952 = vmatprep.subr.mxu0 0.0
      %1953 = vmatpush1.msra.mxu0 0.0
      %1954 = vmatprep.subr.mxu0 0.0
      %1955 = vmatpush1.msra.mxu0 0.0
      %1956 = vmatprep.subr.mxu0 0.0
      %1957 = vmatpush1.msra.mxu0 0.0
      %1958 = vmatprep.subr.mxu0 0.0
      %1959 = vmatpush1.msra.mxu0 0.0
      %1960 = vmatprep.subr.mxu0 0.0
      %1961 = vmatpush1.msra.mxu0 0.0
      %1962 = vmatprep.subr.mxu0 0.0
      %1963 = vmatpush1.msra.mxu0 0.0
      %1964 = vmatprep.subr.mxu0 0.0
      %1965 = vmatpush1.msra.mxu0 0.0
      %1966 = vmatprep.subr.mxu0 0.0
      %1967 = vmatpush1.msra.mxu0 0.0
      %1968 = vmatprep.subr.mxu0 0.0
      %1969 = vmatpush1.msra.mxu0 0.0
      %1970 = vmatprep.subr.mxu0 0.0
      %1971 = vmatpush1.msra.mxu0 0.0
      %1972 = vmatprep.subr.mxu0 0.0
      %1973 = vmatpush1.msra.mxu0 0.0
      %1974 = vmatprep.subr.mxu0 0.0
      %1975 = vmatpush1.msra.mxu0 0.0
      %1976 = vmatprep.subr.mxu0 0.0
      %1977 = vmatpush1.msra.mxu0 0.0
      %1978 = vmatprep.subr.mxu0 0.0
      %1979 = vmatpush1.msra.mxu0 0.0
      %1980 = vmatprep.subr.mxu0 0.0
      %1981 = vmatpush1.msra.mxu0 0.0
      %1982 = vmatprep.subr.mxu0 0.0
      %1983 = vmatpush1.msra.mxu0 0.0
      %1984 = vmatprep.subr.mxu0 0.0
      %1985 = vmatpush1.msra.mxu0 0.0
      %1986 = vmatprep.subr.mxu0 0.0
      %1987 = vmatpush1.msra.mxu0 0.0
      %1988 = vmatprep.subr.mxu0 0.0
      %1989 = vmatpush1.msra.mxu0 0.0
      %1990 = vmatprep.subr.mxu0 0.0
      %1991 = vmatpush1.msra.mxu0 0.0
      %1992 = vmatprep.subr.mxu0 0.0
      %1993 = vmatpush1.msra.mxu0 0.0
      %1994 = vmatprep.subr.mxu0 0.0
      %1995 = vmatpush1.msra.mxu0 0.0
      %1996 = vmatprep.subr.mxu0 0.0
      %1997 = vmatpush1.msra.mxu0 0.0
      %1998 = vmatprep.subr.mxu0 0.0
      %1999 = vmatpush1.msra.mxu0 0.0
      %2000 = vmatprep.subr.mxu0 0.0
      %2001 = vmatpush1.msra.mxu0 0.0
      %2002 = vmatprep.subr.mxu0 0.0
      %2003 = vmatpush1.msra.mxu0 0.0
      %2004 = vmatprep.mubr.f32.mxu0 0.0
      %2005 = vmatmul.mubr.f32.gmra.mrb[0].mxu0 %v1938
      %v2006 = vpop.f32.mrb[0].mxu0
      %v2007 = vadd.f32 %v1935, %v2006
      %v2008 = vpop.f32.mrb[0].mxu0
      %2009 = vdwg.mxu0
      %v2010 = vmul.f32 %v2007, 0.5
      %v2011 = vmul.f32 %v2007, 0.70710677
      %v2012 = verf.f32.pop %v2011
      %v2013 = vadd.f32 %v2012, 1.0
      %v2014 = vmul.f32 %v2010, %v2013
      %v2015 = vld [vmem:[%s15] sm:$0xff]
      %v2016 = vld [vmem:[%s15 + $0x8] sm:$0xff]
      %v2017 = vld [vmem:[%s15 + $0x10] sm:$0xff]
      %v2018 = vld [vmem:[%s15 + $0x18] sm:$0xff]
      %v2019 = vld [vmem:[%s15 + $0x20] sm:$0xff]
      %v2020 = vld [vmem:[%s15 + $0x28] sm:$0xff]
      %v2021 = vld [vmem:[%s15 + $0x30] sm:$0xff]
      %v2022 = vld [vmem:[%s15 + $0x38] sm:$0xff]
      %v2023 = vld [vmem:[%s16] sm:$0x1]
      %v2025 = vlaneseq
      %v2026 = vshrl.u32 %v2025, 7
      %v2027 = vsub.s32 0, %v2026
      %v2028 = vrot.slane %v2023, %v2027
      %v2031 = vsel %vm837, %v2014, 0
      %2033 = vmatprep.subr.mxu0 0.0
      %2034 = vmatpush1.msra.mxu0 %v2015
      %2035 = vmatprep.subr.mxu0 0.0
      %2036 = vmatpush1.msra.mxu0 %v2016
      %2037 = vmatprep.subr.mxu0 0.0
      %2038 = vmatpush1.msra.mxu0 %v2017
      %2039 = vmatprep.subr.mxu0 0.0
      %2040 = vmatpush1.msra.mxu0 %v2018
      %2041 = vmatprep.subr.mxu0 0.0
      %2042 = vmatpush1.msra.mxu0 %v2019
      %2043 = vmatprep.subr.mxu0 0.0
      %2044 = vmatpush1.msra.mxu0 %v2020
      %2045 = vmatprep.subr.mxu0 0.0
      %2046 = vmatpush1.msra.mxu0 %v2021
      %2047 = vmatprep.subr.mxu0 0.0
      %2048 = vmatpush1.msra.mxu0 %v2022
      %2049 = vmatprep.subr.mxu0 0.0
      %2050 = vmatpush1.msra.mxu0 0.0
      %2051 = vmatprep.subr.mxu0 0.0
      %2052 = vmatpush1.msra.mxu0 0.0
      %2053 = vmatprep.subr.mxu0 0.0
      %2054 = vmatpush1.msra.mxu0 0.0
      %2055 = vmatprep.subr.mxu0 0.0
      %2056 = vmatpush1.msra.mxu0 0.0
      %2057 = vmatprep.subr.mxu0 0.0
      %2058 = vmatpush1.msra.mxu0 0.0
      %2059 = vmatprep.subr.mxu0 0.0
      %2060 = vmatpush1.msra.mxu0 0.0
      %2061 = vmatprep.subr.mxu0 0.0
      %2062 = vmatpush1.msra.mxu0 0.0
      %2063 = vmatprep.subr.mxu0 0.0
      %2064 = vmatpush1.msra.mxu0 0.0
      %2065 = vmatprep.subr.mxu0 0.0
      %2066 = vmatpush1.msra.mxu0 0.0
      %2067 = vmatprep.subr.mxu0 0.0
      %2068 = vmatpush1.msra.mxu0 0.0
      %2069 = vmatprep.subr.mxu0 0.0
      %2070 = vmatpush1.msra.mxu0 0.0
      %2071 = vmatprep.subr.mxu0 0.0
      %2072 = vmatpush1.msra.mxu0 0.0
      %2073 = vmatprep.subr.mxu0 0.0
      %2074 = vmatpush1.msra.mxu0 0.0
      %2075 = vmatprep.subr.mxu0 0.0
      %2076 = vmatpush1.msra.mxu0 0.0
      %2077 = vmatprep.subr.mxu0 0.0
      %2078 = vmatpush1.msra.mxu0 0.0
      %2079 = vmatprep.subr.mxu0 0.0
      %2080 = vmatpush1.msra.mxu0 0.0
      %2081 = vmatprep.subr.mxu0 0.0
      %2082 = vmatpush1.msra.mxu0 0.0
      %2083 = vmatprep.subr.mxu0 0.0
      %2084 = vmatpush1.msra.mxu0 0.0
      %2085 = vmatprep.subr.mxu0 0.0
      %2086 = vmatpush1.msra.mxu0 0.0
      %2087 = vmatprep.subr.mxu0 0.0
      %2088 = vmatpush1.msra.mxu0 0.0
      %2089 = vmatprep.subr.mxu0 0.0
      %2090 = vmatpush1.msra.mxu0 0.0
      %2091 = vmatprep.subr.mxu0 0.0
      %2092 = vmatpush1.msra.mxu0 0.0
      %2093 = vmatprep.subr.mxu0 0.0
      %2094 = vmatpush1.msra.mxu0 0.0
      %2095 = vmatprep.subr.mxu0 0.0
      %2096 = vmatpush1.msra.mxu0 0.0
      %2097 = vmatprep.mubr.f32.mxu0 0.0
      %2098 = vmatmul.mubr.f32.gmra.mrb[0].mxu0 %v2031
      %v2099 = vpop.f32.mrb[0].mxu0
      %v2100 = vadd.f32 %v2028, %v2099
      %v2101 = vpop.f32.mrb[0].mxu0
      %2102 = vdwg.mxu0
      %v2103 = vadd.f32 %v2100, %v1925
      %v2104 = vld [vmem:[%s17] sm:$0x1]
      %v2105 = vld [vmem:[%s18] sm:$0x1]
      %v2106 = vsel %vm999, %v2103, 0.0
      %2107 = vadd.xlane.f32.xlu0 %v2106
      %v2108 = vpop.xlane.xlu0 %2107
      %v2109 = vmul.f32 %v2108, %v1003
      %v2110 = vmul.f32 %v2103, %v2103
      %v2111 = vsel %vm999, %v2110, 0.0
      %2112 = vadd.xlane.f32.xlu0 %v2111
      %v2113 = vpop.xlane.xlu0 %2112
      %v2114 = vmul.f32 %v2113, %v1003
      %v2115 = vmul.f32 %v2109, %v2109
      %v2116 = vsub.f32 %v2114, %v2115
      %v2117 = vsub.f32 %v2103, %v2109
      %v2118 = vadd.f32 %v2116, 1e-05
      %v2119 = vrsqrt.pop %v2118
      %v2120 = vmul.f32 %v2117, %v2119
      %v2122 = vlaneseq
      %v2123 = vshrl.u32 %v2122, 7
      %v2124 = vsub.s32 0, %v2123
      %v2125 = vrot.slane %v2104, %v2124
      %v2127 = vmul.f32 %v2120, %v2125
      %v2129 = vlaneseq
      %v2130 = vshrl.u32 %v2129, 7
      %v2131 = vsub.s32 0, %v2130
      %v2132 = vrot.slane %v2105, %v2131
      %v2134 = vadd.f32 %v2127, %v2132
      %s2135 = scalar_lea.vmem %s7, 32
      %v2136 = vld [vmem:[%s2135] sm:$0xff]
      %v2137 = vld [vmem:[%s2135 + $0x8] sm:$0xff]
      %v2138 = vld [vmem:[%s2135 + $0x10] sm:$0xff]
      %v2139 = vld [vmem:[%s2135 + $0x18] sm:$0xff]
      %s2140 = scalar_lea.vmem %s8, 1
      %v2141 = vld [vmem:[%s2140] sm:$0x1]
      %v2143 = vlaneseq
      %v2144 = vshrl.u32 %v2143, 7
      %v2145 = vsub.s32 0, %v2144
      %v2146 = vrot.slane %v2141, %v2145
      %v2149 = vsel %vm999, %v2134, 0
      %2151 = vmatprep.subr.mxu0 0.0
      %2152 = vmatpush1.msra.mxu0 %v2136
      %2153 = vmatprep.subr.mxu0 0.0
      %2154 = vmatpush1.msra.mxu0 %v2137
      %2155 = vmatprep.subr.mxu0 0.0
      %2156 = vmatpush1.msra.mxu0 %v2138
      %2157 = vmatprep.subr.mxu0 0.0
      %2158 = vmatpush1.msra.mxu0 %v2139
      %2159 = vmatprep.subr.mxu0 0.0
      %2160 = vmatpush1.msra.mxu0 0.0
      %2161 = vmatprep.subr.mxu0 0.0
      %2162 = vmatpush1.msra.mxu0 0.0
      %2163 = vmatprep.subr.mxu0 0.0
      %2164 = vmatpush1.msra.mxu0 0.0
      %2165 = vmatprep.subr.mxu0 0.0
      %2166 = vmatpush1.msra.mxu0 0.0
      %2167 = vmatprep.subr.mxu0 0.0
      %2168 = vmatpush1.msra.mxu0 0.0
      %2169 = vmatprep.subr.mxu0 0.0
      %2170 = vmatpush1.msra.mxu0 0.0
      %2171 = vmatprep.subr.mxu0 0.0
      %2172 = vmatpush1.msra.mxu0 0.0
      %2173 = vmatprep.subr.mxu0 0.0
      %2174 = vmatpush1.msra.mxu0 0.0
      %2175 = vmatprep.subr.mxu0 0.0
      %2176 = vmatpush1.msra.mxu0 0.0
      %2177 = vmatprep.subr.mxu0 0.0
      %2178 = vmatpush1.msra.mxu0 0.0
      %2179 = vmatprep.subr.mxu0 0.0
      %2180 = vmatpush1.msra.mxu0 0.0
      %2181 = vmatprep.subr.mxu0 0.0
      %2182 = vmatpush1.msra.mxu0 0.0
      %2183 = vmatprep.subr.mxu0 0.0
      %2184 = vmatpush1.msra.mxu0 0.0
      %2185 = vmatprep.subr.mxu0 0.0
      %2186 = vmatpush1.msra.mxu0 0.0
      %2187 = vmatprep.subr.mxu0 0.0
      %2188 = vmatpush1.msra.mxu0 0.0
      %2189 = vmatprep.subr.mxu0 0.0
      %2190 = vmatpush1.msra.mxu0 0.0
      %2191 = vmatprep.subr.mxu0 0.0
      %2192 = vmatpush1.msra.mxu0 0.0
      %2193 = vmatprep.subr.mxu0 0.0
      %2194 = vmatpush1.msra.mxu0 0.0
      %2195 = vmatprep.subr.mxu0 0.0
      %2196 = vmatpush1.msra.mxu0 0.0
      %2197 = vmatprep.subr.mxu0 0.0
      %2198 = vmatpush1.msra.mxu0 0.0
      %2199 = vmatprep.subr.mxu0 0.0
      %2200 = vmatpush1.msra.mxu0 0.0
      %2201 = vmatprep.subr.mxu0 0.0
      %2202 = vmatpush1.msra.mxu0 0.0
      %2203 = vmatprep.subr.mxu0 0.0
      %2204 = vmatpush1.msra.mxu0 0.0
      %2205 = vmatprep.subr.mxu0 0.0
      %2206 = vmatpush1.msra.mxu0 0.0
      %2207 = vmatprep.subr.mxu0 0.0
      %2208 = vmatpush1.msra.mxu0 0.0
      %2209 = vmatprep.subr.mxu0 0.0
      %2210 = vmatpush1.msra.mxu0 0.0
      %2211 = vmatprep.subr.mxu0 0.0
      %2212 = vmatpush1.msra.mxu0 0.0
      %2213 = vmatprep.subr.mxu0 0.0
      %2214 = vmatpush1.msra.mxu0 0.0
      %2215 = vmatprep.mubr.f32.mxu0 0.0
      %2216 = vmatmul.mubr.f32.gmra.mrb[0].mxu0 %v2149
      %v2217 = vpop.f32.mrb[0].mxu0
      %v2218 = vadd.f32 %v2146, %v2217
      %v2219 = vpop.f32.mrb[0].mxu0
      %2220 = vdwg.mxu0
      %2222 = vrot.lane.b32.xlu0 %v2218, 96
      %v2223 = vpop.permute.xlu0 %2222
      %v2224 = vsel %vm731, %v2218, 0
      %v2226 = vsel %vm731, %v2223, 0
      %2228 = vmatprep.subr.mxu0 0.0
      %2229 = vmatpush1.xpose.msra.mxu0 %v2226
      %2230 = vmatprep.subr.mxu0 0.0
      %2231 = vmatpush1.xpose.msra.mxu0 0.0
      %2232 = vmatprep.subr.mxu0 0.0
      %2233 = vmatpush1.xpose.msra.mxu0 0.0
      %2234 = vmatprep.subr.mxu0 0.0
      %2235 = vmatpush1.xpose.msra.mxu0 0.0
      %2236 = vmatprep.subr.mxu0 0.0
      %2237 = vmatpush1.xpose.msra.mxu0 0.0
      %2238 = vmatprep.subr.mxu0 0.0
      %2239 = vmatpush1.xpose.msra.mxu0 0.0
      %2240 = vmatprep.subr.mxu0 0.0
      %2241 = vmatpush1.xpose.msra.mxu0 0.0
      %2242 = vmatprep.subr.mxu0 0.0
      %2243 = vmatpush1.xpose.msra.mxu0 0.0
      %2244 = vmatprep.subr.mxu0 0.0
      %2245 = vmatpush1.xpose.msra.mxu0 0.0
      %2246 = vmatprep.subr.mxu0 0.0
      %2247 = vmatpush1.xpose.msra.mxu0 0.0
      %2248 = vmatprep.subr.mxu0 0.0
      %2249 = vmatpush1.xpose.msra.mxu0 0.0
      %2250 = vmatprep.subr.mxu0 0.0
      %2251 = vmatpush1.xpose.msra.mxu0 0.0
      %2252 = vmatprep.subr.mxu0 0.0
      %2253 = vmatpush1.xpose.msra.mxu0 0.0
      %2254 = vmatprep.subr.mxu0 0.0
      %2255 = vmatpush1.xpose.msra.mxu0 0.0
      %2256 = vmatprep.subr.mxu0 0.0
      %2257 = vmatpush1.xpose.msra.mxu0 0.0
      %2258 = vmatprep.subr.mxu0 0.0
      %2259 = vmatpush1.xpose.msra.mxu0 0.0
      %2260 = vmatprep.subr.mxu0 0.0
      %2261 = vmatpush1.xpose.msra.mxu0 0.0
      %2262 = vmatprep.subr.mxu0 0.0
      %2263 = vmatpush1.xpose.msra.mxu0 0.0
      %2264 = vmatprep.subr.mxu0 0.0
      %2265 = vmatpush1.xpose.msra.mxu0 0.0
      %2266 = vmatprep.subr.mxu0 0.0
      %2267 = vmatpush1.xpose.msra.mxu0 0.0
      %2268 = vmatprep.subr.mxu0 0.0
      %2269 = vmatpush1.xpose.msra.mxu0 0.0
      %2270 = vmatprep.subr.mxu0 0.0
      %2271 = vmatpush1.xpose.msra.mxu0 0.0
      %2272 = vmatprep.subr.mxu0 0.0
      %2273 = vmatpush1.xpose.msra.mxu0 0.0
      %2274 = vmatprep.subr.mxu0 0.0
      %2275 = vmatpush1.xpose.msra.mxu0 0.0
      %2276 = vmatprep.subr.mxu0 0.0
      %2277 = vmatpush1.xpose.msra.mxu0 0.0
      %2278 = vmatprep.subr.mxu0 0.0
      %2279 = vmatpush1.xpose.msra.mxu0 0.0
      %2280 = vmatprep.subr.mxu0 0.0
      %2281 = vmatpush1.xpose.msra.mxu0 0.0
      %2282 = vmatprep.subr.mxu0 0.0
      %2283 = vmatpush1.xpose.msra.mxu0 0.0
      %2284 = vmatprep.subr.mxu0 0.0
      %2285 = vmatpush1.xpose.msra.mxu0 0.0
      %2286 = vmatprep.subr.mxu0 0.0
      %2287 = vmatpush1.xpose.msra.mxu0 0.0
      %2288 = vmatprep.subr.mxu0 0.0
      %2289 = vmatpush1.xpose.msra.mxu0 0.0
      %2290 = vmatprep.subr.mxu0 0.0
      %2291 = vmatpush1.xpose.msra.mxu0 0.0
      %2292 = vmatprep.mubr.f32.mxu0 0.0
      %2293 = vmatmul.mubr.f32.gmra.mrb[0].mxu0 %v2224
      %v2294 = vpop.f32.mrb[0].mxu0
      %v2295 = vadd.f32 0.0, %v2294
      %v2296 = vpop.f32.mrb[0].mxu0
      %2297 = vdwg.mxu0
      %v2298 = vmul.f32 %v2295, 0.35355338
      %v2299 = vadd.f32 %v2298, %v1199
      %v2300 = vsel %vm731, %v2299, -inf
      %2301 = vmax.xlane.f32.xlu0 %v2300
      %v2302 = vpop.xlane.xlu0 %2301
      %v2303 = vsub.f32 %v2299, %v2302
      %v2304 = vmul.f32 %v2303, 1.442695
      %v2305 = vpow.pop %v2304
      %v2306 = vsel %vm731, %v2305, 0.0
      %2307 = vadd.xlane.f32.xlu0 %v2306
      %v2308 = vpop.xlane.xlu0 %2307
      %v2309 = vrcp.pop %v2308
      %v2310 = vmul.f32 %v2305, %v2309
      %2311 = vrot.lane.b32.xlu0 %v2218, 64
      %v2312 = vpop.permute.xlu0 %2311
      %v2315 = vsel %vm731, %v2310, 0
      %2317 = vmatprep.subr.mxu0 0.0
      %2318 = vmatpush1.msra.mxu0 %v2312
      %2319 = vmatprep.subr.mxu0 0.0
      %2320 = vmatpush1.msra.mxu0 0.0
      %2321 = vmatprep.subr.mxu0 0.0
      %2322 = vmatpush1.msra.mxu0 0.0
      %2323 = vmatprep.subr.mxu0 0.0
      %2324 = vmatpush1.msra.mxu0 0.0
      %2325 = vmatprep.subr.mxu0 0.0
      %2326 = vmatpush1.msra.mxu0 0.0
      %2327 = vmatprep.subr.mxu0 0.0
      %2328 = vmatpush1.msra.mxu0 0.0
      %2329 = vmatprep.subr.mxu0 0.0
      %2330 = vmatpush1.msra.mxu0 0.0
      %2331 = vmatprep.subr.mxu0 0.0
      %2332 = vmatpush1.msra.mxu0 0.0
      %2333 = vmatprep.subr.mxu0 0.0
      %2334 = vmatpush1.msra.mxu0 0.0
      %2335 = vmatprep.subr.mxu0 0.0
      %2336 = vmatpush1.msra.mxu0 0.0
      %2337 = vmatprep.subr.mxu0 0.0
      %2338 = vmatpush1.msra.mxu0 0.0
      %2339 = vmatprep.subr.mxu0 0.0
      %2340 = vmatpush1.msra.mxu0 0.0
      %2341 = vmatprep.subr.mxu0 0.0
      %2342 = vmatpush1.msra.mxu0 0.0
      %2343 = vmatprep.subr.mxu0 0.0
      %2344 = vmatpush1.msra.mxu0 0.0
      %2345 = vmatprep.subr.mxu0 0.0
      %2346 = vmatpush1.msra.mxu0 0.0
      %2347 = vmatprep.subr.mxu0 0.0
      %2348 = vmatpush1.msra.mxu0 0.0
      %2349 = vmatprep.subr.mxu0 0.0
      %2350 = vmatpush1.msra.mxu0 0.0
      %2351 = vmatprep.subr.mxu0 0.0
      %2352 = vmatpush1.msra.mxu0 0.0
      %2353 = vmatprep.subr.mxu0 0.0
      %2354 = vmatpush1.msra.mxu0 0.0
      %2355 = vmatprep.subr.mxu0 0.0
      %2356 = vmatpush1.msra.mxu0 0.0
      %2357 = vmatprep.subr.mxu0 0.0
      %2358 = vmatpush1.msra.mxu0 0.0
      %2359 = vmatprep.subr.mxu0 0.0
      %2360 = vmatpush1.msra.mxu0 0.0
      %2361 = vmatprep.subr.mxu0 0.0
      %2362 = vmatpush1.msra.mxu0 0.0
      %2363 = vmatprep.subr.mxu0 0.0
      %2364 = vmatpush1.msra.mxu0 0.0
      %2365 = vmatprep.subr.mxu0 0.0
      %2366 = vmatpush1.msra.mxu0 0.0
      %2367 = vmatprep.subr.mxu0 0.0
      %2368 = vmatpush1.msra.mxu0 0.0
      %2369 = vmatprep.subr.mxu0 0.0
      %2370 = vmatpush1.msra.mxu0 0.0
      %2371 = vmatprep.subr.mxu0 0.0
      %2372 = vmatpush1.msra.mxu0 0.0
      %2373 = vmatprep.subr.mxu0 0.0
      %2374 = vmatpush1.msra.mxu0 0.0
      %2375 = vmatprep.subr.mxu0 0.0
      %2376 = vmatpush1.msra.mxu0 0.0
      %2377 = vmatprep.subr.mxu0 0.0
      %2378 = vmatpush1.msra.mxu0 0.0
      %2379 = vmatprep.subr.mxu0 0.0
      %2380 = vmatpush1.msra.mxu0 0.0
      %2381 = vmatprep.mubr.f32.mxu0 0.0
      %2382 = vmatmul.mubr.f32.gmra.mrb[0].mxu0 %v2315
      %v2383 = vpop.f32.mrb[0].mxu0
      %v2384 = vadd.f32 0.0, %v2383
      %v2385 = vpop.f32.mrb[0].mxu0
      %2386 = vdwg.mxu0
      %2387 = vst.msk [vmem:[#allocation2] sm:$0xff] %vm731, %v2384
      %2388 = vrot.lane.b32.xlu0 %v2218, 120
      %v2389 = vpop.permute.xlu0 %2388
      %2390 = vrot.lane.b32.xlu0 %v2218, 88
      %v2391 = vpop.permute.xlu0 %2390
      %v2392 = vsel %vm731, %v2389, 0
      %v2394 = vsel %vm731, %v2391, 0
      %2396 = vmatprep.subr.mxu0 0.0
      %2397 = vmatpush1.xpose.msra.mxu0 %v2394
      %2398 = vmatprep.subr.mxu0 0.0
      %2399 = vmatpush1.xpose.msra.mxu0 0.0
      %2400 = vmatprep.subr.mxu0 0.0
      %2401 = vmatpush1.xpose.msra.mxu0 0.0
      %2402 = vmatprep.subr.mxu0 0.0
      %2403 = vmatpush1.xpose.msra.mxu0 0.0
      %2404 = vmatprep.subr.mxu0 0.0
      %2405 = vmatpush1.xpose.msra.mxu0 0.0
      %2406 = vmatprep.subr.mxu0 0.0
      %2407 = vmatpush1.xpose.msra.mxu0 0.0
      %2408 = vmatprep.subr.mxu0 0.0
      %2409 = vmatpush1.xpose.msra.mxu0 0.0
      %2410 = vmatprep.subr.mxu0 0.0
      %2411 = vmatpush1.xpose.msra.mxu0 0.0
      %2412 = vmatprep.subr.mxu0 0.0
      %2413 = vmatpush1.xpose.msra.mxu0 0.0
      %2414 = vmatprep.subr.mxu0 0.0
      %2415 = vmatpush1.xpose.msra.mxu0 0.0
      %2416 = vmatprep.subr.mxu0 0.0
      %2417 = vmatpush1.xpose.msra.mxu0 0.0
      %2418 = vmatprep.subr.mxu0 0.0
      %2419 = vmatpush1.xpose.msra.mxu0 0.0
      %2420 = vmatprep.subr.mxu0 0.0
      %2421 = vmatpush1.xpose.msra.mxu0 0.0
      %2422 = vmatprep.subr.mxu0 0.0
      %2423 = vmatpush1.xpose.msra.mxu0 0.0
      %2424 = vmatprep.subr.mxu0 0.0
      %2425 = vmatpush1.xpose.msra.mxu0 0.0
      %2426 = vmatprep.subr.mxu0 0.0
      %2427 = vmatpush1.xpose.msra.mxu0 0.0
      %2428 = vmatprep.subr.mxu0 0.0
      %2429 = vmatpush1.xpose.msra.mxu0 0.0
      %2430 = vmatprep.subr.mxu0 0.0
      %2431 = vmatpush1.xpose.msra.mxu0 0.0
      %2432 = vmatprep.subr.mxu0 0.0
      %2433 = vmatpush1.xpose.msra.mxu0 0.0
      %2434 = vmatprep.subr.mxu0 0.0
      %2435 = vmatpush1.xpose.msra.mxu0 0.0
      %2436 = vmatprep.subr.mxu0 0.0
      %2437 = vmatpush1.xpose.msra.mxu0 0.0
      %2438 = vmatprep.subr.mxu0 0.0
      %2439 = vmatpush1.xpose.msra.mxu0 0.0
      %2440 = vmatprep.subr.mxu0 0.0
      %2441 = vmatpush1.xpose.msra.mxu0 0.0
      %2442 = vmatprep.subr.mxu0 0.0
      %2443 = vmatpush1.xpose.msra.mxu0 0.0
      %2444 = vmatprep.subr.mxu0 0.0
      %2445 = vmatpush1.xpose.msra.mxu0 0.0
      %2446 = vmatprep.subr.mxu0 0.0
      %2447 = vmatpush1.xpose.msra.mxu0 0.0
      %2448 = vmatprep.subr.mxu0 0.0
      %2449 = vmatpush1.xpose.msra.mxu0 0.0
      %2450 = vmatprep.subr.mxu0 0.0
      %2451 = vmatpush1.xpose.msra.mxu0 0.0
      %2452 = vmatprep.subr.mxu0 0.0
      %2453 = vmatpush1.xpose.msra.mxu0 0.0
      %2454 = vmatprep.subr.mxu0 0.0
      %2455 = vmatpush1.xpose.msra.mxu0 0.0
      %2456 = vmatprep.subr.mxu0 0.0
      %2457 = vmatpush1.xpose.msra.mxu0 0.0
      %2458 = vmatprep.subr.mxu0 0.0
      %2459 = vmatpush1.xpose.msra.mxu0 0.0
      %2460 = vmatprep.mubr.f32.mxu0 0.0
      %2461 = vmatmul.mubr.f32.gmra.mrb[0].mxu0 %v2392
      %v2462 = vpop.f32.mrb[0].mxu0
      %v2463 = vadd.f32 0.0, %v2462
      %v2464 = vpop.f32.mrb[0].mxu0
      %2465 = vdwg.mxu0
      %v2466 = vmul.f32 %v2463, 0.35355338
      %v2467 = vadd.f32 %v2466, %v1199
      %v2468 = vsel %vm731, %v2467, -inf
      %2469 = vmax.xlane.f32.xlu0 %v2468
      %v2470 = vpop.xlane.xlu0 %2469
      %v2471 = vsub.f32 %v2467, %v2470
      %v2472 = vmul.f32 %v2471, 1.442695
      %v2473 = vpow.pop %v2472
      %v2474 = vsel %vm731, %v2473, 0.0
      %2475 = vadd.xlane.f32.xlu0 %v2474
      %v2476 = vpop.xlane.xlu0 %2475
      %v2477 = vrcp.pop %v2476
      %v2478 = vmul.f32 %v2473, %v2477
      %2479 = vrot.lane.b32.xlu0 %v2218, 56
      %v2480 = vpop.permute.xlu0 %2479
      %v2483 = vsel %vm731, %v2478, 0
      %2485 = vmatprep.subr.mxu0 0.0
      %2486 = vmatpush1.msra.mxu0 %v2480
      %2487 = vmatprep.subr.mxu0 0.0
      %2488 = vmatpush1.msra.mxu0 0.0
      %2489 = vmatprep.subr.mxu0 0.0
      %2490 = vmatpush1.msra.mxu0 0.0
      %2491 = vmatprep.subr.mxu0 0.0
      %2492 = vmatpush1.msra.mxu0 0.0
      %2493 = vmatprep.subr.mxu0 0.0
      %2494 = vmatpush1.msra.mxu0 0.0
      %2495 = vmatprep.subr.mxu0 0.0
      %2496 = vmatpush1.msra.mxu0 0.0
      %2497 = vmatprep.subr.mxu0 0.0
      %2498 = vmatpush1.msra.mxu0 0.0
      %2499 = vmatprep.subr.mxu0 0.0
      %2500 = vmatpush1.msra.mxu0 0.0
      %2501 = vmatprep.subr.mxu0 0.0
      %2502 = vmatpush1.msra.mxu0 0.0
      %2503 = vmatprep.subr.mxu0 0.0
      %2504 = vmatpush1.msra.mxu0 0.0
      %2505 = vmatprep.subr.mxu0 0.0
      %2506 = vmatpush1.msra.mxu0 0.0
      %2507 = vmatprep.subr.mxu0 0.0
      %2508 = vmatpush1.msra.mxu0 0.0
      %2509 = vmatprep.subr.mxu0 0.0
      %2510 = vmatpush1.msra.mxu0 0.0
      %2511 = vmatprep.subr.mxu0 0.0
      %2512 = vmatpush1.msra.mxu0 0.0
      %2513 = vmatprep.subr.mxu0 0.0
      %2514 = vmatpush1.msra.mxu0 0.0
      %2515 = vmatprep.subr.mxu0 0.0
      %2516 = vmatpush1.msra.mxu0 0.0
      %2517 = vmatprep.subr.mxu0 0.0
      %2518 = vmatpush1.msra.mxu0 0.0
      %2519 = vmatprep.subr.mxu0 0.0
      %2520 = vmatpush1.msra.mxu0 0.0
      %2521 = vmatprep.subr.mxu0 0.0
      %2522 = vmatpush1.msra.mxu0 0.0
      %2523 = vmatprep.subr.mxu0 0.0
      %2524 = vmatpush1.msra.mxu0 0.0
      %2525 = vmatprep.subr.mxu0 0.0
      %2526 = vmatpush1.msra.mxu0 0.0
      %2527 = vmatprep.subr.mxu0 0.0
      %2528 = vmatpush1.msra.mxu0 0.0
      %2529 = vmatprep.subr.mxu0 0.0
      %2530 = vmatpush1.msra.mxu0 0.0
      %2531 = vmatprep.subr.mxu0 0.0
      %2532 = vmatpush1.msra.mxu0 0.0
      %2533 = vmatprep.subr.mxu0 0.0
      %2534 = vmatpush1.msra.mxu0 0.0
      %2535 = vmatprep.subr.mxu0 0.0
      %2536 = vmatpush1.msra.mxu0 0.0
      %2537 = vmatprep.subr.mxu0 0.0
      %2538 = vmatpush1.msra.mxu0 0.0
      %2539 = vmatprep.subr.mxu0 0.0
      %2540 = vmatpush1.msra.mxu0 0.0
      %2541 = vmatprep.subr.mxu0 0.0
      %2542 = vmatpush1.msra.mxu0 0.0
      %2543 = vmatprep.subr.mxu0 0.0
      %2544 = vmatpush1.msra.mxu0 0.0
      %2545 = vmatprep.subr.mxu0 0.0
      %2546 = vmatpush1.msra.mxu0 0.0
      %2547 = vmatprep.subr.mxu0 0.0
      %2548 = vmatpush1.msra.mxu0 0.0
      %2549 = vmatprep.mubr.f32.mxu0 0.0
      %2550 = vmatmul.mubr.f32.gmra.mrb[0].mxu0 %v2483
      %v2551 = vpop.f32.mrb[0].mxu0
      %v2552 = vadd.f32 0.0, %v2551
      %v2553 = vpop.f32.mrb[0].mxu0
      %2554 = vdwg.mxu0
      %2556 = vrot.lane.b32.xlu0 %v2552, 8
      %v2557 = vpop.permute.xlu0 %2556
      %2559 = vst.msk [vmem:[#allocation2] sm:$0xff] %vm1461, %v2557
      %2560 = vrot.lane.b32.xlu0 %v2218, 112
      %v2561 = vpop.permute.xlu0 %2560
      %2562 = vrot.lane.b32.xlu0 %v2218, 80
      %v2563 = vpop.permute.xlu0 %2562
      %v2564 = vsel %vm731, %v2561, 0
      %v2566 = vsel %vm731, %v2563, 0
      %2568 = vmatprep.subr.mxu0 0.0
      %2569 = vmatpush1.xpose.msra.mxu0 %v2566
      %2570 = vmatprep.subr.mxu0 0.0
      %2571 = vmatpush1.xpose.msra.mxu0 0.0
      %2572 = vmatprep.subr.mxu0 0.0
      %2573 = vmatpush1.xpose.msra.mxu0 0.0
      %2574 = vmatprep.subr.mxu0 0.0
      %2575 = vmatpush1.xpose.msra.mxu0 0.0
      %2576 = vmatprep.subr.mxu0 0.0
      %2577 = vmatpush1.xpose.msra.mxu0 0.0
      %2578 = vmatprep.subr.mxu0 0.0
      %2579 = vmatpush1.xpose.msra.mxu0 0.0
      %2580 = vmatprep.subr.mxu0 0.0
      %2581 = vmatpush1.xpose.msra.mxu0 0.0
      %2582 = vmatprep.subr.mxu0 0.0
      %2583 = vmatpush1.xpose.msra.mxu0 0.0
      %2584 = vmatprep.subr.mxu0 0.0
      %2585 = vmatpush1.xpose.msra.mxu0 0.0
      %2586 = vmatprep.subr.mxu0 0.0
      %2587 = vmatpush1.xpose.msra.mxu0 0.0
      %2588 = vmatprep.subr.mxu0 0.0
      %2589 = vmatpush1.xpose.msra.mxu0 0.0
      %2590 = vmatprep.subr.mxu0 0.0
      %2591 = vmatpush1.xpose.msra.mxu0 0.0
      %2592 = vmatprep.subr.mxu0 0.0
      %2593 = vmatpush1.xpose.msra.mxu0 0.0
      %2594 = vmatprep.subr.mxu0 0.0
      %2595 = vmatpush1.xpose.msra.mxu0 0.0
      %2596 = vmatprep.subr.mxu0 0.0
      %2597 = vmatpush1.xpose.msra.mxu0 0.0
      %2598 = vmatprep.subr.mxu0 0.0
      %2599 = vmatpush1.xpose.msra.mxu0 0.0
      %2600 = vmatprep.subr.mxu0 0.0
      %2601 = vmatpush1.xpose.msra.mxu0 0.0
      %2602 = vmatprep.subr.mxu0 0.0
      %2603 = vmatpush1.xpose.msra.mxu0 0.0
      %2604 = vmatprep.subr.mxu0 0.0
      %2605 = vmatpush1.xpose.msra.mxu0 0.0
      %2606 = vmatprep.subr.mxu0 0.0
      %2607 = vmatpush1.xpose.msra.mxu0 0.0
      %2608 = vmatprep.subr.mxu0 0.0
      %2609 = vmatpush1.xpose.msra.mxu0 0.0
      %2610 = vmatprep.subr.mxu0 0.0
      %2611 = vmatpush1.xpose.msra.mxu0 0.0
      %2612 = vmatprep.subr.mxu0 0.0
      %2613 = vmatpush1.xpose.msra.mxu0 0.0
      %2614 = vmatprep.subr.mxu0 0.0
      %2615 = vmatpush1.xpose.msra.mxu0 0.0
      %2616 = vmatprep.subr.mxu0 0.0
      %2617 = vmatpush1.xpose.msra.mxu0 0.0
      %2618 = vmatprep.subr.mxu0 0.0
      %2619 = vmatpush1.xpose.msra.mxu0 0.0
      %2620 = vmatprep.subr.mxu0 0.0
      %2621 = vmatpush1.xpose.msra.mxu0 0.0
      %2622 = vmatprep.subr.mxu0 0.0
      %2623 = vmatpush1.xpose.msra.mxu0 0.0
      %2624 = vmatprep.subr.mxu0 0.0
      %2625 = vmatpush1.xpose.msra.mxu0 0.0
      %2626 = vmatprep.subr.mxu0 0.0
      %2627 = vmatpush1.xpose.msra.mxu0 0.0
      %2628 = vmatprep.subr.mxu0 0.0
      %2629 = vmatpush1.xpose.msra.mxu0 0.0
      %2630 = vmatprep.subr.mxu0 0.0
      %2631 = vmatpush1.xpose.msra.mxu0 0.0
      %2632 = vmatprep.mubr.f32.mxu0 0.0
      %2633 = vmatmul.mubr.f32.gmra.mrb[0].mxu0 %v2564
      %v2634 = vpop.f32.mrb[0].mxu0
      %v2635 = vadd.f32 0.0, %v2634
      %v2636 = vpop.f32.mrb[0].mxu0
      %2637 = vdwg.mxu0
      %v2638 = vmul.f32 %v2635, 0.35355338
      %v2639 = vadd.f32 %v2638, %v1199
      %v2640 = vsel %vm731, %v2639, -inf
      %2641 = vmax.xlane.f32.xlu0 %v2640
      %v2642 = vpop.xlane.xlu0 %2641
      %v2643 = vsub.f32 %v2639, %v2642
      %v2644 = vmul.f32 %v2643, 1.442695
      %v2645 = vpow.pop %v2644
      %v2646 = vsel %vm731, %v2645, 0.0
      %2647 = vadd.xlane.f32.xlu0 %v2646
      %v2648 = vpop.xlane.xlu0 %2647
      %v2649 = vrcp.pop %v2648
      %v2650 = vmul.f32 %v2645, %v2649
      %2651 = vrot.lane.b32.xlu0 %v2218, 48
      %v2652 = vpop.permute.xlu0 %2651
      %v2655 = vsel %vm731, %v2650, 0
      %2657 = vmatprep.subr.mxu0 0.0
      %2658 = vmatpush1.msra.mxu0 %v2652
      %2659 = vmatprep.subr.mxu0 0.0
      %2660 = vmatpush1.msra.mxu0 0.0
      %2661 = vmatprep.subr.mxu0 0.0
      %2662 = vmatpush1.msra.mxu0 0.0
      %2663 = vmatprep.subr.mxu0 0.0
      %2664 = vmatpush1.msra.mxu0 0.0
      %2665 = vmatprep.subr.mxu0 0.0
      %2666 = vmatpush1.msra.mxu0 0.0
      %2667 = vmatprep.subr.mxu0 0.0
      %2668 = vmatpush1.msra.mxu0 0.0
      %2669 = vmatprep.subr.mxu0 0.0
      %2670 = vmatpush1.msra.mxu0 0.0
      %2671 = vmatprep.subr.mxu0 0.0
      %2672 = vmatpush1.msra.mxu0 0.0
      %2673 = vmatprep.subr.mxu0 0.0
      %2674 = vmatpush1.msra.mxu0 0.0
      %2675 = vmatprep.subr.mxu0 0.0
      %2676 = vmatpush1.msra.mxu0 0.0
      %2677 = vmatprep.subr.mxu0 0.0
      %2678 = vmatpush1.msra.mxu0 0.0
      %2679 = vmatprep.subr.mxu0 0.0
      %2680 = vmatpush1.msra.mxu0 0.0
      %2681 = vmatprep.subr.mxu0 0.0
      %2682 = vmatpush1.msra.mxu0 0.0
      %2683 = vmatprep.subr.mxu0 0.0
      %2684 = vmatpush1.msra.mxu0 0.0
      %2685 = vmatprep.subr.mxu0 0.0
      %2686 = vmatpush1.msra.mxu0 0.0
      %2687 = vmatprep.subr.mxu0 0.0
      %2688 = vmatpush1.msra.mxu0 0.0
      %2689 = vmatprep.subr.mxu0 0.0
      %2690 = vmatpush1.msra.mxu0 0.0
      %2691 = vmatprep.subr.mxu0 0.0
      %2692 = vmatpush1.msra.mxu0 0.0
      %2693 = vmatprep.subr.mxu0 0.0
      %2694 = vmatpush1.msra.mxu0 0.0
      %2695 = vmatprep.subr.mxu0 0.0
      %2696 = vmatpush1.msra.mxu0 0.0
      %2697 = vmatprep.subr.mxu0 0.0
      %2698 = vmatpush1.msra.mxu0 0.0
      %2699 = vmatprep.subr.mxu0 0.0
      %2700 = vmatpush1.msra.mxu0 0.0
      %2701 = vmatprep.subr.mxu0 0.0
      %2702 = vmatpush1.msra.mxu0 0.0
      %2703 = vmatprep.subr.mxu0 0.0
      %2704 = vmatpush1.msra.mxu0 0.0
      %2705 = vmatprep.subr.mxu0 0.0
      %2706 = vmatpush1.msra.mxu0 0.0
      %2707 = vmatprep.subr.mxu0 0.0
      %2708 = vmatpush1.msra.mxu0 0.0
      %2709 = vmatprep.subr.mxu0 0.0
      %2710 = vmatpush1.msra.mxu0 0.0
      %2711 = vmatprep.subr.mxu0 0.0
      %2712 = vmatpush1.msra.mxu0 0.0
      %2713 = vmatprep.subr.mxu0 0.0
      %2714 = vmatpush1.msra.mxu0 0.0
      %2715 = vmatprep.subr.mxu0 0.0
      %2716 = vmatpush1.msra.mxu0 0.0
      %2717 = vmatprep.subr.mxu0 0.0
      %2718 = vmatpush1.msra.mxu0 0.0
      %2719 = vmatprep.subr.mxu0 0.0
      %2720 = vmatpush1.msra.mxu0 0.0
      %2721 = vmatprep.mubr.f32.mxu0 0.0
      %2722 = vmatmul.mubr.f32.gmra.mrb[0].mxu0 %v2655
      %v2723 = vpop.f32.mrb[0].mxu0
      %v2724 = vadd.f32 0.0, %v2723
      %v2725 = vpop.f32.mrb[0].mxu0
      %2726 = vdwg.mxu0
      %2728 = vrot.lane.b32.xlu0 %v2724, 16
      %v2729 = vpop.permute.xlu0 %2728
      %2731 = vst.msk [vmem:[#allocation2] sm:$0xff] %vm1634, %v2729
      %2732 = vrot.lane.b32.xlu0 %v2218, 104
      %v2733 = vpop.permute.xlu0 %2732
      %2734 = vrot.lane.b32.xlu0 %v2218, 72
      %v2735 = vpop.permute.xlu0 %2734
      %v2736 = vsel %vm731, %v2733, 0
      %v2738 = vsel %vm731, %v2735, 0
      %2740 = vmatprep.subr.mxu0 0.0
      %2741 = vmatpush1.xpose.msra.mxu0 %v2738
      %2742 = vmatprep.subr.mxu0 0.0
      %2743 = vmatpush1.xpose.msra.mxu0 0.0
      %2744 = vmatprep.subr.mxu0 0.0
      %2745 = vmatpush1.xpose.msra.mxu0 0.0
      %2746 = vmatprep.subr.mxu0 0.0
      %2747 = vmatpush1.xpose.msra.mxu0 0.0
      %2748 = vmatprep.subr.mxu0 0.0
      %2749 = vmatpush1.xpose.msra.mxu0 0.0
      %2750 = vmatprep.subr.mxu0 0.0
      %2751 = vmatpush1.xpose.msra.mxu0 0.0
      %2752 = vmatprep.subr.mxu0 0.0
      %2753 = vmatpush1.xpose.msra.mxu0 0.0
      %2754 = vmatprep.subr.mxu0 0.0
      %2755 = vmatpush1.xpose.msra.mxu0 0.0
      %2756 = vmatprep.subr.mxu0 0.0
      %2757 = vmatpush1.xpose.msra.mxu0 0.0
      %2758 = vmatprep.subr.mxu0 0.0
      %2759 = vmatpush1.xpose.msra.mxu0 0.0
      %2760 = vmatprep.subr.mxu0 0.0
      %2761 = vmatpush1.xpose.msra.mxu0 0.0
      %2762 = vmatprep.subr.mxu0 0.0
      %2763 = vmatpush1.xpose.msra.mxu0 0.0
      %2764 = vmatprep.subr.mxu0 0.0
      %2765 = vmatpush1.xpose.msra.mxu0 0.0
      %2766 = vmatprep.subr.mxu0 0.0
      %2767 = vmatpush1.xpose.msra.mxu0 0.0
      %2768 = vmatprep.subr.mxu0 0.0
      %2769 = vmatpush1.xpose.msra.mxu0 0.0
      %2770 = vmatprep.subr.mxu0 0.0
      %2771 = vmatpush1.xpose.msra.mxu0 0.0
      %2772 = vmatprep.subr.mxu0 0.0
      %2773 = vmatpush1.xpose.msra.mxu0 0.0
      %2774 = vmatprep.subr.mxu0 0.0
      %2775 = vmatpush1.xpose.msra.mxu0 0.0
      %2776 = vmatprep.subr.mxu0 0.0
      %2777 = vmatpush1.xpose.msra.mxu0 0.0
      %2778 = vmatprep.subr.mxu0 0.0
      %2779 = vmatpush1.xpose.msra.mxu0 0.0
      %2780 = vmatprep.subr.mxu0 0.0
      %2781 = vmatpush1.xpose.msra.mxu0 0.0
      %2782 = vmatprep.subr.mxu0 0.0
      %2783 = vmatpush1.xpose.msra.mxu0 0.0
      %2784 = vmatprep.subr.mxu0 0.0
      %2785 = vmatpush1.xpose.msra.mxu0 0.0
      %2786 = vmatprep.subr.mxu0 0.0
      %2787 = vmatpush1.xpose.msra.mxu0 0.0
      %2788 = vmatprep.subr.mxu0 0.0
      %2789 = vmatpush1.xpose.msra.mxu0 0.0
      %2790 = vmatprep.subr.mxu0 0.0
      %2791 = vmatpush1.xpose.msra.mxu0 0.0
      %2792 = vmatprep.subr.mxu0 0.0
      %2793 = vmatpush1.xpose.msra.mxu0 0.0
      %2794 = vmatprep.subr.mxu0 0.0
      %2795 = vmatpush1.xpose.msra.mxu0 0.0
      %2796 = vmatprep.subr.mxu0 0.0
      %2797 = vmatpush1.xpose.msra.mxu0 0.0
      %2798 = vmatprep.subr.mxu0 0.0
      %2799 = vmatpush1.xpose.msra.mxu0 0.0
      %2800 = vmatprep.subr.mxu0 0.0
      %2801 = vmatpush1.xpose.msra.mxu0 0.0
      %2802 = vmatprep.subr.mxu0 0.0
      %2803 = vmatpush1.xpose.msra.mxu0 0.0
      %2804 = vmatprep.mubr.f32.mxu0 0.0
      %2805 = vmatmul.mubr.f32.gmra.mrb[0].mxu0 %v2736
      %v2806 = vpop.f32.mrb[0].mxu0
      %v2807 = vadd.f32 0.0, %v2806
      %v2808 = vpop.f32.mrb[0].mxu0
      %2809 = vdwg.mxu0
      %v2810 = vmul.f32 %v2807, 0.35355338
      %v2811 = vadd.f32 %v2810, %v1199
      %v2812 = vsel %vm731, %v2811, -inf
      %2813 = vmax.xlane.f32.xlu0 %v2812
      %v2814 = vpop.xlane.xlu0 %2813
      %v2815 = vsub.f32 %v2811, %v2814
      %v2816 = vmul.f32 %v2815, 1.442695
      %v2817 = vpow.pop %v2816
      %v2818 = vsel %vm731, %v2817, 0.0
      %2819 = vadd.xlane.f32.xlu0 %v2818
      %v2820 = vpop.xlane.xlu0 %2819
      %v2821 = vrcp.pop %v2820
      %v2822 = vmul.f32 %v2817, %v2821
      %2823 = vrot.lane.b32.xlu0 %v2218, 40
      %v2824 = vpop.permute.xlu0 %2823
      %v2827 = vsel %vm731, %v2822, 0
      %2829 = vmatprep.subr.mxu0 0.0
      %2830 = vmatpush1.msra.mxu0 %v2824
      %2831 = vmatprep.subr.mxu0 0.0
      %2832 = vmatpush1.msra.mxu0 0.0
      %2833 = vmatprep.subr.mxu0 0.0
      %2834 = vmatpush1.msra.mxu0 0.0
      %2835 = vmatprep.subr.mxu0 0.0
      %2836 = vmatpush1.msra.mxu0 0.0
      %2837 = vmatprep.subr.mxu0 0.0
      %2838 = vmatpush1.msra.mxu0 0.0
      %2839 = vmatprep.subr.mxu0 0.0
      %2840 = vmatpush1.msra.mxu0 0.0
      %2841 = vmatprep.subr.mxu0 0.0
      %2842 = vmatpush1.msra.mxu0 0.0
      %2843 = vmatprep.subr.mxu0 0.0
      %2844 = vmatpush1.msra.mxu0 0.0
      %2845 = vmatprep.subr.mxu0 0.0
      %2846 = vmatpush1.msra.mxu0 0.0
      %2847 = vmatprep.subr.mxu0 0.0
      %2848 = vmatpush1.msra.mxu0 0.0
      %2849 = vmatprep.subr.mxu0 0.0
      %2850 = vmatpush1.msra.mxu0 0.0
      %2851 = vmatprep.subr.mxu0 0.0
      %2852 = vmatpush1.msra.mxu0 0.0
      %2853 = vmatprep.subr.mxu0 0.0
      %2854 = vmatpush1.msra.mxu0 0.0
      %2855 = vmatprep.subr.mxu0 0.0
      %2856 = vmatpush1.msra.mxu0 0.0
      %2857 = vmatprep.subr.mxu0 0.0
      %2858 = vmatpush1.msra.mxu0 0.0
      %2859 = vmatprep.subr.mxu0 0.0
      %2860 = vmatpush1.msra.mxu0 0.0
      %2861 = vmatprep.subr.mxu0 0.0
      %2862 = vmatpush1.msra.mxu0 0.0
      %2863 = vmatprep.subr.mxu0 0.0
      %2864 = vmatpush1.msra.mxu0 0.0
      %2865 = vmatprep.subr.mxu0 0.0
      %2866 = vmatpush1.msra.mxu0 0.0
      %2867 = vmatprep.subr.mxu0 0.0
      %2868 = vmatpush1.msra.mxu0 0.0
      %2869 = vmatprep.subr.mxu0 0.0
      %2870 = vmatpush1.msra.mxu0 0.0
      %2871 = vmatprep.subr.mxu0 0.0
      %2872 = vmatpush1.msra.mxu0 0.0
      %2873 = vmatprep.subr.mxu0 0.0
      %2874 = vmatpush1.msra.mxu0 0.0
      %2875 = vmatprep.subr.mxu0 0.0
      %2876 = vmatpush1.msra.mxu0 0.0
      %2877 = vmatprep.subr.mxu0 0.0
      %2878 = vmatpush1.msra.mxu0 0.0
      %2879 = vmatprep.subr.mxu0 0.0
      %2880 = vmatpush1.msra.mxu0 0.0
      %2881 = vmatprep.subr.mxu0 0.0
      %2882 = vmatpush1.msra.mxu0 0.0
      %2883 = vmatprep.subr.mxu0 0.0
      %2884 = vmatpush1.msra.mxu0 0.0
      %2885 = vmatprep.subr.mxu0 0.0
      %2886 = vmatpush1.msra.mxu0 0.0
      %2887 = vmatprep.subr.mxu0 0.0
      %2888 = vmatpush1.msra.mxu0 0.0
      %2889 = vmatprep.subr.mxu0 0.0
      %2890 = vmatpush1.msra.mxu0 0.0
      %2891 = vmatprep.subr.mxu0 0.0
      %2892 = vmatpush1.msra.mxu0 0.0
      %2893 = vmatprep.mubr.f32.mxu0 0.0
      %2894 = vmatmul.mubr.f32.gmra.mrb[0].mxu0 %v2827
      %v2895 = vpop.f32.mrb[0].mxu0
      %v2896 = vadd.f32 0.0, %v2895
      %v2897 = vpop.f32.mrb[0].mxu0
      %2898 = vdwg.mxu0
      %2900 = vrot.lane.b32.xlu0 %v2896, 24
      %v2901 = vpop.permute.xlu0 %2900
      %2903 = vst.msk [vmem:[#allocation2] sm:$0xff] %vm1807, %v2901
      %v2904 = vld [vmem:[#allocation2] sm:$0xff]
      %s2905 = scalar_lea.vmem %s9, 32
      %v2906 = vld [vmem:[%s2905] sm:$0xff]
      %v2907 = vld [vmem:[%s2905 + $0x8] sm:$0xff]
      %v2908 = vld [vmem:[%s2905 + $0x10] sm:$0xff]
      %v2909 = vld [vmem:[%s2905 + $0x18] sm:$0xff]
      %s2910 = scalar_lea.vmem %s10, 1
      %v2911 = vld [vmem:[%s2910] sm:$0x1]
      %v2913 = vlaneseq
      %v2914 = vshrl.u32 %v2913, 7
      %v2915 = vsub.s32 0, %v2914
      %v2916 = vrot.slane %v2911, %v2915
      %v2919 = vsel %vm999, %v2904, 0
      %2921 = vmatprep.subr.mxu0 0.0
      %2922 = vmatpush1.msra.mxu0 %v2906
      %2923 = vmatprep.subr.mxu0 0.0
      %2924 = vmatpush1.msra.mxu0 %v2907
      %2925 = vmatprep.subr.mxu0 0.0
      %2926 = vmatpush1.msra.mxu0 %v2908
      %2927 = vmatprep.subr.mxu0 0.0
      %2928 = vmatpush1.msra.mxu0 %v2909
      %2929 = vmatprep.subr.mxu0 0.0
      %2930 = vmatpush1.msra.mxu0 0.0
      %2931 = vmatprep.subr.mxu0 0.0
      %2932 = vmatpush1.msra.mxu0 0.0
      %2933 = vmatprep.subr.mxu0 0.0
      %2934 = vmatpush1.msra.mxu0 0.0
      %2935 = vmatprep.subr.mxu0 0.0
      %2936 = vmatpush1.msra.mxu0 0.0
      %2937 = vmatprep.subr.mxu0 0.0
      %2938 = vmatpush1.msra.mxu0 0.0
      %2939 = vmatprep.subr.mxu0 0.0
      %2940 = vmatpush1.msra.mxu0 0.0
      %2941 = vmatprep.subr.mxu0 0.0
      %2942 = vmatpush1.msra.mxu0 0.0
      %2943 = vmatprep.subr.mxu0 0.0
      %2944 = vmatpush1.msra.mxu0 0.0
      %2945 = vmatprep.subr.mxu0 0.0
      %2946 = vmatpush1.msra.mxu0 0.0
      %2947 = vmatprep.subr.mxu0 0.0
      %2948 = vmatpush1.msra.mxu0 0.0
      %2949 = vmatprep.subr.mxu0 0.0
      %2950 = vmatpush1.msra.mxu0 0.0
      %2951 = vmatprep.subr.mxu0 0.0
      %2952 = vmatpush1.msra.mxu0 0.0
      %2953 = vmatprep.subr.mxu0 0.0
      %2954 = vmatpush1.msra.mxu0 0.0
      %2955 = vmatprep.subr.mxu0 0.0
      %2956 = vmatpush1.msra.mxu0 0.0
      %2957 = vmatprep.subr.mxu0 0.0
      %2958 = vmatpush1.msra.mxu0 0.0
      %2959 = vmatprep.subr.mxu0 0.0
      %2960 = vmatpush1.msra.mxu0 0.0
      %2961 = vmatprep.subr.mxu0 0.0
      %2962 = vmatpush1.msra.mxu0 0.0
      %2963 = vmatprep.subr.mxu0 0.0
      %2964 = vmatpush1.msra.mxu0 0.0
      %2965 = vmatprep.subr.mxu0 0.0
      %2966 = vmatpush1.msra.mxu0 0.0
      %2967 = vmatprep.subr.mxu0 0.0
      %2968 = vmatpush1.msra.mxu0 0.0
      %2969 = vmatprep.subr.mxu0 0.0
      %2970 = vmatpush1.msra.mxu0 0.0
      %2971 = vmatprep.subr.mxu0 0.0
      %2972 = vmatpush1.msra.mxu0 0.0
      %2973 = vmatprep.subr.mxu0 0.0
      %2974 = vmatpush1.msra.mxu0 0.0
      %2975 = vmatprep.subr.mxu0 0.0
      %2976 = vmatpush1.msra.mxu0 0.0
      %2977 = vmatprep.subr.mxu0 0.0
      %2978 = vmatpush1.msra.mxu0 0.0
      %2979 = vmatprep.subr.mxu0 0.0
      %2980 = vmatpush1.msra.mxu0 0.0
      %2981 = vmatprep.subr.mxu0 0.0
      %2982 = vmatpush1.msra.mxu0 0.0
      %2983 = vmatprep.subr.mxu0 0.0
      %2984 = vmatpush1.msra.mxu0 0.0
      %2985 = vmatprep.mubr.f32.mxu0 0.0
      %2986 = vmatmul.mubr.f32.gmra.mrb[0].mxu0 %v2919
      %v2987 = vpop.f32.mrb[0].mxu0
      %v2988 = vadd.f32 %v2916, %v2987
      %v2989 = vpop.f32.mrb[0].mxu0
      %2990 = vdwg.mxu0
      %v2991 = vadd.f32 %v2988, %v2134
      %s2992 = scalar_lea.vmem %s11, 1
      %v2993 = vld [vmem:[%s2992] sm:$0x1]
      %s2994 = scalar_lea.vmem %s12, 1
      %v2995 = vld [vmem:[%s2994] sm:$0x1]
      %v2996 = vsel %vm999, %v2991, 0.0
      %2997 = vadd.xlane.f32.xlu0 %v2996
      %v2998 = vpop.xlane.xlu0 %2997
      %v2999 = vmul.f32 %v2998, %v1003
      %v3000 = vmul.f32 %v2991, %v2991
      %v3001 = vsel %vm999, %v3000, 0.0
      %3002 = vadd.xlane.f32.xlu0 %v3001
      %v3003 = vpop.xlane.xlu0 %3002
      %v3004 = vmul.f32 %v3003, %v1003
      %v3005 = vmul.f32 %v2999, %v2999
      %v3006 = vsub.f32 %v3004, %v3005
      %v3007 = vsub.f32 %v2991, %v2999
      %v3008 = vadd.f32 %v3006, 1e-05
      %v3009 = vrsqrt.pop %v3008
      %v3010 = vmul.f32 %v3007, %v3009
      %v3012 = vlaneseq
      %v3013 = vshrl.u32 %v3012, 7
      %v3014 = vsub.s32 0, %v3013
      %v3015 = vrot.slane %v2993, %v3014
      %v3017 = vmul.f32 %v3010, %v3015
      %v3019 = vlaneseq
      %v3020 = vshrl.u32 %v3019, 7
      %v3021 = vsub.s32 0, %v3020
      %v3022 = vrot.slane %v2995, %v3021
      %v3024 = vadd.f32 %v3017, %v3022
      %s3025 = scalar_lea.vmem %s13, 32
      %v3026 = vld [vmem:[%s3025] sm:$0xff]
      %v3027 = vld [vmem:[%s3025 + $0x8] sm:$0xff]
      %v3028 = vld [vmem:[%s3025 + $0x10] sm:$0xff]
      %v3029 = vld [vmem:[%s3025 + $0x18] sm:$0xff]
      %s3030 = scalar_lea.vmem %s14, 1
      %v3031 = vld [vmem:[%s3030] sm:$0x1]
      %v3033 = vlaneseq
      %v3034 = vshrl.u32 %v3033, 7
      %v3035 = vsub.s32 0, %v3034
      %v3036 = vrot.slane %v3031, %v3035
      %v3039 = vsel %vm999, %v3024, 0
      %3041 = vmatprep.subr.mxu0 0.0
      %3042 = vmatpush1.msra.mxu0 %v3026
      %3043 = vmatprep.subr.mxu0 0.0
      %3044 = vmatpush1.msra.mxu0 %v3027
      %3045 = vmatprep.subr.mxu0 0.0
      %3046 = vmatpush1.msra.mxu0 %v3028
      %3047 = vmatprep.subr.mxu0 0.0
      %3048 = vmatpush1.msra.mxu0 %v3029
      %3049 = vmatprep.subr.mxu0 0.0
      %3050 = vmatpush1.msra.mxu0 0.0
      %3051 = vmatprep.subr.mxu0 0.0
      %3052 = vmatpush1.msra.mxu0 0.0
      %3053 = vmatprep.subr.mxu0 0.0
      %3054 = vmatpush1.msra.mxu0 0.0
      %3055 = vmatprep.subr.mxu0 0.0
      %3056 = vmatpush1.msra.mxu0 0.0
      %3057 = vmatprep.subr.mxu0 0.0
      %3058 = vmatpush1.msra.mxu0 0.0
      %3059 = vmatprep.subr.mxu0 0.0
      %3060 = vmatpush1.msra.mxu0 0.0
      %3061 = vmatprep.subr.mxu0 0.0
      %3062 = vmatpush1.msra.mxu0 0.0
      %3063 = vmatprep.subr.mxu0 0.0
      %3064 = vmatpush1.msra.mxu0 0.0
      %3065 = vmatprep.subr.mxu0 0.0
      %3066 = vmatpush1.msra.mxu0 0.0
      %3067 = vmatprep.subr.mxu0 0.0
      %3068 = vmatpush1.msra.mxu0 0.0
      %3069 = vmatprep.subr.mxu0 0.0
      %3070 = vmatpush1.msra.mxu0 0.0
      %3071 = vmatprep.subr.mxu0 0.0
      %3072 = vmatpush1.msra.mxu0 0.0
      %3073 = vmatprep.subr.mxu0 0.0
      %3074 = vmatpush1.msra.mxu0 0.0
      %3075 = vmatprep.subr.mxu0 0.0
      %3076 = vmatpush1.msra.mxu0 0.0
      %3077 = vmatprep.subr.mxu0 0.0
      %3078 = vmatpush1.msra.mxu0 0.0
      %3079 = vmatprep.subr.mxu0 0.0
      %3080 = vmatpush1.msra.mxu0 0.0
      %3081 = vmatprep.subr.mxu0 0.0
      %3082 = vmatpush1.msra.mxu0 0.0
      %3083 = vmatprep.subr.mxu0 0.0
      %3084 = vmatpush1.msra.mxu0 0.0
      %3085 = vmatprep.subr.mxu0 0.0
      %3086 = vmatpush1.msra.mxu0 0.0
      %3087 = vmatprep.subr.mxu0 0.0
      %3088 = vmatpush1.msra.mxu0 0.0
      %3089 = vmatprep.subr.mxu0 0.0
      %3090 = vmatpush1.msra.mxu0 0.0
      %3091 = vmatprep.subr.mxu0 0.0
      %3092 = vmatpush1.msra.mxu0 0.0
      %3093 = vmatprep.subr.mxu0 0.0
      %3094 = vmatpush1.msra.mxu0 0.0
      %3095 = vmatprep.subr.mxu0 0.0
      %3096 = vmatpush1.msra.mxu0 0.0
      %3097 = vmatprep.subr.mxu0 0.0
      %3098 = vmatpush1.msra.mxu0 0.0
      %3099 = vmatprep.subr.mxu0 0.0
      %3100 = vmatpush1.msra.mxu0 0.0
      %3101 = vmatprep.subr.mxu0 0.0
      %3102 = vmatpush1.msra.mxu0 0.0
      %3103 = vmatprep.subr.mxu0 0.0
      %3104 = vmatpush1.msra.mxu0 0.0
      %3105 = vmatprep.mubr.f32.mxu0 0.0
      %3106 = vmatmul.mubr.f32.gmra.mrb[0].mxu0 %v3039
      %v3107 = vpop.f32.mrb[0].mxu0
      %v3108 = vadd.f32 %v3036, %v3107
      %v3109 = vpop.f32.mrb[0].mxu0
      %3110 = vdwg.mxu0
      %v3111 = vmul.f32 %v3108, 0.5
      %v3112 = vmul.f32 %v3108, 0.70710677
      %v3113 = verf.f32.pop %v3112
      %v3114 = vadd.f32 %v3113, 1.0
      %v3115 = vmul.f32 %v3111, %v3114
      %s3116 = scalar_lea.vmem %s15, 64
      %v3117 = vld [vmem:[%s3116] sm:$0xff]
      %v3118 = vld [vmem:[%s3116 + $0x8] sm:$0xff]
      %v3119 = vld [vmem:[%s3116 + $0x10] sm:$0xff]
      %v3120 = vld [vmem:[%s3116 + $0x18] sm:$0xff]
      %v3121 = vld [vmem:[%s3116 + $0x20] sm:$0xff]
      %v3122 = vld [vmem:[%s3116 + $0x28] sm:$0xff]
      %v3123 = vld [vmem:[%s3116 + $0x30] sm:$0xff]
      %v3124 = vld [vmem:[%s3116 + $0x38] sm:$0xff]
      %s3125 = scalar_lea.vmem %s16, 1
      %v3126 = vld [vmem:[%s3125] sm:$0x1]
      %v3128 = vlaneseq
      %v3129 = vshrl.u32 %v3128, 7
      %v3130 = vsub.s32 0, %v3129
      %v3131 = vrot.slane %v3126, %v3130
      %v3134 = vsel %vm837, %v3115, 0
      %3136 = vmatprep.subr.mxu0 0.0
      %3137 = vmatpush1.msra.mxu0 %v3117
      %3138 = vmatprep.subr.mxu0 0.0
      %3139 = vmatpush1.msra.mxu0 %v3118
      %3140 = vmatprep.subr.mxu0 0.0
      %3141 = vmatpush1.msra.mxu0 %v3119
      %3142 = vmatprep.subr.mxu0 0.0
      %3143 = vmatpush1.msra.mxu0 %v3120
      %3144 = vmatprep.subr.mxu0 0.0
      %3145 = vmatpush1.msra.mxu0 %v3121
      %3146 = vmatprep.subr.mxu0 0.0
      %3147 = vmatpush1.msra.mxu0 %v3122
      %3148 = vmatprep.subr.mxu0 0.0
      %3149 = vmatpush1.msra.mxu0 %v3123
      %3150 = vmatprep.subr.mxu0 0.0
      %3151 = vmatpush1.msra.mxu0 %v3124
      %3152 = vmatprep.subr.mxu0 0.0
      %3153 = vmatpush1.msra.mxu0 0.0
      %3154 = vmatprep.subr.mxu0 0.0
      %3155 = vmatpush1.msra.mxu0 0.0
      %3156 = vmatprep.subr.mxu0 0.0
      %3157 = vmatpush1.msra.mxu0 0.0
      %3158 = vmatprep.subr.mxu0 0.0
      %3159 = vmatpush1.msra.mxu0 0.0
      %3160 = vmatprep.subr.mxu0 0.0
      %3161 = vmatpush1.msra.mxu0 0.0
      %3162 = vmatprep.subr.mxu0 0.0
      %3163 = vmatpush1.msra.mxu0 0.0
      %3164 = vmatprep.subr.mxu0 0.0
      %3165 = vmatpush1.msra.mxu0 0.0
      %3166 = vmatprep.subr.mxu0 0.0
      %3167 = vmatpush1.msra.mxu0 0.0
      %3168 = vmatprep.subr.mxu0 0.0
      %3169 = vmatpush1.msra.mxu0 0.0
      %3170 = vmatprep.subr.mxu0 0.0
      %3171 = vmatpush1.msra.mxu0 0.0
      %3172 = vmatprep.subr.mxu0 0.0
      %3173 = vmatpush1.msra.mxu0 0.0
      %3174 = vmatprep.subr.mxu0 0.0
      %3175 = vmatpush1.msra.mxu0 0.0
      %3176 = vmatprep.subr.mxu0 0.0
      %3177 = vmatpush1.msra.mxu0 0.0
      %3178 = vmatprep.subr.mxu0 0.0
      %3179 = vmatpush1.msra.mxu0 0.0
      %3180 = vmatprep.subr.mxu0 0.0
      %3181 = vmatpush1.msra.mxu0 0.0
      %3182 = vmatprep.subr.mxu0 0.0
      %3183 = vmatpush1.msra.mxu0 0.0
      %3184 = vmatprep.subr.mxu0 0.0
      %3185 = vmatpush1.msra.mxu0 0.0
      %3186 = vmatprep.subr.mxu0 0.0
      %3187 = vmatpush1.msra.mxu0 0.0
      %3188 = vmatprep.subr.mxu0 0.0
      %3189 = vmatpush1.msra.mxu0 0.0
      %3190 = vmatprep.subr.mxu0 0.0
      %3191 = vmatpush1.msra.mxu0 0.0
      %3192 = vmatprep.subr.mxu0 0.0
      %3193 = vmatpush1.msra.mxu0 0.0
      %3194 = vmatprep.subr.mxu0 0.0
      %3195 = vmatpush1.msra.mxu0 0.0
      %3196 = vmatprep.subr.mxu0 0.0
      %3197 = vmatpush1.msra.mxu0 0.0
      %3198 = vmatprep.subr.mxu0 0.0
      %3199 = vmatpush1.msra.mxu0 0.0
      %3200 = vmatprep.mubr.f32.mxu0 0.0
      %3201 = vmatmul.mubr.f32.gmra.mrb[0].mxu0 %v3134
      %v3202 = vpop.f32.mrb[0].mxu0
      %v3203 = vadd.f32 %v3131, %v3202
      %v3204 = vpop.f32.mrb[0].mxu0
      %3205 = vdwg.mxu0
      %v3206 = vadd.f32 %v3203, %v3024
      %s3207 = scalar_lea.vmem %s17, 1
      %v3208 = vld [vmem:[%s3207] sm:$0x1]
      %s3209 = scalar_lea.vmem %s18, 1
      %v3210 = vld [vmem:[%s3209] sm:$0x1]
      %v3211 = vsel %vm999, %v3206, 0.0
      %3212 = vadd.xlane.f32.xlu0 %v3211
      %v3213 = vpop.xlane.xlu0 %3212
      %v3214 = vmul.f32 %v3213, %v1003
      %v3215 = vmul.f32 %v3206, %v3206
      %v3216 = vsel %vm999, %v3215, 0.0
      %3217 = vadd.xlane.f32.xlu0 %v3216
      %v3218 = vpop.xlane.xlu0 %3217
      %v3219 = vmul.f32 %v3218, %v1003
      %v3220 = vmul.f32 %v3214, %v3214
      %v3221 = vsub.f32 %v3219, %v3220
      %v3222 = vsub.f32 %v3206, %v3214
      %v3223 = vadd.f32 %v3221, 1e-05
      %v3224 = vrsqrt.pop %v3223
      %v3225 = vmul.f32 %v3222, %v3224
      %v3227 = vlaneseq
      %v3228 = vshrl.u32 %v3227, 7
      %v3229 = vsub.s32 0, %v3228
      %v3230 = vrot.slane %v3208, %v3229
      %v3232 = vmul.f32 %v3225, %v3230
      %v3234 = vlaneseq
      %v3235 = vshrl.u32 %v3234, 7
      %v3236 = vsub.s32 0, %v3235
      %v3237 = vrot.slane %v3210, %v3236
      %v3239 = vadd.f32 %v3232, %v3237
      %v3240 = vld [vmem:[%s19] sm:$0xff]
      %v3241 = vld [vmem:[%s19 + $0x8] sm:$0xff]
      %v3242 = vld [vmem:[%s19 + $0x10] sm:$0xff]
      %v3243 = vld [vmem:[%s19 + $0x18] sm:$0xff]
      %v3244 = vld [vmem:[%s20] sm:$0x1]
      %v3246 = vsel %vm999, %v3239, 0
      %3248 = vmatprep.subr.mxu0 0.0
      %3249 = vmatpush1.msra.mxu0 %v3240
      %3250 = vmatprep.subr.mxu0 0.0
      %3251 = vmatpush1.msra.mxu0 %v3241
      %3252 = vmatprep.subr.mxu0 0.0
      %3253 = vmatpush1.msra.mxu0 %v3242
      %3254 = vmatprep.subr.mxu0 0.0
      %3255 = vmatpush1.msra.mxu0 %v3243
      %3256 = vmatprep.subr.mxu0 0.0
      %3257 = vmatpush1.msra.mxu0 0.0
      %3258 = vmatprep.subr.mxu0 0.0
      %3259 = vmatpush1.msra.mxu0 0.0
      %3260 = vmatprep.subr.mxu0 0.0
      %3261 = vmatpush1.msra.mxu0 0.0
      %3262 = vmatprep.subr.mxu0 0.0
      %3263 = vmatpush1.msra.mxu0 0.0
      %3264 = vmatprep.subr.mxu0 0.0
      %3265 = vmatpush1.msra.mxu0 0.0
      %3266 = vmatprep.subr.mxu0 0.0
      %3267 = vmatpush1.msra.mxu0 0.0
      %3268 = vmatprep.subr.mxu0 0.0
      %3269 = vmatpush1.msra.mxu0 0.0
      %3270 = vmatprep.subr.mxu0 0.0
      %3271 = vmatpush1.msra.mxu0 0.0
      %3272 = vmatprep.subr.mxu0 0.0
      %3273 = vmatpush1.msra.mxu0 0.0
      %3274 = vmatprep.subr.mxu0 0.0
      %3275 = vmatpush1.msra.mxu0 0.0
      %3276 = vmatprep.subr.mxu0 0.0
      %3277 = vmatpush1.msra.mxu0 0.0
      %3278 = vmatprep.subr.mxu0 0.0
      %3279 = vmatpush1.msra.mxu0 0.0
      %3280 = vmatprep.subr.mxu0 0.0
      %3281 = vmatpush1.msra.mxu0 0.0
      %3282 = vmatprep.subr.mxu0 0.0
      %3283 = vmatpush1.msra.mxu0 0.0
      %3284 = vmatprep.subr.mxu0 0.0
      %3285 = vmatpush1.msra.mxu0 0.0
      %3286 = vmatprep.subr.mxu0 0.0
      %3287 = vmatpush1.msra.mxu0 0.0
      %3288 = vmatprep.subr.mxu0 0.0
      %3289 = vmatpush1.msra.mxu0 0.0
      %3290 = vmatprep.subr.mxu0 0.0
      %3291 = vmatpush1.msra.mxu0 0.0
      %3292 = vmatprep.subr.mxu0 0.0
      %3293 = vmatpush1.msra.mxu0 0.0
      %3294 = vmatprep.subr.mxu0 0.0
      %3295 = vmatpush1.msra.mxu0 0.0
      %3296 = vmatprep.subr.mxu0 0.0
      %3297 = vmatpush1.msra.mxu0 0.0
      %3298 = vmatprep.subr.mxu0 0.0
      %3299 = vmatpush1.msra.mxu0 0.0
      %3300 = vmatprep.subr.mxu0 0.0
      %3301 = vmatpush1.msra.mxu0 0.0
      %3302 = vmatprep.subr.mxu0 0.0
      %3303 = vmatpush1.msra.mxu0 0.0
      %3304 = vmatprep.subr.mxu0 0.0
      %3305 = vmatpush1.msra.mxu0 0.0
      %3306 = vmatprep.subr.mxu0 0.0
      %3307 = vmatpush1.msra.mxu0 0.0
      %3308 = vmatprep.subr.mxu0 0.0
      %3309 = vmatpush1.msra.mxu0 0.0
      %3310 = vmatprep.subr.mxu0 0.0
      %3311 = vmatpush1.msra.mxu0 0.0
      %3312 = vmatprep.mubr.f32.mxu0 0.0
      %3313 = vmatmul.mubr.f32.gmra.mrb[0].mxu0 %v3246
      %v3314 = vpop.f32.mrb[0].mxu0
      %v3315 = vadd.f32 %v3244, %v3314
      %v3316 = vpop.f32.mrb[0].mxu0
      %3317 = vdwg.mxu0
      %v3318 = vtanh.pop %v3315
      %v3319 = vld [vmem:[%s21] sm:$0xff]
      %v3320 = vld [vmem:[%s21 + $0x8] sm:$0xff]
      %v3321 = vld [vmem:[%s21 + $0x10] sm:$0xff]
      %v3322 = vld [vmem:[%s21 + $0x18] sm:$0xff]
      %v3323 = vld [vmem:[#allocation3] sm:$0x1]
      %v3325 = vsel %vm999, %v3318, 0
      %3327 = vmatprep.subr.mxu0 0.0
      %3328 = vmatpush1.msra.mxu0 %v3319
      %3329 = vmatprep.subr.mxu0 0.0
      %3330 = vmatpush1.msra.mxu0 %v3320
      %3331 = vmatprep.subr.mxu0 0.0
      %3332 = vmatpush1.msra.mxu0 %v3321
      %3333 = vmatprep.subr.mxu0 0.0
      %3334 = vmatpush1.msra.mxu0 %v3322
      %3335 = vmatprep.subr.mxu0 0.0
      %3336 = vmatpush1.msra.mxu0 0.0
      %3337 = vmatprep.subr.mxu0 0.0
      %3338 = vmatpush1.msra.mxu0 0.0
      %3339 = vmatprep.subr.mxu0 0.0
      %3340 = vmatpush1.msra.mxu0 0.0
      %3341 = vmatprep.subr.mxu0 0.0
      %3342 = vmatpush1.msra.mxu0 0.0
      %3343 = vmatprep.subr.mxu0 0.0
      %3344 = vmatpush1.msra.mxu0 0.0
      %3345 = vmatprep.subr.mxu0 0.0
      %3346 = vmatpush1.msra.mxu0 0.0
      %3347 = vmatprep.subr.mxu0 0.0
      %3348 = vmatpush1.msra.mxu0 0.0
      %3349 = vmatprep.subr.mxu0 0.0
      %3350 = vmatpush1.msra.mxu0 0.0
      %3351 = vmatprep.subr.mxu0 0.0
      %3352 = vmatpush1.msra.mxu0 0.0
      %3353 = vmatprep.subr.mxu0 0.0
      %3354 = vmatpush1.msra.mxu0 0.0
      %3355 = vmatprep.subr.mxu0 0.0
      %3356 = vmatpush1.msra.mxu0 0.0
      %3357 = vmatprep.subr.mxu0 0.0
      %3358 = vmatpush1.msra.mxu0 0.0
      %3359 = vmatprep.subr.mxu0 0.0
      %3360 = vmatpush1.msra.mxu0 0.0
      %3361 = vmatprep.subr.mxu0 0.0
      %3362 = vmatpush1.msra.mxu0 0.0
      %3363 = vmatprep.subr.mxu0 0.0
      %3364 = vmatpush1.msra.mxu0 0.0
      %3365 = vmatprep.subr.mxu0 0.0
      %3366 = vmatpush1.msra.mxu0 0.0
      %3367 = vmatprep.subr.mxu0 0.0
      %3368 = vmatpush1.msra.mxu0 0.0
      %3369 = vmatprep.subr.mxu0 0.0
      %3370 = vmatpush1.msra.mxu0 0.0
      %3371 = vmatprep.subr.mxu0 0.0
      %3372 = vmatpush1.msra.mxu0 0.0
      %3373 = vmatprep.subr.mxu0 0.0
      %3374 = vmatpush1.msra.mxu0 0.0
      %3375 = vmatprep.subr.mxu0 0.0
      %3376 = vmatpush1.msra.mxu0 0.0
      %3377 = vmatprep.subr.mxu0 0.0
      %3378 = vmatpush1.msra.mxu0 0.0
      %3379 = vmatprep.subr.mxu0 0.0
      %3380 = vmatpush1.msra.mxu0 0.0
      %3381 = vmatprep.subr.mxu0 0.0
      %3382 = vmatpush1.msra.mxu0 0.0
      %3383 = vmatprep.subr.mxu0 0.0
      %3384 = vmatpush1.msra.mxu0 0.0
      %3385 = vmatprep.subr.mxu0 0.0
      %3386 = vmatpush1.msra.mxu0 0.0
      %3387 = vmatprep.subr.mxu0 0.0
      %3388 = vmatpush1.msra.mxu0 0.0
      %3389 = vmatprep.subr.mxu0 0.0
      %3390 = vmatpush1.msra.mxu0 0.0
      %3391 = vmatprep.mubr.f32.mxu0 0.0
      %3392 = vmatmul.mubr.f32.gmra.mrb[0].mxu0 %v3325
      %v3393 = vpop.f32.mrb[0].mxu0
      %v3394 = vadd.f32 %v3323, %v3393
      %v3395 = vpop.f32.mrb[0].mxu0
      %3396 = vdwg.mxu0
      %vm3397 = vcmask 0
      %3398 = vst.msk [vmem:[%s719] sm:$0x1] %vm3397, %v3394
      %p3399 = scmp.lt.s32.totalorder %s36, 1
      %s3400 = scalar_select %p3399, %s36, 1
      %s3401 = scalar_lea.vmem %s23, %s3400
      // Predicated region
      $region113: #{regression_model_forward.1} parent=111 // pred_check
        %p3402 = pneg %p547
      $region114: #{regression_model_forward.1} parent=111 // pred_check_branch
        %3404 = sbr.rel (%p3402) target = $region116
      $region115: #{regression_model_forward.1} parent=111 // pred_region
        _
      $region116: #{regression_model_forward.1} parent=111 // pred_fallthru
        _
    $region112: #{regression_model_forward.1} parent=5 // pred_fallthru
      _
    %p3405 = scmp.le.s32.totalorder 2, %s31
    // Predicated region
    $region117: #{regression_model_forward.1} parent=5 // pred_check
      %p3406 = pneg %p3405
    $region118: #{regression_model_forward.1} parent=5 // pred_check_branch
      %3408 = sbr.rel (%p3406) target = $region120
    $region119: #{regression_model_forward.1} parent=5 // pred_region
      %s3409 = ssub.s32 %s31, 2
      // Predicated region
      $region121: #{regression_model_forward.1} parent=119 // pred_check
        %p3410 = pneg %p553
      $region122: #{regression_model_forward.1} parent=119 // pred_check_branch
        %3412 = sbr.rel (%p3410) target = $region124
      $region123: #{regression_model_forward.1} parent=119 // pred_region
        %p3413 = scmp.lt.s32.totalorder %s37, 1
        %s3414 = scalar_select %p3413, %s37, 1
        %s3415 = scalar_lea.vmem %s23, %s3414
      $region124: #{regression_model_forward.1} parent=119 // pred_fallthru
        _
    $region120: #{regression_model_forward.1} parent=5 // pred_fallthru
      _
  $region6: #{regression_model_forward.1} parent=0 // loop_footer
    %s35 = sadd.s32 1, %s31
  $region7: #{regression_model_forward.1} parent=0 // loop_footer_branch
    %30 = sbr.rel target = $region3
  $region8: #{regression_model_forward.1} parent=0 // loop_exit
    _

</llo_original>
